<compile_context>
chip_gen: v5e
topology: v5e:2x2
jax: 0.10.0
libtpu: 0.0.40
codegen_flags: <defaults>
</compile_context>

<pallas_src>
import functools

import numpy as np

import jax
import jax.numpy as jnp
from jax.experimental import pallas as pl
from jax.experimental.pallas import tpu as pltpu

_SQRT_HALF = 0.7071067811865476


def _gelu_exact(x):
    # PyTorch F.gelu default ('none' approximation) = 0.5*x*(1+erf(x/sqrt(2)))
    return 0.5 * x * (1.0 + jax.lax.erf(x * _SQRT_HALF))


# ----------------------------------------------------------------------------
# Kernel 1: pointwise channel matmul per batch element (used for fc0).
#   o = W @ x + b ;  x: (Ci, S)  W: (Co, Ci)  b: (Co, 1)  o: (Co, S), S on lanes
# ----------------------------------------------------------------------------
def _pointwise_kernel(x_ref, w_ref, b_ref, o_ref, *, apply_gelu):
    y = jnp.dot(w_ref[...], x_ref[...], preferred_element_type=jnp.float32)
    y = y + b_ref[...]
    if apply_gelu:
        y = _gelu_exact(y)
    o_ref[...] = y.astype(o_ref.dtype)


def pointwise_pallas(x_cs, w, b_col, *, apply_gelu=False):
    """x_cs: (B, Ci, S) f32;  w: (Co, Ci) [PyTorch layout];  b_col: (Co, 1)."""
    B, Ci, S = x_cs.shape
    Co = w.shape[0]
    return pl.pallas_call(
        functools.partial(_pointwise_kernel, apply_gelu=apply_gelu),
        out_shape=jax.ShapeDtypeStruct((B, Co, S), x_cs.dtype),
        grid=(B,),
        in_specs=[pl.BlockSpec((None, Ci, S), lambda i: (i, 0, 0)),
                  pl.BlockSpec((Co, Ci), lambda i: (0, 0)),
                  pl.BlockSpec((Co, 1), lambda i: (0, 0))],
        out_specs=pl.BlockSpec((None, Co, S), lambda i: (i, 0, 0)),
        compiler_params=pltpu.CompilerParams(dimension_semantics=("parallel",)),
    )(x_cs, w, b_col)


# ----------------------------------------------------------------------------
# Kernel 2: fully fused FNO layer (one pallas_call per layer, grid=(B,)).
#   Per batch element (all f32, mode count 2M = 2*m1*m2):
#     F = x @ E                 truncated forward DFT to corner modes (MXU)
#     Y = sum_i F_i * W_i       per-mode complex channel mix (VPU, 4-mult form)
#     y1 = Re(Y @ D)            inverse transform to padded grid (MXU)
#     y2 = Wc @ x               1x1 conv path (MXU)
#     out = y1 + y2 + b  [-> exact GELU unless last layer]
# ----------------------------------------------------------------------------
def _fno_layer_kernel(x_ref, er_ref, ei_ref, dr_ref, di_ref,
                      wr_ref, wi_ref, cw_ref, cb_ref, o_ref, *, apply_gelu):
    xf = x_ref[...]                                                      # (Ci, S)

    # Forward DFT restricted to the retained corner modes.
    fr = jnp.dot(xf, er_ref[...], preferred_element_type=jnp.float32)   # (Ci, 2M)
    fi = jnp.dot(xf, ei_ref[...], preferred_element_type=jnp.float32)   # (Ci, 2M)

    # Per-mode complex channel mixing, plain 4-mult form, reduce over Ci.
    wr = wr_ref[...]                                                     # (Ci, Co, 2M)
    wi = wi_ref[...]
    frb = fr[:, None, :]                                                 # (Ci, 1, 2M)
    fib = fi[:, None, :]
    yr = jnp.sum(frb * wr - fib * wi, axis=0)                            # (Co, 2M)
    yi = jnp.sum(frb * wi + fib * wr, axis=0)                            # (Co, 2M)

    # Inverse transform back to the padded spatial grid (irfft2 weights folded
    # into Dr/Di: Re(Y @ D) = Yr@Dr - Yi@Di).
    y1 = (jnp.dot(yr, dr_ref[...], preferred_element_type=jnp.float32)
          - jnp.dot(yi, di_ref[...], preferred_element_type=jnp.float32))  # (Co, S)

    # 1x1 conv path + residual + bias (+ exact GELU).
    y2 = jnp.dot(cw_ref[...], xf, preferred_element_type=jnp.float32)      # (Co, S)
    out = y1 + y2 + cb_ref[...]
    if apply_gelu:
        out = _gelu_exact(out)
    o_ref[...] = out.astype(o_ref.dtype)


def fno_layer_pallas(x_cs, layer_p, dft, *, apply_gelu):
    """x_cs: (B, Ci, S) f32 latent on the padded grid -> (B, Co, S)."""
    B, Ci, S = x_cs.shape
    Co = layer_p["conv_w"].shape[0]
    twoM = layer_p["wr"].shape[-1]
    er, ei, dr, di = dft
    return pl.pallas_call(
        functools.partial(_fno_layer_kernel, apply_gelu=apply_gelu),
        out_shape=jax.ShapeDtypeStruct((B, Co, S), x_cs.dtype),
        grid=(B,),
        in_specs=[
            pl.BlockSpec((None, Ci, S), lambda i: (i, 0, 0)),
            pl.BlockSpec((S, twoM), lambda i: (0, 0)),       # Er (resident)
            pl.BlockSpec((S, twoM), lambda i: (0, 0)),       # Ei
            pl.BlockSpec((twoM, S), lambda i: (0, 0)),       # Dr
            pl.BlockSpec((twoM, S), lambda i: (0, 0)),       # Di
            pl.BlockSpec((Ci, Co, twoM), lambda i: (0, 0, 0)),  # spectral Wr
            pl.BlockSpec((Ci, Co, twoM), lambda i: (0, 0, 0)),  # spectral Wi
            pl.BlockSpec((Co, Ci), lambda i: (0, 0)),           # 1x1 conv W
            pl.BlockSpec((Co, 1), lambda i: (0, 0)),            # 1x1 conv b
        ],
        out_specs=pl.BlockSpec((None, Co, S), lambda i: (i, 0, 0)),
        compiler_params=pltpu.CompilerParams(dimension_semantics=("parallel",)),
    )(x_cs, er, ei, dr, di,
      layer_p["wr"], layer_p["wi"], layer_p["conv_w"], layer_p["conv_b"])


# ----------------------------------------------------------------------------
# Kernel 3: fused decode head  fc1 -> exact GELU -> fc2, per batch element.
# The (128, S) intermediate stays in VMEM/vregs; never written to HBM.
# ----------------------------------------------------------------------------
def _head_kernel(x_ref, w1_ref, b1_ref, w2_ref, b2_ref, o_ref):
    h = jnp.dot(w1_ref[...], x_ref[...], preferred_element_type=jnp.float32)
    h = _gelu_exact(h + b1_ref[...])                                     # (128, S)
    y = jnp.dot(w2_ref[...], h, preferred_element_type=jnp.float32)
    o_ref[...] = (y + b2_ref[...]).astype(o_ref.dtype)


def head_pallas(x_cs, w1, b1, w2, b2):
    """Fused fc1 + GELU + fc2.  x_cs: (B, C, S) -> (B, 3, S). Weights (out, in)."""
    B, C, S = x_cs.shape
    Hm = w1.shape[0]                  # 128
    Co = w2.shape[0]                  # 3
    return pl.pallas_call(
        _head_kernel,
        out_shape=jax.ShapeDtypeStruct((B, Co, S), x_cs.dtype),
        grid=(B,),
        in_specs=[pl.BlockSpec((None, C, S), lambda i: (i, 0, 0)),
                  pl.BlockSpec((Hm, C), lambda i: (0, 0)),
                  pl.BlockSpec((Hm, 1), lambda i: (0, 0)),
                  pl.BlockSpec((Co, Hm), lambda i: (0, 0)),
                  pl.BlockSpec((Co, 1), lambda i: (0, 0))],
        out_specs=pl.BlockSpec((None, Co, S), lambda i: (i, 0, 0)),
        compiler_params=pltpu.CompilerParams(dimension_semantics=("parallel",)),
    )(x_cs, w1, b1, w2, b2)


# ----------------------------------------------------------------------------
# Host-side, one-time preprocessing (outside jit): DFT bases + weight layouts.
# ----------------------------------------------------------------------------
def _dft_matrices(Hp, Wp, m1, m2):
    """Truncated rfft2 / irfft2 realised as dense real matrices.

    Er/Ei: (S, 2M) with E[s, m] = exp(-2pi*i*(k1*h/Hp + k2*w/Wp)), corner-major
           mode order matching concat([w1.reshape(.., M), w2.reshape(.., M)]).
    Dr/Di: (2M, S) carrying the irfft2 normalisation 1/(Hp*Wp) and the factor-2
           Hermitian column weights, so y = Re(Y @ D) = Yr@Dr - Yi@Di.
    """
    k1 = np.concatenate([np.arange(m1), Hp - m1 + np.arange(m1)])        # corner rows
    kk1 = np.repeat(k1, m2).astype(np.float64)                           # (2M,)
    kk2 = np.tile(np.arange(m2), 2 * m1).astype(np.float64)              # (2M,)
    hh = np.repeat(np.arange(Hp), Wp).astype(np.float64)                 # (S,)
    ww = np.tile(np.arange(Wp), Hp).astype(np.float64)                   # (S,)
    theta = 2.0 * np.pi * (np.outer(hh, kk1) / Hp + np.outer(ww, kk2) / Wp)  # (S, 2M)
    er = np.cos(theta)
    ei = -np.sin(theta)
    # irfft column weights: DC (and Nyquist when Wp is even) counted once, rest x2.
    c = np.where(kk2 == 0, 1.0, 2.0)
    if Wp % 2 == 0:
        c = np.where(kk2 == Wp // 2, 1.0, c)
    coef = (c / (Hp * Wp))[:, None]                                      # (2M, 1)
    dr = coef * np.cos(theta.T)
    di = coef * np.sin(theta.T)
    f32 = lambda a: jnp.asarray(a, dtype=jnp.float32)
    return f32(er), f32(ei), f32(dr), f32(di)


def prepare_params(raw, H, W, modes1, modes2, padding=9):
    """Convert PyTorch-layout parameters into kernel-ready f32 arrays (eager)."""
    Hp, Wp = H + padding, W + padding
    M = modes1 * modes2
    prep = {
        "dft": _dft_matrices(Hp, Wp, modes1, modes2),
        "fc0_w": raw["fc0_w"], "fc0_b": raw["fc0_b"].reshape(-1, 1),
        "fc1_w": raw["fc1_w"], "fc1_b": raw["fc1_b"].reshape(-1, 1),
        "fc2_w": raw["fc2_w"], "fc2_b": raw["fc2_b"].reshape(-1, 1),
    }
    layers = []
    for lp in raw["layers"]:
        Ci, Co = lp["w1"].shape[0], lp["w1"].shape[1]
        wc = jnp.concatenate([lp["w1"].reshape(Ci, Co, M),
                              lp["w2"].reshape(Ci, Co, M)], axis=-1)     # (Ci,Co,2M)
        layers.append({
            "wr": jnp.real(wc).astype(jnp.float32),
            "wi": jnp.imag(wc).astype(jnp.float32),
            "conv_w": lp["conv_w"].reshape(Co, Ci),                      # (Co,Ci,1,1)->(Co,Ci)
            "conv_b": lp["conv_b"].reshape(-1, 1),
        })
    prep["layers"] = layers
    return prep


# ----------------------------------------------------------------------------
# Forward pass (host glue: only pad, slice and the two output transposes).
# ----------------------------------------------------------------------------
def trans_net_forward(prep, x, ctr, *, padding=9):
    # x: (B, 3, H, W) NCHW.  Note: `ctr` is unused by the reference forward.
    del ctr
    B, Cin, H, W = x.shape
    Hp, Wp = H + padding, W + padding
    S0, S = H * W, Hp * Wp
    width = prep["fc0_w"].shape[0]

    # fc0 as a per-batch (width,3)@(3,S0) matmul == permute->Linear->permute.
    lat = pointwise_pallas(x.reshape(B, Cin, S0), prep["fc0_w"], prep["fc0_b"])
    lat = jnp.pad(lat.reshape(B, width, H, W),
                  ((0, 0), (0, 0), (0, padding), (0, padding)))
    lat = lat.reshape(B, width, S)

    n_layers = len(prep["layers"])
    for li, lp in enumerate(prep["layers"]):
        lat = fno_layer_pallas(lat, lp, prep["dft"],
                               apply_gelu=(li < n_layers - 1))

    out = lat.reshape(B, width, Hp, Wp)[:, :, :H, :W]                  # (B,width,H,W)
    trans_out = jnp.transpose(out, (0, 2, 3, 1))                       # (B,H,W,width)
    pred = head_pallas(out.reshape(B, width, S0),
                       prep["fc1_w"], prep["fc1_b"],
                       prep["fc2_w"], prep["fc2_b"])                   # (B,3,S0)
    predict = jnp.transpose(pred.reshape(B, 3, H, W), (0, 2, 3, 1))    # (B,H,W,3)
    return trans_out, predict


# ----------------------------------------------------------------------------
# Deterministic synthetic parameter init (PyTorch-convention layouts/shapes).
# ----------------------------------------------------------------------------
def _init_linear(key, fin, fout):
    k1, k2 = jax.random.split(key)
    lim = 1.0 / float(fin) ** 0.5
    w = jax.random.uniform(k1, (fout, fin), jnp.float32, -lim, lim)    # (out, in)
    b = jax.random.uniform(k2, (fout,), jnp.float32, -lim, lim)
    return w, b


def init_params(key, modes1, modes2, width, L, f_channels):
    keys = jax.random.split(key, 3 + L)
    params = {}
    params["fc0_w"], params["fc0_b"] = _init_linear(keys[0], 3, width)
    layers = []
    for l in range(L):
        cin = width + f_channels if l == 0 else width
        cout = width
        kl = jax.random.split(keys[1 + l], 5)
        scale = 1.0 / (cin * cout)
        w1 = jax.lax.complex(
            scale * jax.random.uniform(kl[0], (cin, cout, modes1, modes2), jnp.float32),
            scale * jax.random.uniform(kl[1], (cin, cout, modes1, modes2), jnp.float32))
        w2 = jax.lax.complex(
            scale * jax.random.uniform(kl[2], (cin, cout, modes1, modes2), jnp.float32),
            scale * jax.random.uniform(kl[3], (cin, cout, modes1, modes2), jnp.float32))
        cw, cb = _init_linear(kl[4], cin, cout)       # Conv2d(cin,cout,1) weights
        layers.append({"w1": w1, "w2": w2,
                       "conv_w": cw.reshape(cout, cin, 1, 1), "conv_b": cb})
    params["layers"] = layers
    params["fc1_w"], params["fc1_b"] = _init_linear(keys[1 + L], width, 128)
    params["fc2_w"], params["fc2_b"] = _init_linear(keys[2 + L], 128, 3)
    return params


if __name__ == "__main__":
    modes1, modes2, width, L, f_channels = 6, 6, 8, 4, 0
    B, H, W = 2, 16, 16
    padding = 9

    key = jax.random.PRNGKey(0)
    kp, kx, kc = jax.random.split(key, 3)
    raw_params = init_params(kp, modes1, modes2, width, L, f_channels)
    prep = prepare_params(raw_params, H, W, modes1, modes2, padding)   # outside jit
    x = jax.random.normal(kx, (B, 3, H, W), jnp.float32)
    ctr = jax.random.normal(kc, (B, 1, H, W), jnp.float32)             # unused by forward

    fwd = jax.jit(functools.partial(trans_net_forward, padding=padding))
    trans_out, predict = fwd(prep, x, ctr)
    jax.block_until_ready((trans_out, predict))

    assert trans_out.shape == (B, H, W, width), trans_out.shape
    assert predict.shape == (B, H, W, 3), predict.shape
    assert bool(jnp.all(jnp.isfinite(trans_out))) and bool(jnp.all(jnp.isfinite(predict)))
    print("KERNEL_OK")
</pallas_src>

<mosaic_0001>
module attributes {stable_mosaic.version = 11 : i64} {
  func.func @_pointwise_kernel(%arg0: i32, %arg1: memref<1x3x256xf32, #tpu.memory_space<vmem>>, %arg2: memref<8x3xf32, #tpu.memory_space<vmem>>, %arg3: memref<8x1xf32, #tpu.memory_space<vmem>>, %arg4: memref<1x8x256xf32, #tpu.memory_space<vmem>>) attributes {dimension_semantics = [#tpu.dimension_semantics<parallel>], iteration_bounds = array<i64: 2>, scalar_prefetch = 0 : i64, scratch_operands = 0 : i64, tpu.core_type = #tpu.core_type<tc>, window_params = [{transform_indices = @transform_0, window_bounds = array<i64: 1, 3, 256>}, {pipeline_mode = #tpu.pipeline_mode<synchronous>, transform_indices = @transform_1, window_bounds = array<i64: 8, 3>}, {pipeline_mode = #tpu.pipeline_mode<synchronous>, transform_indices = @transform_2, window_bounds = array<i64: 8, 1>}, {transform_indices = @transform_3, window_bounds = array<i64: 1, 8, 256>}]} {
    %c0 = arith.constant 0 : index
    %c0_0 = arith.constant 0 : index
    %0 = vector.load %arg2[%c0, %c0_0] : memref<8x3xf32, #tpu.memory_space<vmem>>, vector<8x3xf32>
    %c0_1 = arith.constant 0 : index
    %c0_2 = arith.constant 0 : index
    %c0_3 = arith.constant 0 : index
    %1 = vector.load %arg1[%c0_1, %c0_2, %c0_3] : memref<1x3x256xf32, #tpu.memory_space<vmem>>, vector<1x3x256xf32>
    %2 = vector.shape_cast %1 : vector<1x3x256xf32> to vector<3x256xf32>
    %cst = arith.constant dense<0.000000e+00> : vector<8x256xf32>
    %3 = tpu.matmul %0, %2, %cst {dimension_numbers = #tpu.dot_dimension_numbers<[1], [0], [0], [1], [0, 0, 1, 1], [], []>} : vector<8x3xf32>, vector<3x256xf32>, vector<8x256xf32> -> vector<8x256xf32>
    %c0_4 = arith.constant 0 : index
    %c0_5 = arith.constant 0 : index
    %4 = vector.load %arg3[%c0_4, %c0_5] : memref<8x1xf32, #tpu.memory_space<vmem>>, vector<8x1xf32>
    %5 = vector.broadcast %4 : vector<8x1xf32> to vector<8x256xf32>
    %6 = arith.addf %3, %5 : vector<8x256xf32>
    %c0_6 = arith.constant 0 : index
    %c0_7 = arith.constant 0 : index
    %c0_8 = arith.constant 0 : index
    %7 = vector.load %arg4[%c0_6, %c0_7, %c0_8] : memref<1x8x256xf32, #tpu.memory_space<vmem>>, vector<1x8x256xf32>
    %8 = vector.shape_cast %7 : vector<1x8x256xf32> to vector<8x256xf32>
    %9 = vector.shape_cast %6 : vector<8x256xf32> to vector<1x8x256xf32>
    tpu.vector_store %arg4[%c0_6, %c0_7, %c0_8], %9 {strides = array<i32>} : memref<1x8x256xf32, #tpu.memory_space<vmem>>, vector<1x8x256xf32>,
    return
  }
  func.func @transform_0(%arg0: i32) -> (i32, i32, i32) {
    %c0_i32 = arith.constant 0 : i32
    %c0_i32_0 = arith.constant 0 : i32
    %c0_i32_1 = arith.constant 0 : i32
    return %arg0, %c0_i32, %c0_i32_0 : i32, i32, i32
  }
  func.func @transform_1(%arg0: i32) -> (i32, i32) {
    %c0_i32 = arith.constant 0 : i32
    %c0_i32_0 = arith.constant 0 : i32
    %c0_i32_1 = arith.constant 0 : i32
    return %c0_i32, %c0_i32_0 : i32, i32
  }
  func.func @transform_2(%arg0: i32) -> (i32, i32) {
    %c0_i32 = arith.constant 0 : i32
    %c0_i32_0 = arith.constant 0 : i32
    %c0_i32_1 = arith.constant 0 : i32
    return %c0_i32, %c0_i32_0 : i32, i32
  }
  func.func @transform_3(%arg0: i32) -> (i32, i32, i32) {
    %c0_i32 = arith.constant 0 : i32
    %c0_i32_0 = arith.constant 0 : i32
    %c0_i32_1 = arith.constant 0 : i32
    return %arg0, %c0_i32, %c0_i32_0 : i32, i32, i32
  }
}

module attributes {stable_mosaic.version = 11 : i64} {
  func.func @_fno_layer_kernel(%arg0: i32, %arg1: memref<1x8x625xf32, #tpu.memory_space<vmem>>, %arg2: memref<625x72xf32, #tpu.memory_space<vmem>>, %arg3: memref<625x72xf32, #tpu.memory_space<vmem>>, %arg4: memref<72x625xf32, #tpu.memory_space<vmem>>, %arg5: memref<72x625xf32, #tpu.memory_space<vmem>>, %arg6: memref<8x8x72xf32, #tpu.memory_space<vmem>>, %arg7: memref<8x8x72xf32, #tpu.memory_space<vmem>>, %arg8: memref<8x8xf32, #tpu.memory_space<vmem>>, %arg9: memref<8x1xf32, #tpu.memory_space<vmem>>, %arg10: memref<1x8x625xf32, #tpu.memory_space<vmem>>) attributes {dimension_semantics = [#tpu.dimension_semantics<parallel>], iteration_bounds = array<i64: 2>, scalar_prefetch = 0 : i64, scratch_operands = 0 : i64, tpu.core_type = #tpu.core_type<tc>, window_params = [{transform_indices = @transform_0, window_bounds = array<i64: 1, 8, 625>}, {pipeline_mode = #tpu.pipeline_mode<synchronous>, transform_indices = @transform_1, window_bounds = array<i64: 625, 72>}, {pipeline_mode = #tpu.pipeline_mode<synchronous>, transform_indices = @transform_2, window_bounds = array<i64: 625, 72>}, {pipeline_mode = #tpu.pipeline_mode<synchronous>, transform_indices = @transform_3, window_bounds = array<i64: 72, 625>}, {pipeline_mode = #tpu.pipeline_mode<synchronous>, transform_indices = @transform_4, window_bounds = array<i64: 72, 625>}, {pipeline_mode = #tpu.pipeline_mode<synchronous>, transform_indices = @transform_5, window_bounds = array<i64: 8, 8, 72>}, {pipeline_mode = #tpu.pipeline_mode<synchronous>, transform_indices = @transform_6, window_bounds = array<i64: 8, 8, 72>}, {pipeline_mode = #tpu.pipeline_mode<synchronous>, transform_indices = @transform_7, window_bounds = array<i64: 8, 8>}, {pipeline_mode = #tpu.pipeline_mode<synchronous>, transform_indices = @transform_8, window_bounds = array<i64: 8, 1>}, {transform_indices = @transform_9, window_bounds = array<i64: 1, 8, 625>}]} {
    %c0 = arith.constant 0 : index
    %c0_0 = arith.constant 0 : index
    %c0_1 = arith.constant 0 : index
    %0 = vector.load %arg1[%c0, %c0_0, %c0_1] : memref<1x8x625xf32, #tpu.memory_space<vmem>>, vector<1x8x625xf32>
    %1 = vector.shape_cast %0 : vector<1x8x625xf32> to vector<8x625xf32>
    %c0_2 = arith.constant 0 : index
    %c0_3 = arith.constant 0 : index
    %2 = vector.load %arg2[%c0_2, %c0_3] : memref<625x72xf32, #tpu.memory_space<vmem>>, vector<625x72xf32>
    %cst = arith.constant dense<0.000000e+00> : vector<8x72xf32>
    %3 = tpu.matmul %1, %2, %cst {dimension_numbers = #tpu.dot_dimension_numbers<[1], [0], [0], [1], [0, 0, 1, 1], [], []>} : vector<8x625xf32>, vector<625x72xf32>, vector<8x72xf32> -> vector<8x72xf32>
    %c0_4 = arith.constant 0 : index
    %c0_5 = arith.constant 0 : index
    %4 = vector.load %arg3[%c0_4, %c0_5] : memref<625x72xf32, #tpu.memory_space<vmem>>, vector<625x72xf32>
    %cst_6 = arith.constant dense<0.000000e+00> : vector<8x72xf32>
    %5 = tpu.matmul %1, %4, %cst_6 {dimension_numbers = #tpu.dot_dimension_numbers<[1], [0], [0], [1], [0, 0, 1, 1], [], []>} : vector<8x625xf32>, vector<625x72xf32>, vector<8x72xf32> -> vector<8x72xf32>
    %c0_7 = arith.constant 0 : index
    %c0_8 = arith.constant 0 : index
    %c0_9 = arith.constant 0 : index
    %6 = vector.load %arg6[%c0_7, %c0_8, %c0_9] : memref<8x8x72xf32, #tpu.memory_space<vmem>>, vector<8x8x72xf32>
    %c0_10 = arith.constant 0 : index
    %c0_11 = arith.constant 0 : index
    %c0_12 = arith.constant 0 : index
    %7 = vector.load %arg7[%c0_10, %c0_11, %c0_12] : memref<8x8x72xf32, #tpu.memory_space<vmem>>, vector<8x8x72xf32>
    %8 = vector.shape_cast %3 : vector<8x72xf32> to vector<8x1x72xf32>
    %9 = vector.shape_cast %5 : vector<8x72xf32> to vector<8x1x72xf32>
    %10 = vector.broadcast %8 : vector<8x1x72xf32> to vector<8x8x72xf32>
    %11 = arith.mulf %10, %6 : vector<8x8x72xf32>
    %12 = vector.broadcast %9 : vector<8x1x72xf32> to vector<8x8x72xf32>
    %13 = arith.mulf %12, %7 : vector<8x8x72xf32>
    %14 = arith.subf %11, %13 : vector<8x8x72xf32>
    %cst_13 = arith.constant dense<0.000000e+00> : vector<8x72xf32>
    %15 = vector.multi_reduction <add>, %14, %cst_13 [0] : vector<8x8x72xf32> to vector<8x72xf32>
    %16 = vector.broadcast %8 : vector<8x1x72xf32> to vector<8x8x72xf32>
    %17 = arith.mulf %16, %7 : vector<8x8x72xf32>
    %18 = vector.broadcast %9 : vector<8x1x72xf32> to vector<8x8x72xf32>
    %19 = arith.mulf %18, %6 : vector<8x8x72xf32>
    %20 = arith.addf %17, %19 : vector<8x8x72xf32>
    %cst_14 = arith.constant dense<0.000000e+00> : vector<8x72xf32>
    %21 = vector.multi_reduction <add>, %20, %cst_14 [0] : vector<8x8x72xf32> to vector<8x72xf32>
    %c0_15 = arith.constant 0 : index
    %c0_16 = arith.constant 0 : index
    %22 = vector.load %arg4[%c0_15, %c0_16] : memref<72x625xf32, #tpu.memory_space<vmem>>, vector<72x625xf32>
    %cst_17 = arith.constant dense<0.000000e+00> : vector<8x625xf32>
    %23 = tpu.matmul %15, %22, %cst_17 {dimension_numbers = #tpu.dot_dimension_numbers<[1], [0], [0], [1], [0, 0, 1, 1], [], []>} : vector<8x72xf32>, vector<72x625xf32>, vector<8x625xf32> -> vector<8x625xf32>
    %c0_18 = arith.constant 0 : index
    %c0_19 = arith.constant 0 : index
    %24 = vector.load %arg5[%c0_18, %c0_19] : memref<72x625xf32, #tpu.memory_space<vmem>>, vector<72x625xf32>
    %cst_20 = arith.constant dense<0.000000e+00> : vector<8x625xf32>
    %25 = tpu.matmul %21, %24, %cst_20 {dimension_numbers = #tpu.dot_dimension_numbers<[1], [0], [0], [1], [0, 0, 1, 1], [], []>} : vector<8x72xf32>, vector<72x625xf32>, vector<8x625xf32> -> vector<8x625xf32>
    %26 = arith.subf %23, %25 : vector<8x625xf32>
    %c0_21 = arith.constant 0 : index
    %c0_22 = arith.constant 0 : index
    %27 = vector.load %arg8[%c0_21, %c0_22] : memref<8x8xf32, #tpu.memory_space<vmem>>, vector<8x8xf32>
    %cst_23 = arith.constant dense<0.000000e+00> : vector<8x625xf32>
    %28 = tpu.matmul %27, %1, %cst_23 {dimension_numbers = #tpu.dot_dimension_numbers<[1], [0], [0], [1], [0, 0, 1, 1], [], []>} : vector<8x8xf32>, vector<8x625xf32>, vector<8x625xf32> -> vector<8x625xf32>
    %29 = arith.addf %26, %28 : vector<8x625xf32>
    %c0_24 = arith.constant 0 : index
    %c0_25 = arith.constant 0 : index
    %30 = vector.load %arg9[%c0_24, %c0_25] : memref<8x1xf32, #tpu.memory_space<vmem>>, vector<8x1xf32>
    %31 = vector.broadcast %30 : vector<8x1xf32> to vector<8x625xf32>
    %32 = arith.addf %29, %31 : vector<8x625xf32>
    %cst_26 = arith.constant 5.000000e-01 : f32
    %33 = vector.broadcast %cst_26 : f32 to vector<8x625xf32>
    %34 = arith.mulf %33, %32 : vector<8x625xf32>
    %cst_27 = arith.constant 0.707106769 : f32
    %35 = vector.broadcast %cst_27 : f32 to vector<8x625xf32>
    %36 = arith.mulf %32, %35 : vector<8x625xf32>
    %37 = math.erf %36 : vector<8x625xf32>
    %cst_28 = arith.constant 1.000000e+00 : f32
    %38 = vector.broadcast %cst_28 : f32 to vector<8x625xf32>
    %39 = arith.addf %38, %37 : vector<8x625xf32>
    %40 = arith.mulf %34, %39 : vector<8x625xf32>
    %c0_29 = arith.constant 0 : index
    %c0_30 = arith.constant 0 : index
    %c0_31 = arith.constant 0 : index
    %41 = vector.load %arg10[%c0_29, %c0_30, %c0_31] : memref<1x8x625xf32, #tpu.memory_space<vmem>>, vector<1x8x625xf32>
    %42 = vector.shape_cast %41 : vector<1x8x625xf32> to vector<8x625xf32>
    %43 = vector.shape_cast %40 : vector<8x625xf32> to vector<1x8x625xf32>
    tpu.vector_store %arg10[%c0_29, %c0_30, %c0_31], %43 {strides = array<i32>} : memref<1x8x625xf32, #tpu.memory_space<vmem>>, vector<1x8x625xf32>,
    return
  }
  func.func @transform_0(%arg0: i32) -> (i32, i32, i32) {
    %c0_i32 = arith.constant 0 : i32
    %c0_i32_0 = arith.constant 0 : i32
    %c0_i32_1 = arith.constant 0 : i32
    return %arg0, %c0_i32, %c0_i32_0 : i32, i32, i32
  }
  func.func @transform_1(%arg0: i32) -> (i32, i32) {
    %c0_i32 = arith.constant 0 : i32
    %c0_i32_0 = arith.constant 0 : i32
    %c0_i32_1 = arith.constant 0 : i32
    return %c0_i32, %c0_i32_0 : i32, i32
  }
  func.func @transform_2(%arg0: i32) -> (i32, i32) {
    %c0_i32 = arith.constant 0 : i32
    %c0_i32_0 = arith.constant 0 : i32
    %c0_i32_1 = arith.constant 0 : i32
    return %c0_i32, %c0_i32_0 : i32, i32
  }
  func.func @transform_3(%arg0: i32) -> (i32, i32) {
    %c0_i32 = arith.constant 0 : i32
    %c0_i32_0 = arith.constant 0 : i32
    %c0_i32_1 = arith.constant 0 : i32
    return %c0_i32, %c0_i32_0 : i32, i32
  }
  func.func @transform_4(%arg0: i32) -> (i32, i32) {
    %c0_i32 = arith.constant 0 : i32
    %c0_i32_0 = arith.constant 0 : i32
    %c0_i32_1 = arith.constant 0 : i32
    return %c0_i32, %c0_i32_0 : i32, i32
  }
  func.func @transform_5(%arg0: i32) -> (i32, i32, i32) {
    %c0_i32 = arith.constant 0 : i32
    %c0_i32_0 = arith.constant 0 : i32
    %c0_i32_1 = arith.constant 0 : i32
    %c0_i32_2 = arith.constant 0 : i32
    return %c0_i32, %c0_i32_0, %c0_i32_1 : i32, i32, i32
  }
  func.func @transform_6(%arg0: i32) -> (i32, i32, i32) {
    %c0_i32 = arith.constant 0 : i32
    %c0_i32_0 = arith.constant 0 : i32
    %c0_i32_1 = arith.constant 0 : i32
    %c0_i32_2 = arith.constant 0 : i32
    return %c0_i32, %c0_i32_0, %c0_i32_1 : i32, i32, i32
  }
  func.func @transform_7(%arg0: i32) -> (i32, i32) {
    %c0_i32 = arith.constant 0 : i32
    %c0_i32_0 = arith.constant 0 : i32
    %c0_i32_1 = arith.constant 0 : i32
    return %c0_i32, %c0_i32_0 : i32, i32
  }
  func.func @transform_8(%arg0: i32) -> (i32, i32) {
    %c0_i32 = arith.constant 0 : i32
    %c0_i32_0 = arith.constant 0 : i32
    %c0_i32_1 = arith.constant 0 : i32
    return %c0_i32, %c0_i32_0 : i32, i32
  }
  func.func @transform_9(%arg0: i32) -> (i32, i32, i32) {
    %c0_i32 = arith.constant 0 : i32
    %c0_i32_0 = arith.constant 0 : i32
    %c0_i32_1 = arith.constant 0 : i32
    return %arg0, %c0_i32, %c0_i32_0 : i32, i32, i32
  }
}

module attributes {stable_mosaic.version = 11 : i64} {
  func.func @_fno_layer_kernel(%arg0: i32, %arg1: memref<1x8x625xf32, #tpu.memory_space<vmem>>, %arg2: memref<625x72xf32, #tpu.memory_space<vmem>>, %arg3: memref<625x72xf32, #tpu.memory_space<vmem>>, %arg4: memref<72x625xf32, #tpu.memory_space<vmem>>, %arg5: memref<72x625xf32, #tpu.memory_space<vmem>>, %arg6: memref<8x8x72xf32, #tpu.memory_space<vmem>>, %arg7: memref<8x8x72xf32, #tpu.memory_space<vmem>>, %arg8: memref<8x8xf32, #tpu.memory_space<vmem>>, %arg9: memref<8x1xf32, #tpu.memory_space<vmem>>, %arg10: memref<1x8x625xf32, #tpu.memory_space<vmem>>) attributes {dimension_semantics = [#tpu.dimension_semantics<parallel>], iteration_bounds = array<i64: 2>, scalar_prefetch = 0 : i64, scratch_operands = 0 : i64, tpu.core_type = #tpu.core_type<tc>, window_params = [{transform_indices = @transform_0, window_bounds = array<i64: 1, 8, 625>}, {pipeline_mode = #tpu.pipeline_mode<synchronous>, transform_indices = @transform_1, window_bounds = array<i64: 625, 72>}, {pipeline_mode = #tpu.pipeline_mode<synchronous>, transform_indices = @transform_2, window_bounds = array<i64: 625, 72>}, {pipeline_mode = #tpu.pipeline_mode<synchronous>, transform_indices = @transform_3, window_bounds = array<i64: 72, 625>}, {pipeline_mode = #tpu.pipeline_mode<synchronous>, transform_indices = @transform_4, window_bounds = array<i64: 72, 625>}, {pipeline_mode = #tpu.pipeline_mode<synchronous>, transform_indices = @transform_5, window_bounds = array<i64: 8, 8, 72>}, {pipeline_mode = #tpu.pipeline_mode<synchronous>, transform_indices = @transform_6, window_bounds = array<i64: 8, 8, 72>}, {pipeline_mode = #tpu.pipeline_mode<synchronous>, transform_indices = @transform_7, window_bounds = array<i64: 8, 8>}, {pipeline_mode = #tpu.pipeline_mode<synchronous>, transform_indices = @transform_8, window_bounds = array<i64: 8, 1>}, {transform_indices = @transform_9, window_bounds = array<i64: 1, 8, 625>}]} {
    %c0 = arith.constant 0 : index
    %c0_0 = arith.constant 0 : index
    %c0_1 = arith.constant 0 : index
    %0 = vector.load %arg1[%c0, %c0_0, %c0_1] : memref<1x8x625xf32, #tpu.memory_space<vmem>>, vector<1x8x625xf32>
    %1 = vector.shape_cast %0 : vector<1x8x625xf32> to vector<8x625xf32>
    %c0_2 = arith.constant 0 : index
    %c0_3 = arith.constant 0 : index
    %2 = vector.load %arg2[%c0_2, %c0_3] : memref<625x72xf32, #tpu.memory_space<vmem>>, vector<625x72xf32>
    %cst = arith.constant dense<0.000000e+00> : vector<8x72xf32>
    %3 = tpu.matmul %1, %2, %cst {dimension_numbers = #tpu.dot_dimension_numbers<[1], [0], [0], [1], [0, 0, 1, 1], [], []>} : vector<8x625xf32>, vector<625x72xf32>, vector<8x72xf32> -> vector<8x72xf32>
    %c0_4 = arith.constant 0 : index
    %c0_5 = arith.constant 0 : index
    %4 = vector.load %arg3[%c0_4, %c0_5] : memref<625x72xf32, #tpu.memory_space<vmem>>, vector<625x72xf32>
    %cst_6 = arith.constant dense<0.000000e+00> : vector<8x72xf32>
    %5 = tpu.matmul %1, %4, %cst_6 {dimension_numbers = #tpu.dot_dimension_numbers<[1], [0], [0], [1], [0, 0, 1, 1], [], []>} : vector<8x625xf32>, vector<625x72xf32>, vector<8x72xf32> -> vector<8x72xf32>
    %c0_7 = arith.constant 0 : index
    %c0_8 = arith.constant 0 : index
    %c0_9 = arith.constant 0 : index
    %6 = vector.load %arg6[%c0_7, %c0_8, %c0_9] : memref<8x8x72xf32, #tpu.memory_space<vmem>>, vector<8x8x72xf32>
    %c0_10 = arith.constant 0 : index
    %c0_11 = arith.constant 0 : index
    %c0_12 = arith.constant 0 : index
    %7 = vector.load %arg7[%c0_10, %c0_11, %c0_12] : memref<8x8x72xf32, #tpu.memory_space<vmem>>, vector<8x8x72xf32>
    %8 = vector.shape_cast %3 : vector<8x72xf32> to vector<8x1x72xf32>
    %9 = vector.shape_cast %5 : vector<8x72xf32> to vector<8x1x72xf32>
    %10 = vector.broadcast %8 : vector<8x1x72xf32> to vector<8x8x72xf32>
    %11 = arith.mulf %10, %6 : vector<8x8x72xf32>
    %12 = vector.broadcast %9 : vector<8x1x72xf32> to vector<8x8x72xf32>
    %13 = arith.mulf %12, %7 : vector<8x8x72xf32>
    %14 = arith.subf %11, %13 : vector<8x8x72xf32>
    %cst_13 = arith.constant dense<0.000000e+00> : vector<8x72xf32>
    %15 = vector.multi_reduction <add>, %14, %cst_13 [0] : vector<8x8x72xf32> to vector<8x72xf32>
    %16 = vector.broadcast %8 : vector<8x1x72xf32> to vector<8x8x72xf32>
    %17 = arith.mulf %16, %7 : vector<8x8x72xf32>
    %18 = vector.broadcast %9 : vector<8x1x72xf32> to vector<8x8x72xf32>
    %19 = arith.mulf %18, %6 : vector<8x8x72xf32>
    %20 = arith.addf %17, %19 : vector<8x8x72xf32>
    %cst_14 = arith.constant dense<0.000000e+00> : vector<8x72xf32>
    %21 = vector.multi_reduction <add>, %20, %cst_14 [0] : vector<8x8x72xf32> to vector<8x72xf32>
    %c0_15 = arith.constant 0 : index
    %c0_16 = arith.constant 0 : index
    %22 = vector.load %arg4[%c0_15, %c0_16] : memref<72x625xf32, #tpu.memory_space<vmem>>, vector<72x625xf32>
    %cst_17 = arith.constant dense<0.000000e+00> : vector<8x625xf32>
    %23 = tpu.matmul %15, %22, %cst_17 {dimension_numbers = #tpu.dot_dimension_numbers<[1], [0], [0], [1], [0, 0, 1, 1], [], []>} : vector<8x72xf32>, vector<72x625xf32>, vector<8x625xf32> -> vector<8x625xf32>
    %c0_18 = arith.constant 0 : index
    %c0_19 = arith.constant 0 : index
    %24 = vector.load %arg5[%c0_18, %c0_19] : memref<72x625xf32, #tpu.memory_space<vmem>>, vector<72x625xf32>
    %cst_20 = arith.constant dense<0.000000e+00> : vector<8x625xf32>
    %25 = tpu.matmul %21, %24, %cst_20 {dimension_numbers = #tpu.dot_dimension_numbers<[1], [0], [0], [1], [0, 0, 1, 1], [], []>} : vector<8x72xf32>, vector<72x625xf32>, vector<8x625xf32> -> vector<8x625xf32>
    %26 = arith.subf %23, %25 : vector<8x625xf32>
    %c0_21 = arith.constant 0 : index
    %c0_22 = arith.constant 0 : index
    %27 = vector.load %arg8[%c0_21, %c0_22] : memref<8x8xf32, #tpu.memory_space<vmem>>, vector<8x8xf32>
    %cst_23 = arith.constant dense<0.000000e+00> : vector<8x625xf32>
    %28 = tpu.matmul %27, %1, %cst_23 {dimension_numbers = #tpu.dot_dimension_numbers<[1], [0], [0], [1], [0, 0, 1, 1], [], []>} : vector<8x8xf32>, vector<8x625xf32>, vector<8x625xf32> -> vector<8x625xf32>
    %29 = arith.addf %26, %28 : vector<8x625xf32>
    %c0_24 = arith.constant 0 : index
    %c0_25 = arith.constant 0 : index
    %30 = vector.load %arg9[%c0_24, %c0_25] : memref<8x1xf32, #tpu.memory_space<vmem>>, vector<8x1xf32>
    %31 = vector.broadcast %30 : vector<8x1xf32> to vector<8x625xf32>
    %32 = arith.addf %29, %31 : vector<8x625xf32>
    %c0_26 = arith.constant 0 : index
    %c0_27 = arith.constant 0 : index
    %c0_28 = arith.constant 0 : index
    %33 = vector.load %arg10[%c0_26, %c0_27, %c0_28] : memref<1x8x625xf32, #tpu.memory_space<vmem>>, vector<1x8x625xf32>
    %34 = vector.shape_cast %33 : vector<1x8x625xf32> to vector<8x625xf32>
    %35 = vector.shape_cast %32 : vector<8x625xf32> to vector<1x8x625xf32>
    tpu.vector_store %arg10[%c0_26, %c0_27, %c0_28], %35 {strides = array<i32>} : memref<1x8x625xf32, #tpu.memory_space<vmem>>, vector<1x8x625xf32>,
    return
  }
  func.func @transform_0(%arg0: i32) -> (i32, i32, i32) {
    %c0_i32 = arith.constant 0 : i32
    %c0_i32_0 = arith.constant 0 : i32
    %c0_i32_1 = arith.constant 0 : i32
    return %arg0, %c0_i32, %c0_i32_0 : i32, i32, i32
  }
  func.func @transform_1(%arg0: i32) -> (i32, i32) {
    %c0_i32 = arith.constant 0 : i32
    %c0_i32_0 = arith.constant 0 : i32
    %c0_i32_1 = arith.constant 0 : i32
    return %c0_i32, %c0_i32_0 : i32, i32
  }
  func.func @transform_2(%arg0: i32) -> (i32, i32) {
    %c0_i32 = arith.constant 0 : i32
    %c0_i32_0 = arith.constant 0 : i32
    %c0_i32_1 = arith.constant 0 : i32
    return %c0_i32, %c0_i32_0 : i32, i32
  }
  func.func @transform_3(%arg0: i32) -> (i32, i32) {
    %c0_i32 = arith.constant 0 : i32
    %c0_i32_0 = arith.constant 0 : i32
    %c0_i32_1 = arith.constant 0 : i32
    return %c0_i32, %c0_i32_0 : i32, i32
  }
  func.func @transform_4(%arg0: i32) -> (i32, i32) {
    %c0_i32 = arith.constant 0 : i32
    %c0_i32_0 = arith.constant 0 : i32
    %c0_i32_1 = arith.constant 0 : i32
    return %c0_i32, %c0_i32_0 : i32, i32
  }
  func.func @transform_5(%arg0: i32) -> (i32, i32, i32) {
    %c0_i32 = arith.constant 0 : i32
    %c0_i32_0 = arith.constant 0 : i32
    %c0_i32_1 = arith.constant 0 : i32
    %c0_i32_2 = arith.constant 0 : i32
    return %c0_i32, %c0_i32_0, %c0_i32_1 : i32, i32, i32
  }
  func.func @transform_6(%arg0: i32) -> (i32, i32, i32) {
    %c0_i32 = arith.constant 0 : i32
    %c0_i32_0 = arith.constant 0 : i32
    %c0_i32_1 = arith.constant 0 : i32
    %c0_i32_2 = arith.constant 0 : i32
    return %c0_i32, %c0_i32_0, %c0_i32_1 : i32, i32, i32
  }
  func.func @transform_7(%arg0: i32) -> (i32, i32) {
    %c0_i32 = arith.constant 0 : i32
    %c0_i32_0 = arith.constant 0 : i32
    %c0_i32_1 = arith.constant 0 : i32
    return %c0_i32, %c0_i32_0 : i32, i32
  }
  func.func @transform_8(%arg0: i32) -> (i32, i32) {
    %c0_i32 = arith.constant 0 : i32
    %c0_i32_0 = arith.constant 0 : i32
    %c0_i32_1 = arith.constant 0 : i32
    return %c0_i32, %c0_i32_0 : i32, i32
  }
  func.func @transform_9(%arg0: i32) -> (i32, i32, i32) {
    %c0_i32 = arith.constant 0 : i32
    %c0_i32_0 = arith.constant 0 : i32
    %c0_i32_1 = arith.constant 0 : i32
    return %arg0, %c0_i32, %c0_i32_0 : i32, i32, i32
  }
}

module attributes {stable_mosaic.version = 11 : i64} {
  func.func @_head_kernel(%arg0: i32, %arg1: memref<1x8x256xf32, #tpu.memory_space<vmem>>, %arg2: memref<128x8xf32, #tpu.memory_space<vmem>>, %arg3: memref<128x1xf32, #tpu.memory_space<vmem>>, %arg4: memref<3x128xf32, #tpu.memory_space<vmem>>, %arg5: memref<3x1xf32, #tpu.memory_space<vmem>>, %arg6: memref<1x3x256xf32, #tpu.memory_space<vmem>>) attributes {dimension_semantics = [#tpu.dimension_semantics<parallel>], iteration_bounds = array<i64: 2>, scalar_prefetch = 0 : i64, scratch_operands = 0 : i64, tpu.core_type = #tpu.core_type<tc>, window_params = [{transform_indices = @transform_0, window_bounds = array<i64: 1, 8, 256>}, {pipeline_mode = #tpu.pipeline_mode<synchronous>, transform_indices = @transform_1, window_bounds = array<i64: 128, 8>}, {pipeline_mode = #tpu.pipeline_mode<synchronous>, transform_indices = @transform_2, window_bounds = array<i64: 128, 1>}, {pipeline_mode = #tpu.pipeline_mode<synchronous>, transform_indices = @transform_3, window_bounds = array<i64: 3, 128>}, {pipeline_mode = #tpu.pipeline_mode<synchronous>, transform_indices = @transform_4, window_bounds = array<i64: 3, 1>}, {transform_indices = @transform_5, window_bounds = array<i64: 1, 3, 256>}]} {
    %c0 = arith.constant 0 : index
    %c0_0 = arith.constant 0 : index
    %0 = vector.load %arg2[%c0, %c0_0] : memref<128x8xf32, #tpu.memory_space<vmem>>, vector<128x8xf32>
    %c0_1 = arith.constant 0 : index
    %c0_2 = arith.constant 0 : index
    %c0_3 = arith.constant 0 : index
    %1 = vector.load %arg1[%c0_1, %c0_2, %c0_3] : memref<1x8x256xf32, #tpu.memory_space<vmem>>, vector<1x8x256xf32>
    %2 = vector.shape_cast %1 : vector<1x8x256xf32> to vector<8x256xf32>
    %cst = arith.constant dense<0.000000e+00> : vector<128x256xf32>
    %3 = tpu.matmul %0, %2, %cst {dimension_numbers = #tpu.dot_dimension_numbers<[1], [0], [0], [1], [0, 0, 1, 1], [], []>} : vector<128x8xf32>, vector<8x256xf32>, vector<128x256xf32> -> vector<128x256xf32>
    %c0_4 = arith.constant 0 : index
    %c0_5 = arith.constant 0 : index
    %4 = vector.load %arg3[%c0_4, %c0_5] : memref<128x1xf32, #tpu.memory_space<vmem>>, vector<128x1xf32>
    %5 = vector.broadcast %4 : vector<128x1xf32> to vector<128x256xf32>
    %6 = arith.addf %3, %5 : vector<128x256xf32>
    %cst_6 = arith.constant 5.000000e-01 : f32
    %7 = vector.broadcast %cst_6 : f32 to vector<128x256xf32>
    %8 = arith.mulf %7, %6 : vector<128x256xf32>
    %cst_7 = arith.constant 0.707106769 : f32
    %9 = vector.broadcast %cst_7 : f32 to vector<128x256xf32>
    %10 = arith.mulf %6, %9 : vector<128x256xf32>
    %11 = math.erf %10 : vector<128x256xf32>
    %cst_8 = arith.constant 1.000000e+00 : f32
    %12 = vector.broadcast %cst_8 : f32 to vector<128x256xf32>
    %13 = arith.addf %12, %11 : vector<128x256xf32>
    %14 = arith.mulf %8, %13 : vector<128x256xf32>
    %c0_9 = arith.constant 0 : index
    %c0_10 = arith.constant 0 : index
    %15 = vector.load %arg4[%c0_9, %c0_10] : memref<3x128xf32, #tpu.memory_space<vmem>>, vector<3x128xf32>
    %cst_11 = arith.constant dense<0.000000e+00> : vector<3x256xf32>
    %16 = tpu.matmul %15, %14, %cst_11 {dimension_numbers = #tpu.dot_dimension_numbers<[1], [0], [0], [1], [0, 0, 1, 1], [], []>} : vector<3x128xf32>, vector<128x256xf32>, vector<3x256xf32> -> vector<3x256xf32>
    %c0_12 = arith.constant 0 : index
    %c0_13 = arith.constant 0 : index
    %17 = vector.load %arg5[%c0_12, %c0_13] : memref<3x1xf32, #tpu.memory_space<vmem>>, vector<3x1xf32>
    %18 = vector.broadcast %17 : vector<3x1xf32> to vector<3x256xf32>
    %19 = arith.addf %16, %18 : vector<3x256xf32>
    %c0_14 = arith.constant 0 : index
    %c0_15 = arith.constant 0 : index
    %c0_16 = arith.constant 0 : index
    %20 = vector.load %arg6[%c0_14, %c0_15, %c0_16] : memref<1x3x256xf32, #tpu.memory_space<vmem>>, vector<1x3x256xf32>
    %21 = vector.shape_cast %20 : vector<1x3x256xf32> to vector<3x256xf32>
    %22 = vector.shape_cast %19 : vector<3x256xf32> to vector<1x3x256xf32>
    tpu.vector_store %arg6[%c0_14, %c0_15, %c0_16], %22 {strides = array<i32>} : memref<1x3x256xf32, #tpu.memory_space<vmem>>, vector<1x3x256xf32>,
    return
  }
  func.func @transform_0(%arg0: i32) -> (i32, i32, i32) {
    %c0_i32 = arith.constant 0 : i32
    %c0_i32_0 = arith.constant 0 : i32
    %c0_i32_1 = arith.constant 0 : i32
    return %arg0, %c0_i32, %c0_i32_0 : i32, i32, i32
  }
  func.func @transform_1(%arg0: i32) -> (i32, i32) {
    %c0_i32 = arith.constant 0 : i32
    %c0_i32_0 = arith.constant 0 : i32
    %c0_i32_1 = arith.constant 0 : i32
    return %c0_i32, %c0_i32_0 : i32, i32
  }
  func.func @transform_2(%arg0: i32) -> (i32, i32) {
    %c0_i32 = arith.constant 0 : i32
    %c0_i32_0 = arith.constant 0 : i32
    %c0_i32_1 = arith.constant 0 : i32
    return %c0_i32, %c0_i32_0 : i32, i32
  }
  func.func @transform_3(%arg0: i32) -> (i32, i32) {
    %c0_i32 = arith.constant 0 : i32
    %c0_i32_0 = arith.constant 0 : i32
    %c0_i32_1 = arith.constant 0 : i32
    return %c0_i32, %c0_i32_0 : i32, i32
  }
  func.func @transform_4(%arg0: i32) -> (i32, i32) {
    %c0_i32 = arith.constant 0 : i32
    %c0_i32_0 = arith.constant 0 : i32
    %c0_i32_1 = arith.constant 0 : i32
    return %c0_i32, %c0_i32_0 : i32, i32
  }
  func.func @transform_5(%arg0: i32) -> (i32, i32, i32) {
    %c0_i32 = arith.constant 0 : i32
    %c0_i32_0 = arith.constant 0 : i32
    %c0_i32_1 = arith.constant 0 : i32
    return %arg0, %c0_i32, %c0_i32_0 : i32, i32, i32
  }
}

</mosaic_0001>

<llo_original>
// kernel: trans_net_forward.6
$region0: #{trans_net_forward.6}
  #allocation0 [shape = 'u32[]', space=smem, size = 0x4, offset = 0x4, fixed_abs, tag = 'smem constant byte address 0x4 - core index']
  #allocation1 [shape = 'u32[72,128]{1,0:T(1,128)}', space=vmem, size = 0x9000, scoped, tag = 'internal scratch']
  %s0 = inlined_call_operand.vmem [shape: f32[2,3,256], index: 0, kind: input, shape index: {}]
  %s1 = inlined_call_operand.vmem [shape: f32[8,3], index: 1, kind: input, shape index: {}]
  %s2 = inlined_call_operand.vmem [shape: f32[8,1], index: 2, kind: input, shape index: {}]
  %s3 = inlined_call_operand.vmem [shape: f32[2,8,256], index: 3, kind: output, shape index: {}]
  %s4 = sld [smem:[#allocation0]]
  $region45: #{trans_net_forward.6} parent=0
    _
  %s6 = ssub.s32 1, %s4
  %s7 = scalar_select 0, %s6, %s4
  loop: start=0, step=1, limit=4
  $region2: #{trans_net_forward.6} parent=0 // loop_pre_header
    _
  $region3: #{trans_net_forward.6} parent=0 // loop_header
    %s9 = sphi 0, %s13
    %p10 = scmp.ge.s32.totalorder %s9, 4
    %s19 = sphi 0, %s21
    %s22 = sphi 0, %s19
    %s23 = sphi 0, %s22
    %s39 = sphi 0, %s23
    %s43 = sphi 0, %s43
    %s45 = sphi 0, %s43
    %s46 = sphi 0, %s45
    %s60 = sphi 0, %s46
    %s64 = sphi 0, %s64
    %s66 = sphi 0, %s64
    %s67 = sphi 0, %s66
    %s81 = sphi 0, %s67
    %s87 = sphi 0, %s89
    %s90 = sphi 0, %s87
    %s91 = sphi 0, %s90
    %s107 = sphi 0, %s91
  $region4: #{trans_net_forward.6} parent=0 // loop_header_branch
    %12 = sbr.rel (%p10) target = $region8
  $region5: #{trans_net_forward.6} parent=0 // loop_body
    %s14 = ssub.s32 %s9, 1
    %s15 = ssub.s32 %s9, 2
    %s16 = sadd.s32 %s9, 1
    %s17 = ssub.s32 %s9, %s16
    %p18 = scmp.eq.s32.totalorder %s17, 0
    %s20 = sadd.s32 %s19, 1
    %s21 = scalar_select %p18, %s19, %s20
    %p24 = pneg %p18
    %p25 = scmp.eq.s32.totalorder %s9, 1
    %p26 = por %p24, %p25
    %p27 = scmp.ne.s32.totalorder %s19, %s22
    %p28 = scmp.eq.s32.totalorder %s9, 0
    %p29 = por %p27, %p28
    %p30 = scmp.ne.s32.totalorder %s19, %s22
    %p31 = scmp.eq.s32.totalorder %s14, 1
    %p32 = por %p30, %p31
    %p33 = scmp.ne.s32.totalorder %s22, %s23
    %p34 = scmp.eq.s32.totalorder %s14, 0
    %p35 = por %p33, %p34
    %p36 = scmp.ne.s32.totalorder %s22, %s23
    %p37 = scmp.eq.s32.totalorder %s15, 1
    %p38 = por %p36, %p37
    %p40 = scmp.ne.s32.totalorder %s23, %s39
    %p41 = scmp.eq.s32.totalorder %s15, 0
    %p42 = por %p40, %p41
    %s44 = sadd.s32 %s43, 1
    %p47 = scmp.eq.s32.totalorder %s9, 1
    %p48 = scmp.ne.s32.totalorder %s43, %s45
    %p49 = scmp.eq.s32.totalorder %s9, 0
    %p50 = por %p48, %p49
    %p51 = scmp.ne.s32.totalorder %s43, %s45
    %p52 = scmp.eq.s32.totalorder %s14, 1
    %p53 = por %p51, %p52
    %p54 = scmp.ne.s32.totalorder %s45, %s46
    %p55 = scmp.eq.s32.totalorder %s14, 0
    %p56 = por %p54, %p55
    %p57 = scmp.ne.s32.totalorder %s45, %s46
    %p58 = scmp.eq.s32.totalorder %s15, 1
    %p59 = por %p57, %p58
    %p61 = scmp.ne.s32.totalorder %s46, %s60
    %p62 = scmp.eq.s32.totalorder %s15, 0
    %p63 = por %p61, %p62
    %s65 = sadd.s32 %s64, 1
    %p68 = scmp.eq.s32.totalorder %s9, 1
    %p69 = scmp.ne.s32.totalorder %s64, %s66
    %p70 = scmp.eq.s32.totalorder %s9, 0
    %p71 = por %p69, %p70
    %p72 = scmp.ne.s32.totalorder %s64, %s66
    %p73 = scmp.eq.s32.totalorder %s14, 1
    %p74 = por %p72, %p73
    %p75 = scmp.ne.s32.totalorder %s66, %s67
    %p76 = scmp.eq.s32.totalorder %s14, 0
    %p77 = por %p75, %p76
    %p78 = scmp.ne.s32.totalorder %s66, %s67
    %p79 = scmp.eq.s32.totalorder %s15, 1
    %p80 = por %p78, %p79
    %p82 = scmp.ne.s32.totalorder %s67, %s81
    %p83 = scmp.eq.s32.totalorder %s15, 0
    %p84 = por %p82, %p83
    %s85 = ssub.s32 %s9, %s16
    %p86 = scmp.eq.s32.totalorder %s85, 0
    %s88 = sadd.s32 %s87, 1
    %s89 = scalar_select %p86, %s87, %s88
    %p92 = pneg %p86
    %p93 = scmp.eq.s32.totalorder %s9, 1
    %p94 = por %p92, %p93
    %p95 = scmp.ne.s32.totalorder %s87, %s90
    %p96 = scmp.eq.s32.totalorder %s9, 0
    %p97 = por %p95, %p96
    %p98 = scmp.ne.s32.totalorder %s87, %s90
    %p99 = scmp.eq.s32.totalorder %s14, 1
    %p100 = por %p98, %p99
    %p101 = scmp.ne.s32.totalorder %s90, %s91
    %p102 = scmp.eq.s32.totalorder %s14, 0
    %p103 = por %p101, %p102
    %p104 = scmp.ne.s32.totalorder %s90, %s91
    %p105 = scmp.eq.s32.totalorder %s15, 1
    %p106 = por %p104, %p105
    %p108 = scmp.ne.s32.totalorder %s91, %s107
    %p109 = scmp.eq.s32.totalorder %s15, 0
    %p110 = por %p108, %p109
    %p111 = scmp.le.s32.totalorder 1, %s9
    %p112 = scmp.lt.s32.totalorder %s9, 3
    %p113 = pnand %p111, %p112
    %p114 = pneg %p113
    // Predicated region
    $region9: #{trans_net_forward.6} parent=5 // pred_check
      _
    $region10: #{trans_net_forward.6} parent=5 // pred_check_branch
      %116 = sbr.rel (%p113) target = $region12
    $region11: #{trans_net_forward.6} parent=5 // pred_region
      %s117 = ssub.s32 %s9, 1
      // Predicated region
      $region13: #{trans_net_forward.6} parent=11 // pred_check
        %p118 = pneg %p56
      $region14: #{trans_net_forward.6} parent=11 // pred_check_branch
        %120 = sbr.rel (%p118) target = $region16
      $region15: #{trans_net_forward.6} parent=11 // pred_region
        _
      $region16: #{trans_net_forward.6} parent=11 // pred_fallthru
        _
      // Predicated region
      $region17: #{trans_net_forward.6} parent=11 // pred_check
        %p121 = pneg %p77
      $region18: #{trans_net_forward.6} parent=11 // pred_check_branch
        %123 = sbr.rel (%p121) target = $region20
      $region19: #{trans_net_forward.6} parent=11 // pred_region
        _
      $region20: #{trans_net_forward.6} parent=11 // pred_fallthru
        _
    $region12: #{trans_net_forward.6} parent=5 // pred_fallthru
      _
    %p124 = scmp.lt.s32.totalorder %s9, 2
    // Predicated region
    $region21: #{trans_net_forward.6} parent=5 // pred_check
      %p125 = pneg %p124
    $region22: #{trans_net_forward.6} parent=5 // pred_check_branch
      %127 = sbr.rel (%p125) target = $region24
    $region23: #{trans_net_forward.6} parent=5 // pred_region
      // Predicated region
      $region25: #{trans_net_forward.6} parent=23 // pred_check
        %p128 = pneg %p29
      $region26: #{trans_net_forward.6} parent=23 // pred_check_branch
        %130 = sbr.rel (%p128) target = $region28
      $region27: #{trans_net_forward.6} parent=23 // pred_region
        %p131 = scmp.lt.s32.totalorder %s9, 1
        %s132 = scalar_select %p131, %s9, 1
        %s133 = smul.addr %s132, 2
        %s134 = smul.addr %s133, 4
        %s135 = scalar_lea.vmem %s0, %s134
      $region28: #{trans_net_forward.6} parent=23 // pred_fallthru
        _
    $region24: #{trans_net_forward.6} parent=5 // pred_fallthru
      _
    %p136 = scmp.le.s32.totalorder 1, %s9
    %p137 = scmp.lt.s32.totalorder %s9, 3
    %p138 = pnand %p136, %p137
    %p139 = pneg %p138
    // Predicated region
    $region29: #{trans_net_forward.6} parent=5 // pred_check
      _
    $region30: #{trans_net_forward.6} parent=5 // pred_check_branch
      %141 = sbr.rel (%p138) target = $region32
    $region31: #{trans_net_forward.6} parent=5 // pred_region
      %s142 = ssub.s32 %s9, 1
      %p143 = scmp.lt.s32.totalorder %s14, 1
      %s144 = scalar_select %p143, %s14, 1
      %s145 = smul.addr %s144, 2
      %s146 = smul.addr %s145, 4
      %s147 = scalar_lea.vmem %s0, %s146
      %p148 = pneg %p35
      %p149 = pneg %p32
      %p150 = pneg %p56
      %p151 = pneg %p53
      %p152 = pneg %p77
      %p153 = pneg %p74
      %p154 = pneg %p103
      %p155 = pneg %p100
      %p156 = scmp.lt.s32.totalorder %s14, 1
      %s157 = scalar_select %p156, %s14, 1
      %s158 = smul.addr %s157, 2
      %s159 = smul.addr %s158, 8
      %s160 = scalar_lea.vmem %s3, %s159
      %p161 = scmp.lt.s32.totalorder %s14, 1
      %s162 = scalar_select %p161, %s14, 1
      %s163 = smul.addr %s162, 2
      %s164 = smul.addr %s163, 4
      %s165 = scalar_lea.vmem %s0, %s164
      %p166 = scmp.lt.s32.totalorder %s14, 1
      %s167 = scalar_select %p166, %s14, 1
      %s168 = smul.addr %s167, 2
      %s169 = smul.addr %s168, 8
      %s170 = scalar_lea.vmem %s3, %s169
      %v171 = vld [vmem:[%s1] sm:$0xff]
      %v172 = vld [vmem:[%s165] sm:$0x77]
      %v173 = vld [vmem:[%s2] sm:$0xff]
      %175 = vset.pattern.permute.xlu0 0
      %176 = vperm.xlu0 %175, %v173
      %v177 = vpop.permute.xlu0 %176
      %180 = vst [vmem:[#allocation1] ss:$2 sm:$0xff] %v172
      %v181 = vld.sshfl [vmem:[#allocation1] sm:$0xff pattern:$0x75316420]
      %v182 = vld.sshfl [vmem:[#allocation1 + $0x8] sm:$0xff pattern:$0x75316420]
      %vm183 = vcmask 23552
      %v185 = vsel %vm183, %v171, 0
      %vm187 = vcmask 1042432
      %v188 = vsel %vm187, %v181, 0
      %v190 = vsel %vm187, %v182, 0
      %192 = vmatpush.msra.mxu0 0.0
      %193 = vmatpush.msra.mxu0 0.0
      %194 = vmatpush.msra.mxu0 0.0
      %195 = vmatpush.msra.mxu0 0.0
      %196 = vmatpush.msra.mxu0 0.0
      %197 = vmatpush.msra.mxu0 0.0
      %198 = vmatpush.msra.mxu0 0.0
      %199 = vmatpush.msra.mxu0 0.0
      %200 = vmatpush.msra.mxu0 0.0
      %201 = vmatpush.msra.mxu0 0.0
      %202 = vmatpush.msra.mxu0 0.0
      %203 = vmatpush.msra.mxu0 0.0
      %204 = vmatpush.msra.mxu0 0.0
      %205 = vmatpush.msra.mxu0 0.0
      %206 = vmatpush.msra.mxu0 0.0
      %207 = vmatpush.msra.mxu0 %v188
      %208 = vmatmul.f32.gmra.mxu0 %v185
      %v209 = vpop.f32.mrf.mxu0
      %v210 = vadd.f32 %v177, %v209
      %211 = vdwg.mxu0
      %212 = vmatpush.msra.mxu0 0.0
      %213 = vmatpush.msra.mxu0 0.0
      %214 = vmatpush.msra.mxu0 0.0
      %215 = vmatpush.msra.mxu0 0.0
      %216 = vmatpush.msra.mxu0 0.0
      %217 = vmatpush.msra.mxu0 0.0
      %218 = vmatpush.msra.mxu0 0.0
      %219 = vmatpush.msra.mxu0 0.0
      %220 = vmatpush.msra.mxu0 0.0
      %221 = vmatpush.msra.mxu0 0.0
      %222 = vmatpush.msra.mxu0 0.0
      %223 = vmatpush.msra.mxu0 0.0
      %224 = vmatpush.msra.mxu0 0.0
      %225 = vmatpush.msra.mxu0 0.0
      %226 = vmatpush.msra.mxu0 0.0
      %227 = vmatpush.msra.mxu0 %v190
      %228 = vmatmul.f32.gmra.mxu0 %v185
      %v229 = vpop.f32.mrf.mxu0
      %v230 = vadd.f32 %v177, %v229
      %231 = vdwg.mxu0
      %232 = vst [vmem:[%s170] sm:$0xff] %v210
      %233 = vst [vmem:[%s170 + $0x8] sm:$0xff] %v230
      %p234 = scmp.lt.s32.totalorder %s14, 1
      %s235 = scalar_select %p234, %s14, 1
      %s236 = smul.addr %s235, 2
      %s237 = smul.addr %s236, 8
      %s238 = scalar_lea.vmem %s3, %s237
      // Predicated region
      $region33: #{trans_net_forward.6} parent=31 // pred_check
        %p239 = pneg %p100
      $region34: #{trans_net_forward.6} parent=31 // pred_check_branch
        %241 = sbr.rel (%p239) target = $region36
      $region35: #{trans_net_forward.6} parent=31 // pred_region
        _
      $region36: #{trans_net_forward.6} parent=31 // pred_fallthru
        _
    $region32: #{trans_net_forward.6} parent=5 // pred_fallthru
      _
    %p242 = scmp.le.s32.totalorder 2, %s9
    // Predicated region
    $region37: #{trans_net_forward.6} parent=5 // pred_check
      %p243 = pneg %p242
    $region38: #{trans_net_forward.6} parent=5 // pred_check_branch
      %245 = sbr.rel (%p243) target = $region40
    $region39: #{trans_net_forward.6} parent=5 // pred_region
      %s246 = ssub.s32 %s9, 2
      // Predicated region
      $region41: #{trans_net_forward.6} parent=39 // pred_check
        %p247 = pneg %p106
      $region42: #{trans_net_forward.6} parent=39 // pred_check_branch
        %249 = sbr.rel (%p247) target = $region44
      $region43: #{trans_net_forward.6} parent=39 // pred_region
        %p250 = scmp.lt.s32.totalorder %s15, 1
        %s251 = scalar_select %p250, %s15, 1
        %s252 = smul.addr %s251, 2
        %s253 = smul.addr %s252, 8
        %s254 = scalar_lea.vmem %s3, %s253
      $region44: #{trans_net_forward.6} parent=39 // pred_fallthru
        _
    $region40: #{trans_net_forward.6} parent=5 // pred_fallthru
      _
  $region6: #{trans_net_forward.6} parent=0 // loop_footer
    %s13 = sadd.s32 1, %s9
  $region7: #{trans_net_forward.6} parent=0 // loop_footer_branch
    %8 = sbr.rel target = $region3
  $region8: #{trans_net_forward.6} parent=0 // loop_exit
    _

// kernel: trans_net_forward.7
$region0: #{trans_net_forward.7}
  #allocation0 [shape = 'u32[]', space=smem, size = 0x4, offset = 0x4, fixed_abs, tag = 'smem constant byte address 0x4 - core index']
  #allocation1 [shape = 'u32[72,128]{1,0:T(1,128)}', space=vmem, size = 0x9000, scoped, tag = 'internal scratch']
  %s0 = inlined_call_operand.vmem [shape: f32[2,8,625], index: 0, kind: input, shape index: {}]
  %s1 = inlined_call_operand.vmem [shape: f32[625,72], index: 1, kind: input, shape index: {}]
  %s2 = inlined_call_operand.vmem [shape: f32[625,72], index: 2, kind: input, shape index: {}]
  %s3 = inlined_call_operand.vmem [shape: f32[72,625], index: 3, kind: input, shape index: {}]
  %s4 = inlined_call_operand.vmem [shape: f32[72,625], index: 4, kind: input, shape index: {}]
  %s5 = inlined_call_operand.vmem [shape: f32[8,8,72], index: 5, kind: input, shape index: {}]
  %s6 = inlined_call_operand.vmem [shape: f32[8,8,72], index: 6, kind: input, shape index: {}]
  %s7 = inlined_call_operand.vmem [shape: f32[8,8], index: 7, kind: input, shape index: {}]
  %s8 = inlined_call_operand.vmem [shape: f32[8,1], index: 8, kind: input, shape index: {}]
  %s9 = inlined_call_operand.vmem [shape: f32[2,8,625], index: 9, kind: output, shape index: {}]
  %s10 = sld [smem:[#allocation0]]
  $region69: #{trans_net_forward.7} parent=0
    _
  %s12 = ssub.s32 1, %s10
  %s13 = scalar_select 0, %s12, %s10
  loop: start=0, step=1, limit=4
  $region2: #{trans_net_forward.7} parent=0 // loop_pre_header
    _
  $region3: #{trans_net_forward.7} parent=0 // loop_header
    %s15 = sphi 0, %s19
    %p16 = scmp.ge.s32.totalorder %s15, 4
    %s25 = sphi 0, %s27
    %s28 = sphi 0, %s25
    %s29 = sphi 0, %s28
    %s45 = sphi 0, %s29
    %s49 = sphi 0, %s49
    %s51 = sphi 0, %s49
    %s52 = sphi 0, %s51
    %s66 = sphi 0, %s52
    %s70 = sphi 0, %s70
    %s72 = sphi 0, %s70
    %s73 = sphi 0, %s72
    %s87 = sphi 0, %s73
    %s91 = sphi 0, %s91
    %s93 = sphi 0, %s91
    %s94 = sphi 0, %s93
    %s108 = sphi 0, %s94
    %s112 = sphi 0, %s112
    %s114 = sphi 0, %s112
    %s115 = sphi 0, %s114
    %s129 = sphi 0, %s115
    %s133 = sphi 0, %s133
    %s135 = sphi 0, %s133
    %s136 = sphi 0, %s135
    %s150 = sphi 0, %s136
    %s154 = sphi 0, %s154
    %s156 = sphi 0, %s154
    %s157 = sphi 0, %s156
    %s171 = sphi 0, %s157
    %s175 = sphi 0, %s175
    %s177 = sphi 0, %s175
    %s178 = sphi 0, %s177
    %s192 = sphi 0, %s178
    %s196 = sphi 0, %s196
    %s198 = sphi 0, %s196
    %s199 = sphi 0, %s198
    %s213 = sphi 0, %s199
    %s219 = sphi 0, %s221
    %s222 = sphi 0, %s219
    %s223 = sphi 0, %s222
    %s239 = sphi 0, %s223
  $region4: #{trans_net_forward.7} parent=0 // loop_header_branch
    %18 = sbr.rel (%p16) target = $region8
  $region5: #{trans_net_forward.7} parent=0 // loop_body
    %s20 = ssub.s32 %s15, 1
    %s21 = ssub.s32 %s15, 2
    %s22 = sadd.s32 %s15, 1
    %s23 = ssub.s32 %s15, %s22
    %p24 = scmp.eq.s32.totalorder %s23, 0
    %s26 = sadd.s32 %s25, 1
    %s27 = scalar_select %p24, %s25, %s26
    %p30 = pneg %p24
    %p31 = scmp.eq.s32.totalorder %s15, 1
    %p32 = por %p30, %p31
    %p33 = scmp.ne.s32.totalorder %s25, %s28
    %p34 = scmp.eq.s32.totalorder %s15, 0
    %p35 = por %p33, %p34
    %p36 = scmp.ne.s32.totalorder %s25, %s28
    %p37 = scmp.eq.s32.totalorder %s20, 1
    %p38 = por %p36, %p37
    %p39 = scmp.ne.s32.totalorder %s28, %s29
    %p40 = scmp.eq.s32.totalorder %s20, 0
    %p41 = por %p39, %p40
    %p42 = scmp.ne.s32.totalorder %s28, %s29
    %p43 = scmp.eq.s32.totalorder %s21, 1
    %p44 = por %p42, %p43
    %p46 = scmp.ne.s32.totalorder %s29, %s45
    %p47 = scmp.eq.s32.totalorder %s21, 0
    %p48 = por %p46, %p47
    %s50 = sadd.s32 %s49, 1
    %p53 = scmp.eq.s32.totalorder %s15, 1
    %p54 = scmp.ne.s32.totalorder %s49, %s51
    %p55 = scmp.eq.s32.totalorder %s15, 0
    %p56 = por %p54, %p55
    %p57 = scmp.ne.s32.totalorder %s49, %s51
    %p58 = scmp.eq.s32.totalorder %s20, 1
    %p59 = por %p57, %p58
    %p60 = scmp.ne.s32.totalorder %s51, %s52
    %p61 = scmp.eq.s32.totalorder %s20, 0
    %p62 = por %p60, %p61
    %p63 = scmp.ne.s32.totalorder %s51, %s52
    %p64 = scmp.eq.s32.totalorder %s21, 1
    %p65 = por %p63, %p64
    %p67 = scmp.ne.s32.totalorder %s52, %s66
    %p68 = scmp.eq.s32.totalorder %s21, 0
    %p69 = por %p67, %p68
    %s71 = sadd.s32 %s70, 1
    %p74 = scmp.eq.s32.totalorder %s15, 1
    %p75 = scmp.ne.s32.totalorder %s70, %s72
    %p76 = scmp.eq.s32.totalorder %s15, 0
    %p77 = por %p75, %p76
    %p78 = scmp.ne.s32.totalorder %s70, %s72
    %p79 = scmp.eq.s32.totalorder %s20, 1
    %p80 = por %p78, %p79
    %p81 = scmp.ne.s32.totalorder %s72, %s73
    %p82 = scmp.eq.s32.totalorder %s20, 0
    %p83 = por %p81, %p82
    %p84 = scmp.ne.s32.totalorder %s72, %s73
    %p85 = scmp.eq.s32.totalorder %s21, 1
    %p86 = por %p84, %p85
    %p88 = scmp.ne.s32.totalorder %s73, %s87
    %p89 = scmp.eq.s32.totalorder %s21, 0
    %p90 = por %p88, %p89
    %s92 = sadd.s32 %s91, 1
    %p95 = scmp.eq.s32.totalorder %s15, 1
    %p96 = scmp.ne.s32.totalorder %s91, %s93
    %p97 = scmp.eq.s32.totalorder %s15, 0
    %p98 = por %p96, %p97
    %p99 = scmp.ne.s32.totalorder %s91, %s93
    %p100 = scmp.eq.s32.totalorder %s20, 1
    %p101 = por %p99, %p100
    %p102 = scmp.ne.s32.totalorder %s93, %s94
    %p103 = scmp.eq.s32.totalorder %s20, 0
    %p104 = por %p102, %p103
    %p105 = scmp.ne.s32.totalorder %s93, %s94
    %p106 = scmp.eq.s32.totalorder %s21, 1
    %p107 = por %p105, %p106
    %p109 = scmp.ne.s32.totalorder %s94, %s108
    %p110 = scmp.eq.s32.totalorder %s21, 0
    %p111 = por %p109, %p110
    %s113 = sadd.s32 %s112, 1
    %p116 = scmp.eq.s32.totalorder %s15, 1
    %p117 = scmp.ne.s32.totalorder %s112, %s114
    %p118 = scmp.eq.s32.totalorder %s15, 0
    %p119 = por %p117, %p118
    %p120 = scmp.ne.s32.totalorder %s112, %s114
    %p121 = scmp.eq.s32.totalorder %s20, 1
    %p122 = por %p120, %p121
    %p123 = scmp.ne.s32.totalorder %s114, %s115
    %p124 = scmp.eq.s32.totalorder %s20, 0
    %p125 = por %p123, %p124
    %p126 = scmp.ne.s32.totalorder %s114, %s115
    %p127 = scmp.eq.s32.totalorder %s21, 1
    %p128 = por %p126, %p127
    %p130 = scmp.ne.s32.totalorder %s115, %s129
    %p131 = scmp.eq.s32.totalorder %s21, 0
    %p132 = por %p130, %p131
    %s134 = sadd.s32 %s133, 1
    %p137 = scmp.eq.s32.totalorder %s15, 1
    %p138 = scmp.ne.s32.totalorder %s133, %s135
    %p139 = scmp.eq.s32.totalorder %s15, 0
    %p140 = por %p138, %p139
    %p141 = scmp.ne.s32.totalorder %s133, %s135
    %p142 = scmp.eq.s32.totalorder %s20, 1
    %p143 = por %p141, %p142
    %p144 = scmp.ne.s32.totalorder %s135, %s136
    %p145 = scmp.eq.s32.totalorder %s20, 0
    %p146 = por %p144, %p145
    %p147 = scmp.ne.s32.totalorder %s135, %s136
    %p148 = scmp.eq.s32.totalorder %s21, 1
    %p149 = por %p147, %p148
    %p151 = scmp.ne.s32.totalorder %s136, %s150
    %p152 = scmp.eq.s32.totalorder %s21, 0
    %p153 = por %p151, %p152
    %s155 = sadd.s32 %s154, 1
    %p158 = scmp.eq.s32.totalorder %s15, 1
    %p159 = scmp.ne.s32.totalorder %s154, %s156
    %p160 = scmp.eq.s32.totalorder %s15, 0
    %p161 = por %p159, %p160
    %p162 = scmp.ne.s32.totalorder %s154, %s156
    %p163 = scmp.eq.s32.totalorder %s20, 1
    %p164 = por %p162, %p163
    %p165 = scmp.ne.s32.totalorder %s156, %s157
    %p166 = scmp.eq.s32.totalorder %s20, 0
    %p167 = por %p165, %p166
    %p168 = scmp.ne.s32.totalorder %s156, %s157
    %p169 = scmp.eq.s32.totalorder %s21, 1
    %p170 = por %p168, %p169
    %p172 = scmp.ne.s32.totalorder %s157, %s171
    %p173 = scmp.eq.s32.totalorder %s21, 0
    %p174 = por %p172, %p173
    %s176 = sadd.s32 %s175, 1
    %p179 = scmp.eq.s32.totalorder %s15, 1
    %p180 = scmp.ne.s32.totalorder %s175, %s177
    %p181 = scmp.eq.s32.totalorder %s15, 0
    %p182 = por %p180, %p181
    %p183 = scmp.ne.s32.totalorder %s175, %s177
    %p184 = scmp.eq.s32.totalorder %s20, 1
    %p185 = por %p183, %p184
    %p186 = scmp.ne.s32.totalorder %s177, %s178
    %p187 = scmp.eq.s32.totalorder %s20, 0
    %p188 = por %p186, %p187
    %p189 = scmp.ne.s32.totalorder %s177, %s178
    %p190 = scmp.eq.s32.totalorder %s21, 1
    %p191 = por %p189, %p190
    %p193 = scmp.ne.s32.totalorder %s178, %s192
    %p194 = scmp.eq.s32.totalorder %s21, 0
    %p195 = por %p193, %p194
    %s197 = sadd.s32 %s196, 1
    %p200 = scmp.eq.s32.totalorder %s15, 1
    %p201 = scmp.ne.s32.totalorder %s196, %s198
    %p202 = scmp.eq.s32.totalorder %s15, 0
    %p203 = por %p201, %p202
    %p204 = scmp.ne.s32.totalorder %s196, %s198
    %p205 = scmp.eq.s32.totalorder %s20, 1
    %p206 = por %p204, %p205
    %p207 = scmp.ne.s32.totalorder %s198, %s199
    %p208 = scmp.eq.s32.totalorder %s20, 0
    %p209 = por %p207, %p208
    %p210 = scmp.ne.s32.totalorder %s198, %s199
    %p211 = scmp.eq.s32.totalorder %s21, 1
    %p212 = por %p210, %p211
    %p214 = scmp.ne.s32.totalorder %s199, %s213
    %p215 = scmp.eq.s32.totalorder %s21, 0
    %p216 = por %p214, %p215
    %s217 = ssub.s32 %s15, %s22
    %p218 = scmp.eq.s32.totalorder %s217, 0
    %s220 = sadd.s32 %s219, 1
    %s221 = scalar_select %p218, %s219, %s220
    %p224 = pneg %p218
    %p225 = scmp.eq.s32.totalorder %s15, 1
    %p226 = por %p224, %p225
    %p227 = scmp.ne.s32.totalorder %s219, %s222
    %p228 = scmp.eq.s32.totalorder %s15, 0
    %p229 = por %p227, %p228
    %p230 = scmp.ne.s32.totalorder %s219, %s222
    %p231 = scmp.eq.s32.totalorder %s20, 1
    %p232 = por %p230, %p231
    %p233 = scmp.ne.s32.totalorder %s222, %s223
    %p234 = scmp.eq.s32.totalorder %s20, 0
    %p235 = por %p233, %p234
    %p236 = scmp.ne.s32.totalorder %s222, %s223
    %p237 = scmp.eq.s32.totalorder %s21, 1
    %p238 = por %p236, %p237
    %p240 = scmp.ne.s32.totalorder %s223, %s239
    %p241 = scmp.eq.s32.totalorder %s21, 0
    %p242 = por %p240, %p241
    %p243 = scmp.le.s32.totalorder 1, %s15
    %p244 = scmp.lt.s32.totalorder %s15, 3
    %p245 = pnand %p243, %p244
    %p246 = pneg %p245
    // Predicated region
    $region9: #{trans_net_forward.7} parent=5 // pred_check
      _
    $region10: #{trans_net_forward.7} parent=5 // pred_check_branch
      %248 = sbr.rel (%p245) target = $region12
    $region11: #{trans_net_forward.7} parent=5 // pred_region
      %s249 = ssub.s32 %s15, 1
      // Predicated region
      $region13: #{trans_net_forward.7} parent=11 // pred_check
        %p250 = pneg %p62
      $region14: #{trans_net_forward.7} parent=11 // pred_check_branch
        %252 = sbr.rel (%p250) target = $region16
      $region15: #{trans_net_forward.7} parent=11 // pred_region
        _
      $region16: #{trans_net_forward.7} parent=11 // pred_fallthru
        _
      // Predicated region
      $region17: #{trans_net_forward.7} parent=11 // pred_check
        %p253 = pneg %p83
      $region18: #{trans_net_forward.7} parent=11 // pred_check_branch
        %255 = sbr.rel (%p253) target = $region20
      $region19: #{trans_net_forward.7} parent=11 // pred_region
        _
      $region20: #{trans_net_forward.7} parent=11 // pred_fallthru
        _
      // Predicated region
      $region21: #{trans_net_forward.7} parent=11 // pred_check
        %p256 = pneg %p104
      $region22: #{trans_net_forward.7} parent=11 // pred_check_branch
        %258 = sbr.rel (%p256) target = $region24
      $region23: #{trans_net_forward.7} parent=11 // pred_region
        _
      $region24: #{trans_net_forward.7} parent=11 // pred_fallthru
        _
      // Predicated region
      $region25: #{trans_net_forward.7} parent=11 // pred_check
        %p259 = pneg %p125
      $region26: #{trans_net_forward.7} parent=11 // pred_check_branch
        %261 = sbr.rel (%p259) target = $region28
      $region27: #{trans_net_forward.7} parent=11 // pred_region
        _
      $region28: #{trans_net_forward.7} parent=11 // pred_fallthru
        _
      // Predicated region
      $region29: #{trans_net_forward.7} parent=11 // pred_check
        %p262 = pneg %p146
      $region30: #{trans_net_forward.7} parent=11 // pred_check_branch
        %264 = sbr.rel (%p262) target = $region32
      $region31: #{trans_net_forward.7} parent=11 // pred_region
        _
      $region32: #{trans_net_forward.7} parent=11 // pred_fallthru
        _
      // Predicated region
      $region33: #{trans_net_forward.7} parent=11 // pred_check
        %p265 = pneg %p167
      $region34: #{trans_net_forward.7} parent=11 // pred_check_branch
        %267 = sbr.rel (%p265) target = $region36
      $region35: #{trans_net_forward.7} parent=11 // pred_region
        _
      $region36: #{trans_net_forward.7} parent=11 // pred_fallthru
        _
      // Predicated region
      $region37: #{trans_net_forward.7} parent=11 // pred_check
        %p268 = pneg %p188
      $region38: #{trans_net_forward.7} parent=11 // pred_check_branch
        %270 = sbr.rel (%p268) target = $region40
      $region39: #{trans_net_forward.7} parent=11 // pred_region
        _
      $region40: #{trans_net_forward.7} parent=11 // pred_fallthru
        _
      // Predicated region
      $region41: #{trans_net_forward.7} parent=11 // pred_check
        %p271 = pneg %p209
      $region42: #{trans_net_forward.7} parent=11 // pred_check_branch
        %273 = sbr.rel (%p271) target = $region44
      $region43: #{trans_net_forward.7} parent=11 // pred_region
        _
      $region44: #{trans_net_forward.7} parent=11 // pred_fallthru
        _
    $region12: #{trans_net_forward.7} parent=5 // pred_fallthru
      _
    %p274 = scmp.lt.s32.totalorder %s15, 2
    // Predicated region
    $region45: #{trans_net_forward.7} parent=5 // pred_check
      %p275 = pneg %p274
    $region46: #{trans_net_forward.7} parent=5 // pred_check_branch
      %277 = sbr.rel (%p275) target = $region48
    $region47: #{trans_net_forward.7} parent=5 // pred_region
      // Predicated region
      $region49: #{trans_net_forward.7} parent=47 // pred_check
        %p278 = pneg %p35
      $region50: #{trans_net_forward.7} parent=47 // pred_check_branch
        %280 = sbr.rel (%p278) target = $region52
      $region51: #{trans_net_forward.7} parent=47 // pred_region
        %p281 = scmp.lt.s32.totalorder %s15, 1
        %s282 = scalar_select %p281, %s15, 1
        %s283 = smul.addr %s282, 5
        %s284 = smul.addr %s283, 8
        %s285 = scalar_lea.vmem %s0, %s284
      $region52: #{trans_net_forward.7} parent=47 // pred_fallthru
        _
    $region48: #{trans_net_forward.7} parent=5 // pred_fallthru
      _
    %p286 = scmp.le.s32.totalorder 1, %s15
    %p287 = scmp.lt.s32.totalorder %s15, 3
    %p288 = pnand %p286, %p287
    %p289 = pneg %p288
    // Predicated region
    $region53: #{trans_net_forward.7} parent=5 // pred_check
      _
    $region54: #{trans_net_forward.7} parent=5 // pred_check_branch
      %291 = sbr.rel (%p288) target = $region56
    $region55: #{trans_net_forward.7} parent=5 // pred_region
      %s292 = ssub.s32 %s15, 1
      %p293 = scmp.lt.s32.totalorder %s20, 1
      %s294 = scalar_select %p293, %s20, 1
      %s295 = smul.addr %s294, 5
      %s296 = smul.addr %s295, 8
      %s297 = scalar_lea.vmem %s0, %s296
      %p298 = pneg %p41
      %p299 = pneg %p38
      %p300 = pneg %p62
      %p301 = pneg %p59
      %p302 = pneg %p83
      %p303 = pneg %p80
      %p304 = pneg %p104
      %p305 = pneg %p101
      %p306 = pneg %p125
      %p307 = pneg %p122
      %p308 = pneg %p146
      %p309 = pneg %p143
      %p310 = pneg %p167
      %p311 = pneg %p164
      %p312 = pneg %p188
      %p313 = pneg %p185
      %p314 = pneg %p209
      %p315 = pneg %p206
      %p316 = pneg %p235
      %p317 = pneg %p232
      %p318 = scmp.lt.s32.totalorder %s20, 1
      %s319 = scalar_select %p318, %s20, 1
      %s320 = smul.addr %s319, 5
      %s321 = smul.addr %s320, 8
      %s322 = scalar_lea.vmem %s9, %s321
      %p323 = scmp.lt.s32.totalorder %s20, 1
      %s324 = scalar_select %p323, %s20, 1
      %s325 = smul.addr %s324, 5
      %s326 = smul.addr %s325, 8
      %s327 = scalar_lea.vmem %s0, %s326
      %p328 = scmp.lt.s32.totalorder %s20, 1
      %s329 = scalar_select %p328, %s20, 1
      %s330 = smul.addr %s329, 5
      %s331 = smul.addr %s330, 8
      %s332 = scalar_lea.vmem %s9, %s331
      %v333 = vld [vmem:[%s327] sm:$0xff]
      %v334 = vld [vmem:[%s327 + $0x8] sm:$0xff]
      %v335 = vld [vmem:[%s327 + $0x10] sm:$0xff]
      %v336 = vld [vmem:[%s327 + $0x18] sm:$0xff]
      %v337 = vld [vmem:[%s327 + $0x20] sm:$0xff]
      %v338 = vld [vmem:[%s1] sm:$0xff]
      %v339 = vld [vmem:[%s1 + $0x8] sm:$0xff]
      %v340 = vld [vmem:[%s1 + $0x10] sm:$0xff]
      %v341 = vld [vmem:[%s1 + $0x18] sm:$0xff]
      %v342 = vld [vmem:[%s1 + $0x20] sm:$0xff]
      %v343 = vld [vmem:[%s1 + $0x28] sm:$0xff]
      %v344 = vld [vmem:[%s1 + $0x30] sm:$0xff]
      %v345 = vld [vmem:[%s1 + $0x38] sm:$0xff]
      %v346 = vld [vmem:[%s1 + $0x40] sm:$0xff]
      %v347 = vld [vmem:[%s1 + $0x48] sm:$0xff]
      %v348 = vld [vmem:[%s1 + $0x50] sm:$0xff]
      %v349 = vld [vmem:[%s1 + $0x58] sm:$0xff]
      %v350 = vld [vmem:[%s1 + $0x60] sm:$0xff]
      %v351 = vld [vmem:[%s1 + $0x68] sm:$0xff]
      %v352 = vld [vmem:[%s1 + $0x70] sm:$0xff]
      %v353 = vld [vmem:[%s1 + $0x78] sm:$0xff]
      %v354 = vld [vmem:[%s1 + $0x80] sm:$0xff]
      %v355 = vld [vmem:[%s1 + $0x88] sm:$0xff]
      %v356 = vld [vmem:[%s1 + $0x90] sm:$0xff]
      %v357 = vld [vmem:[%s1 + $0x98] sm:$0xff]
      %v358 = vld [vmem:[%s1 + $0xa0] sm:$0xff]
      %v359 = vld [vmem:[%s1 + $0xa8] sm:$0xff]
      %v360 = vld [vmem:[%s1 + $0xb0] sm:$0xff]
      %v361 = vld [vmem:[%s1 + $0xb8] sm:$0xff]
      %v362 = vld [vmem:[%s1 + $0xc0] sm:$0xff]
      %v363 = vld [vmem:[%s1 + $0xc8] sm:$0xff]
      %v364 = vld [vmem:[%s1 + $0xd0] sm:$0xff]
      %v365 = vld [vmem:[%s1 + $0xd8] sm:$0xff]
      %v366 = vld [vmem:[%s1 + $0xe0] sm:$0xff]
      %v367 = vld [vmem:[%s1 + $0xe8] sm:$0xff]
      %v368 = vld [vmem:[%s1 + $0xf0] sm:$0xff]
      %v369 = vld [vmem:[%s1 + $0xf8] sm:$0xff]
      %v370 = vld [vmem:[%s1 + $0x100] sm:$0xff]
      %v371 = vld [vmem:[%s1 + $0x108] sm:$0xff]
      %v372 = vld [vmem:[%s1 + $0x110] sm:$0xff]
      %v373 = vld [vmem:[%s1 + $0x118] sm:$0xff]
      %v374 = vld [vmem:[%s1 + $0x120] sm:$0xff]
      %v375 = vld [vmem:[%s1 + $0x128] sm:$0xff]
      %v376 = vld [vmem:[%s1 + $0x130] sm:$0xff]
      %v377 = vld [vmem:[%s1 + $0x138] sm:$0xff]
      %v378 = vld [vmem:[%s1 + $0x140] sm:$0xff]
      %v379 = vld [vmem:[%s1 + $0x148] sm:$0xff]
      %v380 = vld [vmem:[%s1 + $0x150] sm:$0xff]
      %v381 = vld [vmem:[%s1 + $0x158] sm:$0xff]
      %v382 = vld [vmem:[%s1 + $0x160] sm:$0xff]
      %v383 = vld [vmem:[%s1 + $0x168] sm:$0xff]
      %v384 = vld [vmem:[%s1 + $0x170] sm:$0xff]
      %v385 = vld [vmem:[%s1 + $0x178] sm:$0xff]
      %v386 = vld [vmem:[%s1 + $0x180] sm:$0xff]
      %v387 = vld [vmem:[%s1 + $0x188] sm:$0xff]
      %v388 = vld [vmem:[%s1 + $0x190] sm:$0xff]
      %v389 = vld [vmem:[%s1 + $0x198] sm:$0xff]
      %v390 = vld [vmem:[%s1 + $0x1a0] sm:$0xff]
      %v391 = vld [vmem:[%s1 + $0x1a8] sm:$0xff]
      %v392 = vld [vmem:[%s1 + $0x1b0] sm:$0xff]
      %v393 = vld [vmem:[%s1 + $0x1b8] sm:$0xff]
      %v394 = vld [vmem:[%s1 + $0x1c0] sm:$0xff]
      %v395 = vld [vmem:[%s1 + $0x1c8] sm:$0xff]
      %v396 = vld [vmem:[%s1 + $0x1d0] sm:$0xff]
      %v397 = vld [vmem:[%s1 + $0x1d8] sm:$0xff]
      %v398 = vld [vmem:[%s1 + $0x1e0] sm:$0xff]
      %v399 = vld [vmem:[%s1 + $0x1e8] sm:$0xff]
      %v400 = vld [vmem:[%s1 + $0x1f0] sm:$0xff]
      %v401 = vld [vmem:[%s1 + $0x1f8] sm:$0xff]
      %v402 = vld [vmem:[%s1 + $0x200] sm:$0xff]
      %v403 = vld [vmem:[%s1 + $0x208] sm:$0xff]
      %v404 = vld [vmem:[%s1 + $0x210] sm:$0xff]
      %v405 = vld [vmem:[%s1 + $0x218] sm:$0xff]
      %v406 = vld [vmem:[%s1 + $0x220] sm:$0xff]
      %v407 = vld [vmem:[%s1 + $0x228] sm:$0xff]
      %v408 = vld [vmem:[%s1 + $0x230] sm:$0xff]
      %v409 = vld [vmem:[%s1 + $0x238] sm:$0xff]
      %v410 = vld [vmem:[%s1 + $0x240] sm:$0xff]
      %v411 = vld [vmem:[%s1 + $0x248] sm:$0xff]
      %v412 = vld [vmem:[%s1 + $0x250] sm:$0xff]
      %v413 = vld [vmem:[%s1 + $0x258] sm:$0xff]
      %v414 = vld [vmem:[%s1 + $0x260] sm:$0xff]
      %v415 = vld [vmem:[%s1 + $0x268] sm:$0xff]
      %v416 = vld [vmem:[%s1 + $0x270] sm:$0x1]
      %vm417 = vcmask 924672
      %v419 = vsel %vm417, %v337, 0
      %vm421 = vcmask 1040384
      %v423 = vsel %vm421, %v416, 0
      %425 = vmatpush.msra.mxu0 %v353
      %426 = vmatpush.msra.mxu0 %v352
      %427 = vmatpush.msra.mxu0 %v351
      %428 = vmatpush.msra.mxu0 %v350
      %429 = vmatpush.msra.mxu0 %v349
      %430 = vmatpush.msra.mxu0 %v348
      %431 = vmatpush.msra.mxu0 %v347
      %432 = vmatpush.msra.mxu0 %v346
      %433 = vmatpush.msra.mxu0 %v345
      %434 = vmatpush.msra.mxu0 %v344
      %435 = vmatpush.msra.mxu0 %v343
      %436 = vmatpush.msra.mxu0 %v342
      %437 = vmatpush.msra.mxu0 %v341
      %438 = vmatpush.msra.mxu0 %v340
      %439 = vmatpush.msra.mxu0 %v339
      %440 = vmatpush.msra.mxu0 %v338
      %441 = vmatmul.f32.gmra.mxu0 %v333
      %v442 = vpop.f32.mrf.mxu0
      %v443 = vadd.f32 0.0, %v442
      %444 = vdwg.mxu0
      %445 = vmatpush.msra.mxu0 %v369
      %446 = vmatpush.msra.mxu0 %v368
      %447 = vmatpush.msra.mxu0 %v367
      %448 = vmatpush.msra.mxu0 %v366
      %449 = vmatpush.msra.mxu0 %v365
      %450 = vmatpush.msra.mxu0 %v364
      %451 = vmatpush.msra.mxu0 %v363
      %452 = vmatpush.msra.mxu0 %v362
      %453 = vmatpush.msra.mxu0 %v361
      %454 = vmatpush.msra.mxu0 %v360
      %455 = vmatpush.msra.mxu0 %v359
      %456 = vmatpush.msra.mxu0 %v358
      %457 = vmatpush.msra.mxu0 %v357
      %458 = vmatpush.msra.mxu0 %v356
      %459 = vmatpush.msra.mxu0 %v355
      %460 = vmatpush.msra.mxu0 %v354
      %461 = vmatmul.f32.gmra.mxu0 %v334
      %v462 = vpop.f32.mrf.mxu0
      %v463 = vadd.f32 %v443, %v462
      %464 = vdwg.mxu0
      %465 = vmatpush.msra.mxu0 %v385
      %466 = vmatpush.msra.mxu0 %v384
      %467 = vmatpush.msra.mxu0 %v383
      %468 = vmatpush.msra.mxu0 %v382
      %469 = vmatpush.msra.mxu0 %v381
      %470 = vmatpush.msra.mxu0 %v380
      %471 = vmatpush.msra.mxu0 %v379
      %472 = vmatpush.msra.mxu0 %v378
      %473 = vmatpush.msra.mxu0 %v377
      %474 = vmatpush.msra.mxu0 %v376
      %475 = vmatpush.msra.mxu0 %v375
      %476 = vmatpush.msra.mxu0 %v374
      %477 = vmatpush.msra.mxu0 %v373
      %478 = vmatpush.msra.mxu0 %v372
      %479 = vmatpush.msra.mxu0 %v371
      %480 = vmatpush.msra.mxu0 %v370
      %481 = vmatmul.f32.gmra.mxu0 %v335
      %v482 = vpop.f32.mrf.mxu0
      %v483 = vadd.f32 %v463, %v482
      %484 = vdwg.mxu0
      %485 = vmatpush.msra.mxu0 %v401
      %486 = vmatpush.msra.mxu0 %v400
      %487 = vmatpush.msra.mxu0 %v399
      %488 = vmatpush.msra.mxu0 %v398
      %489 = vmatpush.msra.mxu0 %v397
      %490 = vmatpush.msra.mxu0 %v396
      %491 = vmatpush.msra.mxu0 %v395
      %492 = vmatpush.msra.mxu0 %v394
      %493 = vmatpush.msra.mxu0 %v393
      %494 = vmatpush.msra.mxu0 %v392
      %495 = vmatpush.msra.mxu0 %v391
      %496 = vmatpush.msra.mxu0 %v390
      %497 = vmatpush.msra.mxu0 %v389
      %498 = vmatpush.msra.mxu0 %v388
      %499 = vmatpush.msra.mxu0 %v387
      %500 = vmatpush.msra.mxu0 %v386
      %501 = vmatmul.f32.gmra.mxu0 %v336
      %v502 = vpop.f32.mrf.mxu0
      %v503 = vadd.f32 %v483, %v502
      %504 = vdwg.mxu0
      %505 = vmatpush.msra.mxu0 0.0
      %506 = vmatpush.msra.mxu0 %v423
      %507 = vmatpush.msra.mxu0 %v415
      %508 = vmatpush.msra.mxu0 %v414
      %509 = vmatpush.msra.mxu0 %v413
      %510 = vmatpush.msra.mxu0 %v412
      %511 = vmatpush.msra.mxu0 %v411
      %512 = vmatpush.msra.mxu0 %v410
      %513 = vmatpush.msra.mxu0 %v409
      %514 = vmatpush.msra.mxu0 %v408
      %515 = vmatpush.msra.mxu0 %v407
      %516 = vmatpush.msra.mxu0 %v406
      %517 = vmatpush.msra.mxu0 %v405
      %518 = vmatpush.msra.mxu0 %v404
      %519 = vmatpush.msra.mxu0 %v403
      %520 = vmatpush.msra.mxu0 %v402
      %521 = vmatmul.f32.gmra.mxu0 %v419
      %v522 = vpop.f32.mrf.mxu0
      %v523 = vadd.f32 %v503, %v522
      %524 = vdwg.mxu0
      %v525 = vld [vmem:[%s2] sm:$0xff]
      %v526 = vld [vmem:[%s2 + $0x8] sm:$0xff]
      %v527 = vld [vmem:[%s2 + $0x10] sm:$0xff]
      %v528 = vld [vmem:[%s2 + $0x18] sm:$0xff]
      %v529 = vld [vmem:[%s2 + $0x20] sm:$0xff]
      %v530 = vld [vmem:[%s2 + $0x28] sm:$0xff]
      %v531 = vld [vmem:[%s2 + $0x30] sm:$0xff]
      %v532 = vld [vmem:[%s2 + $0x38] sm:$0xff]
      %v533 = vld [vmem:[%s2 + $0x40] sm:$0xff]
      %v534 = vld [vmem:[%s2 + $0x48] sm:$0xff]
      %v535 = vld [vmem:[%s2 + $0x50] sm:$0xff]
      %v536 = vld [vmem:[%s2 + $0x58] sm:$0xff]
      %v537 = vld [vmem:[%s2 + $0x60] sm:$0xff]
      %v538 = vld [vmem:[%s2 + $0x68] sm:$0xff]
      %v539 = vld [vmem:[%s2 + $0x70] sm:$0xff]
      %v540 = vld [vmem:[%s2 + $0x78] sm:$0xff]
      %v541 = vld [vmem:[%s2 + $0x80] sm:$0xff]
      %v542 = vld [vmem:[%s2 + $0x88] sm:$0xff]
      %v543 = vld [vmem:[%s2 + $0x90] sm:$0xff]
      %v544 = vld [vmem:[%s2 + $0x98] sm:$0xff]
      %v545 = vld [vmem:[%s2 + $0xa0] sm:$0xff]
      %v546 = vld [vmem:[%s2 + $0xa8] sm:$0xff]
      %v547 = vld [vmem:[%s2 + $0xb0] sm:$0xff]
      %v548 = vld [vmem:[%s2 + $0xb8] sm:$0xff]
      %v549 = vld [vmem:[%s2 + $0xc0] sm:$0xff]
      %v550 = vld [vmem:[%s2 + $0xc8] sm:$0xff]
      %v551 = vld [vmem:[%s2 + $0xd0] sm:$0xff]
      %v552 = vld [vmem:[%s2 + $0xd8] sm:$0xff]
      %v553 = vld [vmem:[%s2 + $0xe0] sm:$0xff]
      %v554 = vld [vmem:[%s2 + $0xe8] sm:$0xff]
      %v555 = vld [vmem:[%s2 + $0xf0] sm:$0xff]
      %v556 = vld [vmem:[%s2 + $0xf8] sm:$0xff]
      %v557 = vld [vmem:[%s2 + $0x100] sm:$0xff]
      %v558 = vld [vmem:[%s2 + $0x108] sm:$0xff]
      %v559 = vld [vmem:[%s2 + $0x110] sm:$0xff]
      %v560 = vld [vmem:[%s2 + $0x118] sm:$0xff]
      %v561 = vld [vmem:[%s2 + $0x120] sm:$0xff]
      %v562 = vld [vmem:[%s2 + $0x128] sm:$0xff]
      %v563 = vld [vmem:[%s2 + $0x130] sm:$0xff]
      %v564 = vld [vmem:[%s2 + $0x138] sm:$0xff]
      %v565 = vld [vmem:[%s2 + $0x140] sm:$0xff]
      %v566 = vld [vmem:[%s2 + $0x148] sm:$0xff]
      %v567 = vld [vmem:[%s2 + $0x150] sm:$0xff]
      %v568 = vld [vmem:[%s2 + $0x158] sm:$0xff]
      %v569 = vld [vmem:[%s2 + $0x160] sm:$0xff]
      %v570 = vld [vmem:[%s2 + $0x168] sm:$0xff]
      %v571 = vld [vmem:[%s2 + $0x170] sm:$0xff]
      %v572 = vld [vmem:[%s2 + $0x178] sm:$0xff]
      %v573 = vld [vmem:[%s2 + $0x180] sm:$0xff]
      %v574 = vld [vmem:[%s2 + $0x188] sm:$0xff]
      %v575 = vld [vmem:[%s2 + $0x190] sm:$0xff]
      %v576 = vld [vmem:[%s2 + $0x198] sm:$0xff]
      %v577 = vld [vmem:[%s2 + $0x1a0] sm:$0xff]
      %v578 = vld [vmem:[%s2 + $0x1a8] sm:$0xff]
      %v579 = vld [vmem:[%s2 + $0x1b0] sm:$0xff]
      %v580 = vld [vmem:[%s2 + $0x1b8] sm:$0xff]
      %v581 = vld [vmem:[%s2 + $0x1c0] sm:$0xff]
      %v582 = vld [vmem:[%s2 + $0x1c8] sm:$0xff]
      %v583 = vld [vmem:[%s2 + $0x1d0] sm:$0xff]
      %v584 = vld [vmem:[%s2 + $0x1d8] sm:$0xff]
      %v585 = vld [vmem:[%s2 + $0x1e0] sm:$0xff]
      %v586 = vld [vmem:[%s2 + $0x1e8] sm:$0xff]
      %v587 = vld [vmem:[%s2 + $0x1f0] sm:$0xff]
      %v588 = vld [vmem:[%s2 + $0x1f8] sm:$0xff]
      %v589 = vld [vmem:[%s2 + $0x200] sm:$0xff]
      %v590 = vld [vmem:[%s2 + $0x208] sm:$0xff]
      %v591 = vld [vmem:[%s2 + $0x210] sm:$0xff]
      %v592 = vld [vmem:[%s2 + $0x218] sm:$0xff]
      %v593 = vld [vmem:[%s2 + $0x220] sm:$0xff]
      %v594 = vld [vmem:[%s2 + $0x228] sm:$0xff]
      %v595 = vld [vmem:[%s2 + $0x230] sm:$0xff]
      %v596 = vld [vmem:[%s2 + $0x238] sm:$0xff]
      %v597 = vld [vmem:[%s2 + $0x240] sm:$0xff]
      %v598 = vld [vmem:[%s2 + $0x248] sm:$0xff]
      %v599 = vld [vmem:[%s2 + $0x250] sm:$0xff]
      %v600 = vld [vmem:[%s2 + $0x258] sm:$0xff]
      %v601 = vld [vmem:[%s2 + $0x260] sm:$0xff]
      %v602 = vld [vmem:[%s2 + $0x268] sm:$0xff]
      %v603 = vld [vmem:[%s2 + $0x270] sm:$0x1]
      %v605 = vsel %vm421, %v603, 0
      %607 = vmatpush.msra.mxu0 %v540
      %608 = vmatpush.msra.mxu0 %v539
      %609 = vmatpush.msra.mxu0 %v538
      %610 = vmatpush.msra.mxu0 %v537
      %611 = vmatpush.msra.mxu0 %v536
      %612 = vmatpush.msra.mxu0 %v535
      %613 = vmatpush.msra.mxu0 %v534
      %614 = vmatpush.msra.mxu0 %v533
      %615 = vmatpush.msra.mxu0 %v532
      %616 = vmatpush.msra.mxu0 %v531
      %617 = vmatpush.msra.mxu0 %v530
      %618 = vmatpush.msra.mxu0 %v529
      %619 = vmatpush.msra.mxu0 %v528
      %620 = vmatpush.msra.mxu0 %v527
      %621 = vmatpush.msra.mxu0 %v526
      %622 = vmatpush.msra.mxu0 %v525
      %623 = vmatmul.f32.gmra.mxu0 %v333
      %v624 = vpop.f32.mrf.mxu0
      %v625 = vadd.f32 0.0, %v624
      %626 = vdwg.mxu0
      %627 = vmatpush.msra.mxu0 %v556
      %628 = vmatpush.msra.mxu0 %v555
      %629 = vmatpush.msra.mxu0 %v554
      %630 = vmatpush.msra.mxu0 %v553
      %631 = vmatpush.msra.mxu0 %v552
      %632 = vmatpush.msra.mxu0 %v551
      %633 = vmatpush.msra.mxu0 %v550
      %634 = vmatpush.msra.mxu0 %v549
      %635 = vmatpush.msra.mxu0 %v548
      %636 = vmatpush.msra.mxu0 %v547
      %637 = vmatpush.msra.mxu0 %v546
      %638 = vmatpush.msra.mxu0 %v545
      %639 = vmatpush.msra.mxu0 %v544
      %640 = vmatpush.msra.mxu0 %v543
      %641 = vmatpush.msra.mxu0 %v542
      %642 = vmatpush.msra.mxu0 %v541
      %643 = vmatmul.f32.gmra.mxu0 %v334
      %v644 = vpop.f32.mrf.mxu0
      %v645 = vadd.f32 %v625, %v644
      %646 = vdwg.mxu0
      %647 = vmatpush.msra.mxu0 %v572
      %648 = vmatpush.msra.mxu0 %v571
      %649 = vmatpush.msra.mxu0 %v570
      %650 = vmatpush.msra.mxu0 %v569
      %651 = vmatpush.msra.mxu0 %v568
      %652 = vmatpush.msra.mxu0 %v567
      %653 = vmatpush.msra.mxu0 %v566
      %654 = vmatpush.msra.mxu0 %v565
      %655 = vmatpush.msra.mxu0 %v564
      %656 = vmatpush.msra.mxu0 %v563
      %657 = vmatpush.msra.mxu0 %v562
      %658 = vmatpush.msra.mxu0 %v561
      %659 = vmatpush.msra.mxu0 %v560
      %660 = vmatpush.msra.mxu0 %v559
      %661 = vmatpush.msra.mxu0 %v558
      %662 = vmatpush.msra.mxu0 %v557
      %663 = vmatmul.f32.gmra.mxu0 %v335
      %v664 = vpop.f32.mrf.mxu0
      %v665 = vadd.f32 %v645, %v664
      %666 = vdwg.mxu0
      %667 = vmatpush.msra.mxu0 %v588
      %668 = vmatpush.msra.mxu0 %v587
      %669 = vmatpush.msra.mxu0 %v586
      %670 = vmatpush.msra.mxu0 %v585
      %671 = vmatpush.msra.mxu0 %v584
      %672 = vmatpush.msra.mxu0 %v583
      %673 = vmatpush.msra.mxu0 %v582
      %674 = vmatpush.msra.mxu0 %v581
      %675 = vmatpush.msra.mxu0 %v580
      %676 = vmatpush.msra.mxu0 %v579
      %677 = vmatpush.msra.mxu0 %v578
      %678 = vmatpush.msra.mxu0 %v577
      %679 = vmatpush.msra.mxu0 %v576
      %680 = vmatpush.msra.mxu0 %v575
      %681 = vmatpush.msra.mxu0 %v574
      %682 = vmatpush.msra.mxu0 %v573
      %683 = vmatmul.f32.gmra.mxu0 %v336
      %v684 = vpop.f32.mrf.mxu0
      %v685 = vadd.f32 %v665, %v684
      %686 = vdwg.mxu0
      %687 = vmatpush.msra.mxu0 0.0
      %688 = vmatpush.msra.mxu0 %v605
      %689 = vmatpush.msra.mxu0 %v602
      %690 = vmatpush.msra.mxu0 %v601
      %691 = vmatpush.msra.mxu0 %v600
      %692 = vmatpush.msra.mxu0 %v599
      %693 = vmatpush.msra.mxu0 %v598
      %694 = vmatpush.msra.mxu0 %v597
      %695 = vmatpush.msra.mxu0 %v596
      %696 = vmatpush.msra.mxu0 %v595
      %697 = vmatpush.msra.mxu0 %v594
      %698 = vmatpush.msra.mxu0 %v593
      %699 = vmatpush.msra.mxu0 %v592
      %700 = vmatpush.msra.mxu0 %v591
      %701 = vmatpush.msra.mxu0 %v590
      %702 = vmatpush.msra.mxu0 %v589
      %703 = vmatmul.f32.gmra.mxu0 %v419
      %v704 = vpop.f32.mrf.mxu0
      %v705 = vadd.f32 %v685, %v704
      %706 = vdwg.mxu0
      %v707 = vld [vmem:[%s5] sm:$0xff]
      %v708 = vld [vmem:[%s5 + $0x8] sm:$0xff]
      %v709 = vld [vmem:[%s5 + $0x10] sm:$0xff]
      %v710 = vld [vmem:[%s5 + $0x18] sm:$0xff]
      %v711 = vld [vmem:[%s5 + $0x20] sm:$0xff]
      %v712 = vld [vmem:[%s5 + $0x28] sm:$0xff]
      %v713 = vld [vmem:[%s5 + $0x30] sm:$0xff]
      %v714 = vld [vmem:[%s5 + $0x38] sm:$0xff]
      %v715 = vld [vmem:[%s6] sm:$0xff]
      %v716 = vld [vmem:[%s6 + $0x8] sm:$0xff]
      %v717 = vld [vmem:[%s6 + $0x10] sm:$0xff]
      %v718 = vld [vmem:[%s6 + $0x18] sm:$0xff]
      %v719 = vld [vmem:[%s6 + $0x20] sm:$0xff]
      %v720 = vld [vmem:[%s6 + $0x28] sm:$0xff]
      %v721 = vld [vmem:[%s6 + $0x30] sm:$0xff]
      %v722 = vld [vmem:[%s6 + $0x38] sm:$0xff]
      %v724 = vrot.slane %v523, 1
      %v725 = vrot.slane %v523, 2
      %v726 = vrot.slane %v523, 3
      %v727 = vrot.slane %v523, 4
      %v728 = vrot.slane %v523, 5
      %v729 = vrot.slane %v523, 6
      %v730 = vrot.slane %v523, 7
      %v732 = vrot.slane %v705, 1
      %v733 = vrot.slane %v705, 2
      %v734 = vrot.slane %v705, 3
      %v735 = vrot.slane %v705, 4
      %v736 = vrot.slane %v705, 5
      %v737 = vrot.slane %v705, 6
      %v738 = vrot.slane %v705, 7
      %v739 = vperm.slane %v523, 0
      %v740 = vperm.slane %v724, 0
      %v741 = vperm.slane %v725, 0
      %v742 = vperm.slane %v726, 0
      %v743 = vperm.slane %v727, 0
      %v744 = vperm.slane %v728, 0
      %v745 = vperm.slane %v729, 0
      %v746 = vperm.slane %v730, 0
      %v755 = vmul.f32 %v739, %v707
      %v756 = vmul.f32 %v740, %v708
      %v757 = vmul.f32 %v741, %v709
      %v758 = vmul.f32 %v742, %v710
      %v759 = vmul.f32 %v743, %v711
      %v760 = vmul.f32 %v744, %v712
      %v761 = vmul.f32 %v745, %v713
      %v762 = vmul.f32 %v746, %v714
      %v763 = vperm.slane %v705, 0
      %v764 = vperm.slane %v732, 0
      %v765 = vperm.slane %v733, 0
      %v766 = vperm.slane %v734, 0
      %v767 = vperm.slane %v735, 0
      %v768 = vperm.slane %v736, 0
      %v769 = vperm.slane %v737, 0
      %v770 = vperm.slane %v738, 0
      %v779 = vmul.f32 %v763, %v715
      %v780 = vmul.f32 %v764, %v716
      %v781 = vmul.f32 %v765, %v717
      %v782 = vmul.f32 %v766, %v718
      %v783 = vmul.f32 %v767, %v719
      %v784 = vmul.f32 %v768, %v720
      %v785 = vmul.f32 %v769, %v721
      %v786 = vmul.f32 %v770, %v722
      %v787 = vsub.f32 %v755, %v779
      %v788 = vsub.f32 %v756, %v780
      %v789 = vsub.f32 %v757, %v781
      %v790 = vsub.f32 %v758, %v782
      %v791 = vsub.f32 %v759, %v783
      %v792 = vsub.f32 %v760, %v784
      %v793 = vsub.f32 %v761, %v785
      %v794 = vsub.f32 %v762, %v786
      %vm795 = vcmask 588800
      %v796 = vsel %vm795, %v787, 0.0
      %v797 = vsel %vm795, %v788, 0.0
      %v798 = vadd.f32 %v796, %v797
      %v799 = vsel %vm795, %v789, 0.0
      %v800 = vadd.f32 %v798, %v799
      %v801 = vsel %vm795, %v790, 0.0
      %v802 = vadd.f32 %v800, %v801
      %v803 = vsel %vm795, %v791, 0.0
      %v804 = vadd.f32 %v802, %v803
      %v805 = vsel %vm795, %v792, 0.0
      %v806 = vadd.f32 %v804, %v805
      %v807 = vsel %vm795, %v793, 0.0
      %v808 = vadd.f32 %v806, %v807
      %v809 = vsel %vm795, %v794, 0.0
      %v810 = vadd.f32 %v808, %v809
      %v811 = vmul.f32 %v739, %v715
      %v812 = vmul.f32 %v740, %v716
      %v813 = vmul.f32 %v741, %v717
      %v814 = vmul.f32 %v742, %v718
      %v815 = vmul.f32 %v743, %v719
      %v816 = vmul.f32 %v744, %v720
      %v817 = vmul.f32 %v745, %v721
      %v818 = vmul.f32 %v746, %v722
      %v819 = vmul.f32 %v763, %v707
      %v820 = vmul.f32 %v764, %v708
      %v821 = vmul.f32 %v765, %v709
      %v822 = vmul.f32 %v766, %v710
      %v823 = vmul.f32 %v767, %v711
      %v824 = vmul.f32 %v768, %v712
      %v825 = vmul.f32 %v769, %v713
      %v826 = vmul.f32 %v770, %v714
      %v827 = vadd.f32 %v811, %v819
      %v828 = vadd.f32 %v812, %v820
      %v829 = vadd.f32 %v813, %v821
      %v830 = vadd.f32 %v814, %v822
      %v831 = vadd.f32 %v815, %v823
      %v832 = vadd.f32 %v816, %v824
      %v833 = vadd.f32 %v817, %v825
      %v834 = vadd.f32 %v818, %v826
      %v835 = vsel %vm795, %v827, 0.0
      %v836 = vsel %vm795, %v828, 0.0
      %v837 = vadd.f32 %v835, %v836
      %v838 = vsel %vm795, %v829, 0.0
      %v839 = vadd.f32 %v837, %v838
      %v840 = vsel %vm795, %v830, 0.0
      %v841 = vadd.f32 %v839, %v840
      %v842 = vsel %vm795, %v831, 0.0
      %v843 = vadd.f32 %v841, %v842
      %v844 = vsel %vm795, %v832, 0.0
      %v845 = vadd.f32 %v843, %v844
      %v846 = vsel %vm795, %v833, 0.0
      %v847 = vadd.f32 %v845, %v846
      %v848 = vsel %vm795, %v834, 0.0
      %v849 = vadd.f32 %v847, %v848
      %v850 = vld [vmem:[%s3] sm:$0xff]
      %v851 = vld [vmem:[%s3 + $0x8] sm:$0xff]
      %v852 = vld [vmem:[%s3 + $0x10] sm:$0xff]
      %v853 = vld [vmem:[%s3 + $0x18] sm:$0xff]
      %v854 = vld [vmem:[%s3 + $0x20] sm:$0xff]
      %v855 = vld [vmem:[%s3 + $0x28] sm:$0xff]
      %v856 = vld [vmem:[%s3 + $0x30] sm:$0xff]
      %v857 = vld [vmem:[%s3 + $0x38] sm:$0xff]
      %v858 = vld [vmem:[%s3 + $0x40] sm:$0xff]
      %v859 = vld [vmem:[%s3 + $0x48] sm:$0xff]
      %v860 = vld [vmem:[%s3 + $0x50] sm:$0xff]
      %v861 = vld [vmem:[%s3 + $0x58] sm:$0xff]
      %v862 = vld [vmem:[%s3 + $0x60] sm:$0xff]
      %v863 = vld [vmem:[%s3 + $0x68] sm:$0xff]
      %v864 = vld [vmem:[%s3 + $0x70] sm:$0xff]
      %v865 = vld [vmem:[%s3 + $0x78] sm:$0xff]
      %v866 = vld [vmem:[%s3 + $0x80] sm:$0xff]
      %v867 = vld [vmem:[%s3 + $0x88] sm:$0xff]
      %v868 = vld [vmem:[%s3 + $0x90] sm:$0xff]
      %v869 = vld [vmem:[%s3 + $0x98] sm:$0xff]
      %v870 = vld [vmem:[%s3 + $0xa0] sm:$0xff]
      %v871 = vld [vmem:[%s3 + $0xa8] sm:$0xff]
      %v872 = vld [vmem:[%s3 + $0xb0] sm:$0xff]
      %v873 = vld [vmem:[%s3 + $0xb8] sm:$0xff]
      %v874 = vld [vmem:[%s3 + $0xc0] sm:$0xff]
      %v875 = vld [vmem:[%s3 + $0xc8] sm:$0xff]
      %v876 = vld [vmem:[%s3 + $0xd0] sm:$0xff]
      %v877 = vld [vmem:[%s3 + $0xd8] sm:$0xff]
      %v878 = vld [vmem:[%s3 + $0xe0] sm:$0xff]
      %v879 = vld [vmem:[%s3 + $0xe8] sm:$0xff]
      %v880 = vld [vmem:[%s3 + $0xf0] sm:$0xff]
      %v881 = vld [vmem:[%s3 + $0xf8] sm:$0xff]
      %v882 = vld [vmem:[%s3 + $0x100] sm:$0xff]
      %v883 = vld [vmem:[%s3 + $0x108] sm:$0xff]
      %v884 = vld [vmem:[%s3 + $0x110] sm:$0xff]
      %v885 = vld [vmem:[%s3 + $0x118] sm:$0xff]
      %v886 = vld [vmem:[%s3 + $0x120] sm:$0xff]
      %v887 = vld [vmem:[%s3 + $0x128] sm:$0xff]
      %v888 = vld [vmem:[%s3 + $0x130] sm:$0xff]
      %v889 = vld [vmem:[%s3 + $0x138] sm:$0xff]
      %v890 = vld [vmem:[%s3 + $0x140] sm:$0xff]
      %v891 = vld [vmem:[%s3 + $0x148] sm:$0xff]
      %v892 = vld [vmem:[%s3 + $0x150] sm:$0xff]
      %v893 = vld [vmem:[%s3 + $0x158] sm:$0xff]
      %v894 = vld [vmem:[%s3 + $0x160] sm:$0xff]
      %v896 = vsel %vm795, %v810, 0
      %898 = vmatpush.msra.mxu0 0.0
      %899 = vmatpush.msra.mxu0 0.0
      %900 = vmatpush.msra.mxu0 0.0
      %901 = vmatpush.msra.mxu0 0.0
      %902 = vmatpush.msra.mxu0 0.0
      %903 = vmatpush.msra.mxu0 0.0
      %904 = vmatpush.msra.mxu0 0.0
      %905 = vmatpush.msra.mxu0 %v890
      %906 = vmatpush.msra.mxu0 %v885
      %907 = vmatpush.msra.mxu0 %v880
      %908 = vmatpush.msra.mxu0 %v875
      %909 = vmatpush.msra.mxu0 %v870
      %910 = vmatpush.msra.mxu0 %v865
      %911 = vmatpush.msra.mxu0 %v860
      %912 = vmatpush.msra.mxu0 %v855
      %913 = vmatpush.msra.mxu0 %v850
      %914 = vmatmul.f32.gmra.mxu0 %v896
      %v915 = vpop.f32.mrf.mxu0
      %v916 = vadd.f32 0.0, %v915
      %917 = vdwg.mxu0
      %918 = vmatpush.msra.mxu0 0.0
      %919 = vmatpush.msra.mxu0 0.0
      %920 = vmatpush.msra.mxu0 0.0
      %921 = vmatpush.msra.mxu0 0.0
      %922 = vmatpush.msra.mxu0 0.0
      %923 = vmatpush.msra.mxu0 0.0
      %924 = vmatpush.msra.mxu0 0.0
      %925 = vmatpush.msra.mxu0 %v891
      %926 = vmatpush.msra.mxu0 %v886
      %927 = vmatpush.msra.mxu0 %v881
      %928 = vmatpush.msra.mxu0 %v876
      %929 = vmatpush.msra.mxu0 %v871
      %930 = vmatpush.msra.mxu0 %v866
      %931 = vmatpush.msra.mxu0 %v861
      %932 = vmatpush.msra.mxu0 %v856
      %933 = vmatpush.msra.mxu0 %v851
      %934 = vmatmul.f32.gmra.mxu0 %v896
      %v935 = vpop.f32.mrf.mxu0
      %v936 = vadd.f32 0.0, %v935
      %937 = vdwg.mxu0
      %938 = vmatpush.msra.mxu0 0.0
      %939 = vmatpush.msra.mxu0 0.0
      %940 = vmatpush.msra.mxu0 0.0
      %941 = vmatpush.msra.mxu0 0.0
      %942 = vmatpush.msra.mxu0 0.0
      %943 = vmatpush.msra.mxu0 0.0
      %944 = vmatpush.msra.mxu0 0.0
      %945 = vmatpush.msra.mxu0 %v892
      %946 = vmatpush.msra.mxu0 %v887
      %947 = vmatpush.msra.mxu0 %v882
      %948 = vmatpush.msra.mxu0 %v877
      %949 = vmatpush.msra.mxu0 %v872
      %950 = vmatpush.msra.mxu0 %v867
      %951 = vmatpush.msra.mxu0 %v862
      %952 = vmatpush.msra.mxu0 %v857
      %953 = vmatpush.msra.mxu0 %v852
      %954 = vmatmul.f32.gmra.mxu0 %v896
      %v955 = vpop.f32.mrf.mxu0
      %v956 = vadd.f32 0.0, %v955
      %957 = vdwg.mxu0
      %958 = vmatpush.msra.mxu0 0.0
      %959 = vmatpush.msra.mxu0 0.0
      %960 = vmatpush.msra.mxu0 0.0
      %961 = vmatpush.msra.mxu0 0.0
      %962 = vmatpush.msra.mxu0 0.0
      %963 = vmatpush.msra.mxu0 0.0
      %964 = vmatpush.msra.mxu0 0.0
      %965 = vmatpush.msra.mxu0 %v893
      %966 = vmatpush.msra.mxu0 %v888
      %967 = vmatpush.msra.mxu0 %v883
      %968 = vmatpush.msra.mxu0 %v878
      %969 = vmatpush.msra.mxu0 %v873
      %970 = vmatpush.msra.mxu0 %v868
      %971 = vmatpush.msra.mxu0 %v863
      %972 = vmatpush.msra.mxu0 %v858
      %973 = vmatpush.msra.mxu0 %v853
      %974 = vmatmul.f32.gmra.mxu0 %v896
      %v975 = vpop.f32.mrf.mxu0
      %v976 = vadd.f32 0.0, %v975
      %977 = vdwg.mxu0
      %978 = vmatpush.msra.mxu0 0.0
      %979 = vmatpush.msra.mxu0 0.0
      %980 = vmatpush.msra.mxu0 0.0
      %981 = vmatpush.msra.mxu0 0.0
      %982 = vmatpush.msra.mxu0 0.0
      %983 = vmatpush.msra.mxu0 0.0
      %984 = vmatpush.msra.mxu0 0.0
      %985 = vmatpush.msra.mxu0 %v894
      %986 = vmatpush.msra.mxu0 %v889
      %987 = vmatpush.msra.mxu0 %v884
      %988 = vmatpush.msra.mxu0 %v879
      %989 = vmatpush.msra.mxu0 %v874
      %990 = vmatpush.msra.mxu0 %v869
      %991 = vmatpush.msra.mxu0 %v864
      %992 = vmatpush.msra.mxu0 %v859
      %993 = vmatpush.msra.mxu0 %v854
      %994 = vmatmul.f32.gmra.mxu0 %v896
      %v995 = vpop.f32.mrf.mxu0
      %v996 = vadd.f32 0.0, %v995
      %997 = vdwg.mxu0
      %v998 = vld [vmem:[%s4] sm:$0xff]
      %v999 = vld [vmem:[%s4 + $0x8] sm:$0xff]
      %v1000 = vld [vmem:[%s4 + $0x10] sm:$0xff]
      %v1001 = vld [vmem:[%s4 + $0x18] sm:$0xff]
      %v1002 = vld [vmem:[%s4 + $0x20] sm:$0xff]
      %v1003 = vld [vmem:[%s4 + $0x28] sm:$0xff]
      %v1004 = vld [vmem:[%s4 + $0x30] sm:$0xff]
      %v1005 = vld [vmem:[%s4 + $0x38] sm:$0xff]
      %v1006 = vld [vmem:[%s4 + $0x40] sm:$0xff]
      %v1007 = vld [vmem:[%s4 + $0x48] sm:$0xff]
      %v1008 = vld [vmem:[%s4 + $0x50] sm:$0xff]
      %v1009 = vld [vmem:[%s4 + $0x58] sm:$0xff]
      %v1010 = vld [vmem:[%s4 + $0x60] sm:$0xff]
      %v1011 = vld [vmem:[%s4 + $0x68] sm:$0xff]
      %v1012 = vld [vmem:[%s4 + $0x70] sm:$0xff]
      %v1013 = vld [vmem:[%s4 + $0x78] sm:$0xff]
      %v1014 = vld [vmem:[%s4 + $0x80] sm:$0xff]
      %v1015 = vld [vmem:[%s4 + $0x88] sm:$0xff]
      %v1016 = vld [vmem:[%s4 + $0x90] sm:$0xff]
      %v1017 = vld [vmem:[%s4 + $0x98] sm:$0xff]
      %v1018 = vld [vmem:[%s4 + $0xa0] sm:$0xff]
      %v1019 = vld [vmem:[%s4 + $0xa8] sm:$0xff]
      %v1020 = vld [vmem:[%s4 + $0xb0] sm:$0xff]
      %v1021 = vld [vmem:[%s4 + $0xb8] sm:$0xff]
      %v1022 = vld [vmem:[%s4 + $0xc0] sm:$0xff]
      %v1023 = vld [vmem:[%s4 + $0xc8] sm:$0xff]
      %v1024 = vld [vmem:[%s4 + $0xd0] sm:$0xff]
      %v1025 = vld [vmem:[%s4 + $0xd8] sm:$0xff]
      %v1026 = vld [vmem:[%s4 + $0xe0] sm:$0xff]
      %v1027 = vld [vmem:[%s4 + $0xe8] sm:$0xff]
      %v1028 = vld [vmem:[%s4 + $0xf0] sm:$0xff]
      %v1029 = vld [vmem:[%s4 + $0xf8] sm:$0xff]
      %v1030 = vld [vmem:[%s4 + $0x100] sm:$0xff]
      %v1031 = vld [vmem:[%s4 + $0x108] sm:$0xff]
      %v1032 = vld [vmem:[%s4 + $0x110] sm:$0xff]
      %v1033 = vld [vmem:[%s4 + $0x118] sm:$0xff]
      %v1034 = vld [vmem:[%s4 + $0x120] sm:$0xff]
      %v1035 = vld [vmem:[%s4 + $0x128] sm:$0xff]
      %v1036 = vld [vmem:[%s4 + $0x130] sm:$0xff]
      %v1037 = vld [vmem:[%s4 + $0x138] sm:$0xff]
      %v1038 = vld [vmem:[%s4 + $0x140] sm:$0xff]
      %v1039 = vld [vmem:[%s4 + $0x148] sm:$0xff]
      %v1040 = vld [vmem:[%s4 + $0x150] sm:$0xff]
      %v1041 = vld [vmem:[%s4 + $0x158] sm:$0xff]
      %v1042 = vld [vmem:[%s4 + $0x160] sm:$0xff]
      %v1044 = vsel %vm795, %v849, 0
      %1046 = vmatpush.msra.mxu0 0.0
      %1047 = vmatpush.msra.mxu0 0.0
      %1048 = vmatpush.msra.mxu0 0.0
      %1049 = vmatpush.msra.mxu0 0.0
      %1050 = vmatpush.msra.mxu0 0.0
      %1051 = vmatpush.msra.mxu0 0.0
      %1052 = vmatpush.msra.mxu0 0.0
      %1053 = vmatpush.msra.mxu0 %v1038
      %1054 = vmatpush.msra.mxu0 %v1033
      %1055 = vmatpush.msra.mxu0 %v1028
      %1056 = vmatpush.msra.mxu0 %v1023
      %1057 = vmatpush.msra.mxu0 %v1018
      %1058 = vmatpush.msra.mxu0 %v1013
      %1059 = vmatpush.msra.mxu0 %v1008
      %1060 = vmatpush.msra.mxu0 %v1003
      %1061 = vmatpush.msra.mxu0 %v998
      %1062 = vmatmul.f32.gmra.mxu0 %v1044
      %v1063 = vpop.f32.mrf.mxu0
      %v1064 = vadd.f32 0.0, %v1063
      %1065 = vdwg.mxu0
      %1066 = vmatpush.msra.mxu0 0.0
      %1067 = vmatpush.msra.mxu0 0.0
      %1068 = vmatpush.msra.mxu0 0.0
      %1069 = vmatpush.msra.mxu0 0.0
      %1070 = vmatpush.msra.mxu0 0.0
      %1071 = vmatpush.msra.mxu0 0.0
      %1072 = vmatpush.msra.mxu0 0.0
      %1073 = vmatpush.msra.mxu0 %v1039
      %1074 = vmatpush.msra.mxu0 %v1034
      %1075 = vmatpush.msra.mxu0 %v1029
      %1076 = vmatpush.msra.mxu0 %v1024
      %1077 = vmatpush.msra.mxu0 %v1019
      %1078 = vmatpush.msra.mxu0 %v1014
      %1079 = vmatpush.msra.mxu0 %v1009
      %1080 = vmatpush.msra.mxu0 %v1004
      %1081 = vmatpush.msra.mxu0 %v999
      %1082 = vmatmul.f32.gmra.mxu0 %v1044
      %v1083 = vpop.f32.mrf.mxu0
      %v1084 = vadd.f32 0.0, %v1083
      %1085 = vdwg.mxu0
      %1086 = vmatpush.msra.mxu0 0.0
      %1087 = vmatpush.msra.mxu0 0.0
      %1088 = vmatpush.msra.mxu0 0.0
      %1089 = vmatpush.msra.mxu0 0.0
      %1090 = vmatpush.msra.mxu0 0.0
      %1091 = vmatpush.msra.mxu0 0.0
      %1092 = vmatpush.msra.mxu0 0.0
      %1093 = vmatpush.msra.mxu0 %v1040
      %1094 = vmatpush.msra.mxu0 %v1035
      %1095 = vmatpush.msra.mxu0 %v1030
      %1096 = vmatpush.msra.mxu0 %v1025
      %1097 = vmatpush.msra.mxu0 %v1020
      %1098 = vmatpush.msra.mxu0 %v1015
      %1099 = vmatpush.msra.mxu0 %v1010
      %1100 = vmatpush.msra.mxu0 %v1005
      %1101 = vmatpush.msra.mxu0 %v1000
      %1102 = vmatmul.f32.gmra.mxu0 %v1044
      %v1103 = vpop.f32.mrf.mxu0
      %v1104 = vadd.f32 0.0, %v1103
      %1105 = vdwg.mxu0
      %1106 = vmatpush.msra.mxu0 0.0
      %1107 = vmatpush.msra.mxu0 0.0
      %1108 = vmatpush.msra.mxu0 0.0
      %1109 = vmatpush.msra.mxu0 0.0
      %1110 = vmatpush.msra.mxu0 0.0
      %1111 = vmatpush.msra.mxu0 0.0
      %1112 = vmatpush.msra.mxu0 0.0
      %1113 = vmatpush.msra.mxu0 %v1041
      %1114 = vmatpush.msra.mxu0 %v1036
      %1115 = vmatpush.msra.mxu0 %v1031
      %1116 = vmatpush.msra.mxu0 %v1026
      %1117 = vmatpush.msra.mxu0 %v1021
      %1118 = vmatpush.msra.mxu0 %v1016
      %1119 = vmatpush.msra.mxu0 %v1011
      %1120 = vmatpush.msra.mxu0 %v1006
      %1121 = vmatpush.msra.mxu0 %v1001
      %1122 = vmatmul.f32.gmra.mxu0 %v1044
      %v1123 = vpop.f32.mrf.mxu0
      %v1124 = vadd.f32 0.0, %v1123
      %1125 = vdwg.mxu0
      %1126 = vmatpush.msra.mxu0 0.0
      %1127 = vmatpush.msra.mxu0 0.0
      %1128 = vmatpush.msra.mxu0 0.0
      %1129 = vmatpush.msra.mxu0 0.0
      %1130 = vmatpush.msra.mxu0 0.0
      %1131 = vmatpush.msra.mxu0 0.0
      %1132 = vmatpush.msra.mxu0 0.0
      %1133 = vmatpush.msra.mxu0 %v1042
      %1134 = vmatpush.msra.mxu0 %v1037
      %1135 = vmatpush.msra.mxu0 %v1032
      %1136 = vmatpush.msra.mxu0 %v1027
      %1137 = vmatpush.msra.mxu0 %v1022
      %1138 = vmatpush.msra.mxu0 %v1017
      %1139 = vmatpush.msra.mxu0 %v1012
      %1140 = vmatpush.msra.mxu0 %v1007
      %1141 = vmatpush.msra.mxu0 %v1002
      %1142 = vmatmul.f32.gmra.mxu0 %v1044
      %v1143 = vpop.f32.mrf.mxu0
      %v1144 = vadd.f32 0.0, %v1143
      %1145 = vdwg.mxu0
      %v1146 = vsub.f32 %v916, %v1064
      %v1147 = vsub.f32 %v936, %v1084
      %v1148 = vsub.f32 %v956, %v1104
      %v1149 = vsub.f32 %v976, %v1124
      %v1150 = vsub.f32 %v996, %v1144
      %v1151 = vld [vmem:[%s7] sm:$0xff]
      %vm1152 = vcmask 64512
      %v1154 = vsel %vm1152, %v1151, 0
      %1156 = vmatpush.msra.mxu0 0.0
      %1157 = vmatpush.msra.mxu0 0.0
      %1158 = vmatpush.msra.mxu0 0.0
      %1159 = vmatpush.msra.mxu0 0.0
      %1160 = vmatpush.msra.mxu0 0.0
      %1161 = vmatpush.msra.mxu0 0.0
      %1162 = vmatpush.msra.mxu0 0.0
      %1163 = vmatpush.msra.mxu0 0.0
      %1164 = vmatpush.msra.mxu0 0.0
      %1165 = vmatpush.msra.mxu0 0.0
      %1166 = vmatpush.msra.mxu0 0.0
      %1167 = vmatpush.msra.mxu0 0.0
      %1168 = vmatpush.msra.mxu0 0.0
      %1169 = vmatpush.msra.mxu0 0.0
      %1170 = vmatpush.msra.mxu0 0.0
      %1171 = vmatpush.msra.mxu0 %v333
      %1172 = vmatmul.f32.gmra.mxu0 %v1154
      %v1173 = vpop.f32.mrf.mxu0
      %v1174 = vadd.f32 0.0, %v1173
      %1175 = vdwg.mxu0
      %1176 = vmatpush.msra.mxu0 0.0
      %1177 = vmatpush.msra.mxu0 0.0
      %1178 = vmatpush.msra.mxu0 0.0
      %1179 = vmatpush.msra.mxu0 0.0
      %1180 = vmatpush.msra.mxu0 0.0
      %1181 = vmatpush.msra.mxu0 0.0
      %1182 = vmatpush.msra.mxu0 0.0
      %1183 = vmatpush.msra.mxu0 0.0
      %1184 = vmatpush.msra.mxu0 0.0
      %1185 = vmatpush.msra.mxu0 0.0
      %1186 = vmatpush.msra.mxu0 0.0
      %1187 = vmatpush.msra.mxu0 0.0
      %1188 = vmatpush.msra.mxu0 0.0
      %1189 = vmatpush.msra.mxu0 0.0
      %1190 = vmatpush.msra.mxu0 0.0
      %1191 = vmatpush.msra.mxu0 %v334
      %1192 = vmatmul.f32.gmra.mxu0 %v1154
      %v1193 = vpop.f32.mrf.mxu0
      %v1194 = vadd.f32 0.0, %v1193
      %1195 = vdwg.mxu0
      %1196 = vmatpush.msra.mxu0 0.0
      %1197 = vmatpush.msra.mxu0 0.0
      %1198 = vmatpush.msra.mxu0 0.0
      %1199 = vmatpush.msra.mxu0 0.0
      %1200 = vmatpush.msra.mxu0 0.0
      %1201 = vmatpush.msra.mxu0 0.0
      %1202 = vmatpush.msra.mxu0 0.0
      %1203 = vmatpush.msra.mxu0 0.0
      %1204 = vmatpush.msra.mxu0 0.0
      %1205 = vmatpush.msra.mxu0 0.0
      %1206 = vmatpush.msra.mxu0 0.0
      %1207 = vmatpush.msra.mxu0 0.0
      %1208 = vmatpush.msra.mxu0 0.0
      %1209 = vmatpush.msra.mxu0 0.0
      %1210 = vmatpush.msra.mxu0 0.0
      %1211 = vmatpush.msra.mxu0 %v335
      %1212 = vmatmul.f32.gmra.mxu0 %v1154
      %v1213 = vpop.f32.mrf.mxu0
      %v1214 = vadd.f32 0.0, %v1213
      %1215 = vdwg.mxu0
      %1216 = vmatpush.msra.mxu0 0.0
      %1217 = vmatpush.msra.mxu0 0.0
      %1218 = vmatpush.msra.mxu0 0.0
      %1219 = vmatpush.msra.mxu0 0.0
      %1220 = vmatpush.msra.mxu0 0.0
      %1221 = vmatpush.msra.mxu0 0.0
      %1222 = vmatpush.msra.mxu0 0.0
      %1223 = vmatpush.msra.mxu0 0.0
      %1224 = vmatpush.msra.mxu0 0.0
      %1225 = vmatpush.msra.mxu0 0.0
      %1226 = vmatpush.msra.mxu0 0.0
      %1227 = vmatpush.msra.mxu0 0.0
      %1228 = vmatpush.msra.mxu0 0.0
      %1229 = vmatpush.msra.mxu0 0.0
      %1230 = vmatpush.msra.mxu0 0.0
      %1231 = vmatpush.msra.mxu0 %v336
      %1232 = vmatmul.f32.gmra.mxu0 %v1154
      %v1233 = vpop.f32.mrf.mxu0
      %v1234 = vadd.f32 0.0, %v1233
      %1235 = vdwg.mxu0
      %1236 = vmatpush.msra.mxu0 0.0
      %1237 = vmatpush.msra.mxu0 0.0
      %1238 = vmatpush.msra.mxu0 0.0
      %1239 = vmatpush.msra.mxu0 0.0
      %1240 = vmatpush.msra.mxu0 0.0
      %1241 = vmatpush.msra.mxu0 0.0
      %1242 = vmatpush.msra.mxu0 0.0
      %1243 = vmatpush.msra.mxu0 0.0
      %1244 = vmatpush.msra.mxu0 0.0
      %1245 = vmatpush.msra.mxu0 0.0
      %1246 = vmatpush.msra.mxu0 0.0
      %1247 = vmatpush.msra.mxu0 0.0
      %1248 = vmatpush.msra.mxu0 0.0
      %1249 = vmatpush.msra.mxu0 0.0
      %1250 = vmatpush.msra.mxu0 0.0
      %1251 = vmatpush.msra.mxu0 %v337
      %1252 = vmatmul.f32.gmra.mxu0 %v1154
      %v1253 = vpop.f32.mrf.mxu0
      %v1254 = vadd.f32 0.0, %v1253
      %1255 = vdwg.mxu0
      %v1256 = vadd.f32 %v1146, %v1174
      %v1257 = vadd.f32 %v1147, %v1194
      %v1258 = vadd.f32 %v1148, %v1214
      %v1259 = vadd.f32 %v1149, %v1234
      %v1260 = vadd.f32 %v1150, %v1254
      %v1261 = vld [vmem:[%s8] sm:$0xff]
      %1263 = vset.pattern.permute.xlu0 0
      %1264 = vperm.xlu0 %1263, %v1261
      %v1265 = vpop.permute.xlu0 %1264
      %v1267 = vadd.f32 %v1256, %v1265
      %v1268 = vadd.f32 %v1257, %v1265
      %v1269 = vadd.f32 %v1258, %v1265
      %v1270 = vadd.f32 %v1259, %v1265
      %v1271 = vadd.f32 %v1260, %v1265
      %v1272 = vmul.f32 %v1267, 0.5
      %v1273 = vmul.f32 %v1268, 0.5
      %v1274 = vmul.f32 %v1269, 0.5
      %v1275 = vmul.f32 %v1270, 0.5
      %v1276 = vmul.f32 %v1271, 0.5
      %v1277 = vmul.f32 %v1267, 0.70710677
      %v1278 = vmul.f32 %v1268, 0.70710677
      %v1279 = vmul.f32 %v1269, 0.70710677
      %v1280 = vmul.f32 %v1270, 0.70710677
      %v1281 = vmul.f32 %v1271, 0.70710677
      %v1282 = vmul.f32 %v1277, %v1277
      %v1283 = vmin.f32 16.0, %v1282
      %v1284 = vmul.f32 %v1283, 2.1237322e-06
      %v1285 = vadd.f32 %v1284, 0.00028619796
      %v1286 = vmul.f32 %v1283, %v1285
      %v1287 = vadd.f32 %v1286, 0.0036580483
      %v1288 = vmul.f32 %v1283, %v1287
      %v1289 = vadd.f32 %v1288, 0.05243302
      %v1290 = vmul.f32 %v1283, %v1289
      %v1291 = vadd.f32 %v1290, 0.18741608
      %v1292 = vmul.f32 %v1283, %v1291
      %v1293 = vadd.f32 %v1292, 1.1283791
      %v1294 = vmul.f32 %v1277, %v1293
      %v1295 = vmul.f32 %v1283, 3.8918573e-05
      %v1296 = vadd.f32 %v1295, 0.001143296
      %v1297 = vmul.f32 %v1283, %v1296
      %v1298 = vadd.f32 %v1297, 0.014752088
      %v1299 = vmul.f32 %v1283, %v1298
      %v1300 = vadd.f32 %v1299, 0.112945676
      %v1301 = vmul.f32 %v1283, %v1300
      %v1302 = vadd.f32 %v1301, 0.4994258
      %v1303 = vmul.f32 %v1283, %v1302
      %v1304 = vadd.f32 %v1303, 1.0
      %v1305 = vrcp.pop %v1304
      %v1306 = vmul.f32 %v1304, %v1305
      %v1307 = vsub.f32 1.0, %v1306
      %v1308 = vmul.f32 %v1305, %v1307
      %v1309 = vadd.f32 %v1305, %v1308
      %vm1310 = vweird.f32 %v1304
      %vm1311 = vweird.f32 %v1305
      %vm1312 = vmor %vm1310, %vm1311
      %v1313 = vsel %vm1312, %v1305, %v1309
      %v1314 = vand.u32 2147483647, %v1304
      %vm1315 = vcmp.eq.f32.partialorder %v1314, 8.507059e+37
      %v1316 = vand.u32 %v1304, 2147483648
      %v1317 = vor.u32 1.1754944e-38, %v1316
      %v1318 = vsel %vm1315, %v1317, %v1313
      %v1319 = vmul.f32 %v1294, %v1318
      %v1320 = vmin.f32 %v1319, 1.0
      %v1321 = vmax.f32 %v1320, -1.0
      %v1322 = vmul.f32 %v1278, %v1278
      %v1323 = vmin.f32 16.0, %v1322
      %v1324 = vmul.f32 %v1323, 2.1237322e-06
      %v1325 = vadd.f32 %v1324, 0.00028619796
      %v1326 = vmul.f32 %v1323, %v1325
      %v1327 = vadd.f32 %v1326, 0.0036580483
      %v1328 = vmul.f32 %v1323, %v1327
      %v1329 = vadd.f32 %v1328, 0.05243302
      %v1330 = vmul.f32 %v1323, %v1329
      %v1331 = vadd.f32 %v1330, 0.18741608
      %v1332 = vmul.f32 %v1323, %v1331
      %v1333 = vadd.f32 %v1332, 1.1283791
      %v1334 = vmul.f32 %v1278, %v1333
      %v1335 = vmul.f32 %v1323, 3.8918573e-05
      %v1336 = vadd.f32 %v1335, 0.001143296
      %v1337 = vmul.f32 %v1323, %v1336
      %v1338 = vadd.f32 %v1337, 0.014752088
      %v1339 = vmul.f32 %v1323, %v1338
      %v1340 = vadd.f32 %v1339, 0.112945676
      %v1341 = vmul.f32 %v1323, %v1340
      %v1342 = vadd.f32 %v1341, 0.4994258
      %v1343 = vmul.f32 %v1323, %v1342
      %v1344 = vadd.f32 %v1343, 1.0
      %v1345 = vrcp.pop %v1344
      %v1346 = vmul.f32 %v1344, %v1345
      %v1347 = vsub.f32 1.0, %v1346
      %v1348 = vmul.f32 %v1345, %v1347
      %v1349 = vadd.f32 %v1345, %v1348
      %vm1350 = vweird.f32 %v1344
      %vm1351 = vweird.f32 %v1345
      %vm1352 = vmor %vm1350, %vm1351
      %v1353 = vsel %vm1352, %v1345, %v1349
      %v1354 = vand.u32 2147483647, %v1344
      %vm1355 = vcmp.eq.f32.partialorder %v1354, 8.507059e+37
      %v1356 = vand.u32 %v1344, 2147483648
      %v1357 = vor.u32 1.1754944e-38, %v1356
      %v1358 = vsel %vm1355, %v1357, %v1353
      %v1359 = vmul.f32 %v1334, %v1358
      %v1360 = vmin.f32 %v1359, 1.0
      %v1361 = vmax.f32 %v1360, -1.0
      %v1362 = vmul.f32 %v1279, %v1279
      %v1363 = vmin.f32 16.0, %v1362
      %v1364 = vmul.f32 %v1363, 2.1237322e-06
      %v1365 = vadd.f32 %v1364, 0.00028619796
      %v1366 = vmul.f32 %v1363, %v1365
      %v1367 = vadd.f32 %v1366, 0.0036580483
      %v1368 = vmul.f32 %v1363, %v1367
      %v1369 = vadd.f32 %v1368, 0.05243302
      %v1370 = vmul.f32 %v1363, %v1369
      %v1371 = vadd.f32 %v1370, 0.18741608
      %v1372 = vmul.f32 %v1363, %v1371
      %v1373 = vadd.f32 %v1372, 1.1283791
      %v1374 = vmul.f32 %v1279, %v1373
      %v1375 = vmul.f32 %v1363, 3.8918573e-05
      %v1376 = vadd.f32 %v1375, 0.001143296
      %v1377 = vmul.f32 %v1363, %v1376
      %v1378 = vadd.f32 %v1377, 0.014752088
      %v1379 = vmul.f32 %v1363, %v1378
      %v1380 = vadd.f32 %v1379, 0.112945676
      %v1381 = vmul.f32 %v1363, %v1380
      %v1382 = vadd.f32 %v1381, 0.4994258
      %v1383 = vmul.f32 %v1363, %v1382
      %v1384 = vadd.f32 %v1383, 1.0
      %v1385 = vrcp.pop %v1384
      %v1386 = vmul.f32 %v1384, %v1385
      %v1387 = vsub.f32 1.0, %v1386
      %v1388 = vmul.f32 %v1385, %v1387
      %v1389 = vadd.f32 %v1385, %v1388
      %vm1390 = vweird.f32 %v1384
      %vm1391 = vweird.f32 %v1385
      %vm1392 = vmor %vm1390, %vm1391
      %v1393 = vsel %vm1392, %v1385, %v1389
      %v1394 = vand.u32 2147483647, %v1384
      %vm1395 = vcmp.eq.f32.partialorder %v1394, 8.507059e+37
      %v1396 = vand.u32 %v1384, 2147483648
      %v1397 = vor.u32 1.1754944e-38, %v1396
      %v1398 = vsel %vm1395, %v1397, %v1393
      %v1399 = vmul.f32 %v1374, %v1398
      %v1400 = vmin.f32 %v1399, 1.0
      %v1401 = vmax.f32 %v1400, -1.0
      %v1402 = vmul.f32 %v1280, %v1280
      %v1403 = vmin.f32 16.0, %v1402
      %v1404 = vmul.f32 %v1403, 2.1237322e-06
      %v1405 = vadd.f32 %v1404, 0.00028619796
      %v1406 = vmul.f32 %v1403, %v1405
      %v1407 = vadd.f32 %v1406, 0.0036580483
      %v1408 = vmul.f32 %v1403, %v1407
      %v1409 = vadd.f32 %v1408, 0.05243302
      %v1410 = vmul.f32 %v1403, %v1409
      %v1411 = vadd.f32 %v1410, 0.18741608
      %v1412 = vmul.f32 %v1403, %v1411
      %v1413 = vadd.f32 %v1412, 1.1283791
      %v1414 = vmul.f32 %v1280, %v1413
      %v1415 = vmul.f32 %v1403, 3.8918573e-05
      %v1416 = vadd.f32 %v1415, 0.001143296
      %v1417 = vmul.f32 %v1403, %v1416
      %v1418 = vadd.f32 %v1417, 0.014752088
      %v1419 = vmul.f32 %v1403, %v1418
      %v1420 = vadd.f32 %v1419, 0.112945676
      %v1421 = vmul.f32 %v1403, %v1420
      %v1422 = vadd.f32 %v1421, 0.4994258
      %v1423 = vmul.f32 %v1403, %v1422
      %v1424 = vadd.f32 %v1423, 1.0
      %v1425 = vrcp.pop %v1424
      %v1426 = vmul.f32 %v1424, %v1425
      %v1427 = vsub.f32 1.0, %v1426
      %v1428 = vmul.f32 %v1425, %v1427
      %v1429 = vadd.f32 %v1425, %v1428
      %vm1430 = vweird.f32 %v1424
      %vm1431 = vweird.f32 %v1425
      %vm1432 = vmor %vm1430, %vm1431
      %v1433 = vsel %vm1432, %v1425, %v1429
      %v1434 = vand.u32 2147483647, %v1424
      %vm1435 = vcmp.eq.f32.partialorder %v1434, 8.507059e+37
      %v1436 = vand.u32 %v1424, 2147483648
      %v1437 = vor.u32 1.1754944e-38, %v1436
      %v1438 = vsel %vm1435, %v1437, %v1433
      %v1439 = vmul.f32 %v1414, %v1438
      %v1440 = vmin.f32 %v1439, 1.0
      %v1441 = vmax.f32 %v1440, -1.0
      %v1442 = vmul.f32 %v1281, %v1281
      %v1443 = vmin.f32 16.0, %v1442
      %v1444 = vmul.f32 %v1443, 2.1237322e-06
      %v1445 = vadd.f32 %v1444, 0.00028619796
      %v1446 = vmul.f32 %v1443, %v1445
      %v1447 = vadd.f32 %v1446, 0.0036580483
      %v1448 = vmul.f32 %v1443, %v1447
      %v1449 = vadd.f32 %v1448, 0.05243302
      %v1450 = vmul.f32 %v1443, %v1449
      %v1451 = vadd.f32 %v1450, 0.18741608
      %v1452 = vmul.f32 %v1443, %v1451
      %v1453 = vadd.f32 %v1452, 1.1283791
      %v1454 = vmul.f32 %v1281, %v1453
      %v1455 = vmul.f32 %v1443, 3.8918573e-05
      %v1456 = vadd.f32 %v1455, 0.001143296
      %v1457 = vmul.f32 %v1443, %v1456
      %v1458 = vadd.f32 %v1457, 0.014752088
      %v1459 = vmul.f32 %v1443, %v1458
      %v1460 = vadd.f32 %v1459, 0.112945676
      %v1461 = vmul.f32 %v1443, %v1460
      %v1462 = vadd.f32 %v1461, 0.4994258
      %v1463 = vmul.f32 %v1443, %v1462
      %v1464 = vadd.f32 %v1463, 1.0
      %v1465 = vrcp.pop %v1464
      %v1466 = vmul.f32 %v1464, %v1465
      %v1467 = vsub.f32 1.0, %v1466
      %v1468 = vmul.f32 %v1465, %v1467
      %v1469 = vadd.f32 %v1465, %v1468
      %vm1470 = vweird.f32 %v1464
      %vm1471 = vweird.f32 %v1465
      %vm1472 = vmor %vm1470, %vm1471
      %v1473 = vsel %vm1472, %v1465, %v1469
      %v1474 = vand.u32 2147483647, %v1464
      %vm1475 = vcmp.eq.f32.partialorder %v1474, 8.507059e+37
      %v1476 = vand.u32 %v1464, 2147483648
      %v1477 = vor.u32 1.1754944e-38, %v1476
      %v1478 = vsel %vm1475, %v1477, %v1473
      %v1479 = vmul.f32 %v1454, %v1478
      %v1480 = vmin.f32 %v1479, 1.0
      %v1481 = vmax.f32 %v1480, -1.0
      %v1482 = vadd.f32 %v1321, 1.0
      %v1483 = vadd.f32 %v1361, 1.0
      %v1484 = vadd.f32 %v1401, 1.0
      %v1485 = vadd.f32 %v1441, 1.0
      %v1486 = vadd.f32 %v1481, 1.0
      %v1487 = vmul.f32 %v1272, %v1482
      %v1488 = vmul.f32 %v1273, %v1483
      %v1489 = vmul.f32 %v1274, %v1484
      %v1490 = vmul.f32 %v1275, %v1485
      %v1491 = vmul.f32 %v1276, %v1486
      %1492 = vst [vmem:[%s332] sm:$0xff] %v1487
      %1493 = vst [vmem:[%s332 + $0x8] sm:$0xff] %v1488
      %1494 = vst [vmem:[%s332 + $0x10] sm:$0xff] %v1489
      %1495 = vst [vmem:[%s332 + $0x18] sm:$0xff] %v1490
      %1496 = vst.msk [vmem:[%s332 + $0x20] sm:$0xff] %vm417, %v1491
      %p1497 = scmp.lt.s32.totalorder %s20, 1
      %s1498 = scalar_select %p1497, %s20, 1
      %s1499 = smul.addr %s1498, 5
      %s1500 = smul.addr %s1499, 8
      %s1501 = scalar_lea.vmem %s9, %s1500
      // Predicated region
      $region57: #{trans_net_forward.7} parent=55 // pred_check
        %p1502 = pneg %p232
      $region58: #{trans_net_forward.7} parent=55 // pred_check_branch
        %1504 = sbr.rel (%p1502) target = $region60
      $region59: #{trans_net_forward.7} parent=55 // pred_region
        _
      $region60: #{trans_net_forward.7} parent=55 // pred_fallthru
        _
    $region56: #{trans_net_forward.7} parent=5 // pred_fallthru
      _
    %p1505 = scmp.le.s32.totalorder 2, %s15
    // Predicated region
    $region61: #{trans_net_forward.7} parent=5 // pred_check
      %p1506 = pneg %p1505
    $region62: #{trans_net_forward.7} parent=5 // pred_check_branch
      %1508 = sbr.rel (%p1506) target = $region64
    $region63: #{trans_net_forward.7} parent=5 // pred_region
      %s1509 = ssub.s32 %s15, 2
      // Predicated region
      $region65: #{trans_net_forward.7} parent=63 // pred_check
        %p1510 = pneg %p238
      $region66: #{trans_net_forward.7} parent=63 // pred_check_branch
        %1512 = sbr.rel (%p1510) target = $region68
      $region67: #{trans_net_forward.7} parent=63 // pred_region
        %p1513 = scmp.lt.s32.totalorder %s21, 1
        %s1514 = scalar_select %p1513, %s21, 1
        %s1515 = smul.addr %s1514, 5
        %s1516 = smul.addr %s1515, 8
        %s1517 = scalar_lea.vmem %s9, %s1516
      $region68: #{trans_net_forward.7} parent=63 // pred_fallthru
        _
    $region64: #{trans_net_forward.7} parent=5 // pred_fallthru
      _
  $region6: #{trans_net_forward.7} parent=0 // loop_footer
    %s19 = sadd.s32 1, %s15
  $region7: #{trans_net_forward.7} parent=0 // loop_footer_branch
    %14 = sbr.rel target = $region3
  $region8: #{trans_net_forward.7} parent=0 // loop_exit
    _

// kernel: trans_net_forward.10
$region0: #{trans_net_forward.10}
  #allocation0 [shape = 'u32[]', space=smem, size = 0x4, offset = 0x4, fixed_abs, tag = 'smem constant byte address 0x4 - core index']
  #allocation1 [shape = 'u32[72,128]{1,0:T(1,128)}', space=vmem, size = 0x9000, scoped, tag = 'internal scratch']
  %s0 = inlined_call_operand.vmem [shape: f32[2,8,625], index: 0, kind: input, shape index: {}]
  %s1 = inlined_call_operand.vmem [shape: f32[625,72], index: 1, kind: input, shape index: {}]
  %s2 = inlined_call_operand.vmem [shape: f32[625,72], index: 2, kind: input, shape index: {}]
  %s3 = inlined_call_operand.vmem [shape: f32[72,625], index: 3, kind: input, shape index: {}]
  %s4 = inlined_call_operand.vmem [shape: f32[72,625], index: 4, kind: input, shape index: {}]
  %s5 = inlined_call_operand.vmem [shape: f32[8,8,72], index: 5, kind: input, shape index: {}]
  %s6 = inlined_call_operand.vmem [shape: f32[8,8,72], index: 6, kind: input, shape index: {}]
  %s7 = inlined_call_operand.vmem [shape: f32[8,8], index: 7, kind: input, shape index: {}]
  %s8 = inlined_call_operand.vmem [shape: f32[8,1], index: 8, kind: input, shape index: {}]
  %s9 = inlined_call_operand.vmem [shape: f32[2,8,625], index: 9, kind: output, shape index: {}]
  %s10 = sld [smem:[#allocation0]]
  $region69: #{trans_net_forward.10} parent=0
    _
  %s12 = ssub.s32 1, %s10
  %s13 = scalar_select 0, %s12, %s10
  loop: start=0, step=1, limit=4
  $region2: #{trans_net_forward.10} parent=0 // loop_pre_header
    _
  $region3: #{trans_net_forward.10} parent=0 // loop_header
    %s15 = sphi 0, %s19
    %p16 = scmp.ge.s32.totalorder %s15, 4
    %s25 = sphi 0, %s27
    %s28 = sphi 0, %s25
    %s29 = sphi 0, %s28
    %s45 = sphi 0, %s29
    %s49 = sphi 0, %s49
    %s51 = sphi 0, %s49
    %s52 = sphi 0, %s51
    %s66 = sphi 0, %s52
    %s70 = sphi 0, %s70
    %s72 = sphi 0, %s70
    %s73 = sphi 0, %s72
    %s87 = sphi 0, %s73
    %s91 = sphi 0, %s91
    %s93 = sphi 0, %s91
    %s94 = sphi 0, %s93
    %s108 = sphi 0, %s94
    %s112 = sphi 0, %s112
    %s114 = sphi 0, %s112
    %s115 = sphi 0, %s114
    %s129 = sphi 0, %s115
    %s133 = sphi 0, %s133
    %s135 = sphi 0, %s133
    %s136 = sphi 0, %s135
    %s150 = sphi 0, %s136
    %s154 = sphi 0, %s154
    %s156 = sphi 0, %s154
    %s157 = sphi 0, %s156
    %s171 = sphi 0, %s157
    %s175 = sphi 0, %s175
    %s177 = sphi 0, %s175
    %s178 = sphi 0, %s177
    %s192 = sphi 0, %s178
    %s196 = sphi 0, %s196
    %s198 = sphi 0, %s196
    %s199 = sphi 0, %s198
    %s213 = sphi 0, %s199
    %s219 = sphi 0, %s221
    %s222 = sphi 0, %s219
    %s223 = sphi 0, %s222
    %s239 = sphi 0, %s223
  $region4: #{trans_net_forward.10} parent=0 // loop_header_branch
    %18 = sbr.rel (%p16) target = $region8
  $region5: #{trans_net_forward.10} parent=0 // loop_body
    %s20 = ssub.s32 %s15, 1
    %s21 = ssub.s32 %s15, 2
    %s22 = sadd.s32 %s15, 1
    %s23 = ssub.s32 %s15, %s22
    %p24 = scmp.eq.s32.totalorder %s23, 0
    %s26 = sadd.s32 %s25, 1
    %s27 = scalar_select %p24, %s25, %s26
    %p30 = pneg %p24
    %p31 = scmp.eq.s32.totalorder %s15, 1
    %p32 = por %p30, %p31
    %p33 = scmp.ne.s32.totalorder %s25, %s28
    %p34 = scmp.eq.s32.totalorder %s15, 0
    %p35 = por %p33, %p34
    %p36 = scmp.ne.s32.totalorder %s25, %s28
    %p37 = scmp.eq.s32.totalorder %s20, 1
    %p38 = por %p36, %p37
    %p39 = scmp.ne.s32.totalorder %s28, %s29
    %p40 = scmp.eq.s32.totalorder %s20, 0
    %p41 = por %p39, %p40
    %p42 = scmp.ne.s32.totalorder %s28, %s29
    %p43 = scmp.eq.s32.totalorder %s21, 1
    %p44 = por %p42, %p43
    %p46 = scmp.ne.s32.totalorder %s29, %s45
    %p47 = scmp.eq.s32.totalorder %s21, 0
    %p48 = por %p46, %p47
    %s50 = sadd.s32 %s49, 1
    %p53 = scmp.eq.s32.totalorder %s15, 1
    %p54 = scmp.ne.s32.totalorder %s49, %s51
    %p55 = scmp.eq.s32.totalorder %s15, 0
    %p56 = por %p54, %p55
    %p57 = scmp.ne.s32.totalorder %s49, %s51
    %p58 = scmp.eq.s32.totalorder %s20, 1
    %p59 = por %p57, %p58
    %p60 = scmp.ne.s32.totalorder %s51, %s52
    %p61 = scmp.eq.s32.totalorder %s20, 0
    %p62 = por %p60, %p61
    %p63 = scmp.ne.s32.totalorder %s51, %s52
    %p64 = scmp.eq.s32.totalorder %s21, 1
    %p65 = por %p63, %p64
    %p67 = scmp.ne.s32.totalorder %s52, %s66
    %p68 = scmp.eq.s32.totalorder %s21, 0
    %p69 = por %p67, %p68
    %s71 = sadd.s32 %s70, 1
    %p74 = scmp.eq.s32.totalorder %s15, 1
    %p75 = scmp.ne.s32.totalorder %s70, %s72
    %p76 = scmp.eq.s32.totalorder %s15, 0
    %p77 = por %p75, %p76
    %p78 = scmp.ne.s32.totalorder %s70, %s72
    %p79 = scmp.eq.s32.totalorder %s20, 1
    %p80 = por %p78, %p79
    %p81 = scmp.ne.s32.totalorder %s72, %s73
    %p82 = scmp.eq.s32.totalorder %s20, 0
    %p83 = por %p81, %p82
    %p84 = scmp.ne.s32.totalorder %s72, %s73
    %p85 = scmp.eq.s32.totalorder %s21, 1
    %p86 = por %p84, %p85
    %p88 = scmp.ne.s32.totalorder %s73, %s87
    %p89 = scmp.eq.s32.totalorder %s21, 0
    %p90 = por %p88, %p89
    %s92 = sadd.s32 %s91, 1
    %p95 = scmp.eq.s32.totalorder %s15, 1
    %p96 = scmp.ne.s32.totalorder %s91, %s93
    %p97 = scmp.eq.s32.totalorder %s15, 0
    %p98 = por %p96, %p97
    %p99 = scmp.ne.s32.totalorder %s91, %s93
    %p100 = scmp.eq.s32.totalorder %s20, 1
    %p101 = por %p99, %p100
    %p102 = scmp.ne.s32.totalorder %s93, %s94
    %p103 = scmp.eq.s32.totalorder %s20, 0
    %p104 = por %p102, %p103
    %p105 = scmp.ne.s32.totalorder %s93, %s94
    %p106 = scmp.eq.s32.totalorder %s21, 1
    %p107 = por %p105, %p106
    %p109 = scmp.ne.s32.totalorder %s94, %s108
    %p110 = scmp.eq.s32.totalorder %s21, 0
    %p111 = por %p109, %p110
    %s113 = sadd.s32 %s112, 1
    %p116 = scmp.eq.s32.totalorder %s15, 1
    %p117 = scmp.ne.s32.totalorder %s112, %s114
    %p118 = scmp.eq.s32.totalorder %s15, 0
    %p119 = por %p117, %p118
    %p120 = scmp.ne.s32.totalorder %s112, %s114
    %p121 = scmp.eq.s32.totalorder %s20, 1
    %p122 = por %p120, %p121
    %p123 = scmp.ne.s32.totalorder %s114, %s115
    %p124 = scmp.eq.s32.totalorder %s20, 0
    %p125 = por %p123, %p124
    %p126 = scmp.ne.s32.totalorder %s114, %s115
    %p127 = scmp.eq.s32.totalorder %s21, 1
    %p128 = por %p126, %p127
    %p130 = scmp.ne.s32.totalorder %s115, %s129
    %p131 = scmp.eq.s32.totalorder %s21, 0
    %p132 = por %p130, %p131
    %s134 = sadd.s32 %s133, 1
    %p137 = scmp.eq.s32.totalorder %s15, 1
    %p138 = scmp.ne.s32.totalorder %s133, %s135
    %p139 = scmp.eq.s32.totalorder %s15, 0
    %p140 = por %p138, %p139
    %p141 = scmp.ne.s32.totalorder %s133, %s135
    %p142 = scmp.eq.s32.totalorder %s20, 1
    %p143 = por %p141, %p142
    %p144 = scmp.ne.s32.totalorder %s135, %s136
    %p145 = scmp.eq.s32.totalorder %s20, 0
    %p146 = por %p144, %p145
    %p147 = scmp.ne.s32.totalorder %s135, %s136
    %p148 = scmp.eq.s32.totalorder %s21, 1
    %p149 = por %p147, %p148
    %p151 = scmp.ne.s32.totalorder %s136, %s150
    %p152 = scmp.eq.s32.totalorder %s21, 0
    %p153 = por %p151, %p152
    %s155 = sadd.s32 %s154, 1
    %p158 = scmp.eq.s32.totalorder %s15, 1
    %p159 = scmp.ne.s32.totalorder %s154, %s156
    %p160 = scmp.eq.s32.totalorder %s15, 0
    %p161 = por %p159, %p160
    %p162 = scmp.ne.s32.totalorder %s154, %s156
    %p163 = scmp.eq.s32.totalorder %s20, 1
    %p164 = por %p162, %p163
    %p165 = scmp.ne.s32.totalorder %s156, %s157
    %p166 = scmp.eq.s32.totalorder %s20, 0
    %p167 = por %p165, %p166
    %p168 = scmp.ne.s32.totalorder %s156, %s157
    %p169 = scmp.eq.s32.totalorder %s21, 1
    %p170 = por %p168, %p169
    %p172 = scmp.ne.s32.totalorder %s157, %s171
    %p173 = scmp.eq.s32.totalorder %s21, 0
    %p174 = por %p172, %p173
    %s176 = sadd.s32 %s175, 1
    %p179 = scmp.eq.s32.totalorder %s15, 1
    %p180 = scmp.ne.s32.totalorder %s175, %s177
    %p181 = scmp.eq.s32.totalorder %s15, 0
    %p182 = por %p180, %p181
    %p183 = scmp.ne.s32.totalorder %s175, %s177
    %p184 = scmp.eq.s32.totalorder %s20, 1
    %p185 = por %p183, %p184
    %p186 = scmp.ne.s32.totalorder %s177, %s178
    %p187 = scmp.eq.s32.totalorder %s20, 0
    %p188 = por %p186, %p187
    %p189 = scmp.ne.s32.totalorder %s177, %s178
    %p190 = scmp.eq.s32.totalorder %s21, 1
    %p191 = por %p189, %p190
    %p193 = scmp.ne.s32.totalorder %s178, %s192
    %p194 = scmp.eq.s32.totalorder %s21, 0
    %p195 = por %p193, %p194
    %s197 = sadd.s32 %s196, 1
    %p200 = scmp.eq.s32.totalorder %s15, 1
    %p201 = scmp.ne.s32.totalorder %s196, %s198
    %p202 = scmp.eq.s32.totalorder %s15, 0
    %p203 = por %p201, %p202
    %p204 = scmp.ne.s32.totalorder %s196, %s198
    %p205 = scmp.eq.s32.totalorder %s20, 1
    %p206 = por %p204, %p205
    %p207 = scmp.ne.s32.totalorder %s198, %s199
    %p208 = scmp.eq.s32.totalorder %s20, 0
    %p209 = por %p207, %p208
    %p210 = scmp.ne.s32.totalorder %s198, %s199
    %p211 = scmp.eq.s32.totalorder %s21, 1
    %p212 = por %p210, %p211
    %p214 = scmp.ne.s32.totalorder %s199, %s213
    %p215 = scmp.eq.s32.totalorder %s21, 0
    %p216 = por %p214, %p215
    %s217 = ssub.s32 %s15, %s22
    %p218 = scmp.eq.s32.totalorder %s217, 0
    %s220 = sadd.s32 %s219, 1
    %s221 = scalar_select %p218, %s219, %s220
    %p224 = pneg %p218
    %p225 = scmp.eq.s32.totalorder %s15, 1
    %p226 = por %p224, %p225
    %p227 = scmp.ne.s32.totalorder %s219, %s222
    %p228 = scmp.eq.s32.totalorder %s15, 0
    %p229 = por %p227, %p228
    %p230 = scmp.ne.s32.totalorder %s219, %s222
    %p231 = scmp.eq.s32.totalorder %s20, 1
    %p232 = por %p230, %p231
    %p233 = scmp.ne.s32.totalorder %s222, %s223
    %p234 = scmp.eq.s32.totalorder %s20, 0
    %p235 = por %p233, %p234
    %p236 = scmp.ne.s32.totalorder %s222, %s223
    %p237 = scmp.eq.s32.totalorder %s21, 1
    %p238 = por %p236, %p237
    %p240 = scmp.ne.s32.totalorder %s223, %s239
    %p241 = scmp.eq.s32.totalorder %s21, 0
    %p242 = por %p240, %p241
    %p243 = scmp.le.s32.totalorder 1, %s15
    %p244 = scmp.lt.s32.totalorder %s15, 3
    %p245 = pnand %p243, %p244
    %p246 = pneg %p245
    // Predicated region
    $region9: #{trans_net_forward.10} parent=5 // pred_check
      _
    $region10: #{trans_net_forward.10} parent=5 // pred_check_branch
      %248 = sbr.rel (%p245) target = $region12
    $region11: #{trans_net_forward.10} parent=5 // pred_region
      %s249 = ssub.s32 %s15, 1
      // Predicated region
      $region13: #{trans_net_forward.10} parent=11 // pred_check
        %p250 = pneg %p62
      $region14: #{trans_net_forward.10} parent=11 // pred_check_branch
        %252 = sbr.rel (%p250) target = $region16
      $region15: #{trans_net_forward.10} parent=11 // pred_region
        _
      $region16: #{trans_net_forward.10} parent=11 // pred_fallthru
        _
      // Predicated region
      $region17: #{trans_net_forward.10} parent=11 // pred_check
        %p253 = pneg %p83
      $region18: #{trans_net_forward.10} parent=11 // pred_check_branch
        %255 = sbr.rel (%p253) target = $region20
      $region19: #{trans_net_forward.10} parent=11 // pred_region
        _
      $region20: #{trans_net_forward.10} parent=11 // pred_fallthru
        _
      // Predicated region
      $region21: #{trans_net_forward.10} parent=11 // pred_check
        %p256 = pneg %p104
      $region22: #{trans_net_forward.10} parent=11 // pred_check_branch
        %258 = sbr.rel (%p256) target = $region24
      $region23: #{trans_net_forward.10} parent=11 // pred_region
        _
      $region24: #{trans_net_forward.10} parent=11 // pred_fallthru
        _
      // Predicated region
      $region25: #{trans_net_forward.10} parent=11 // pred_check
        %p259 = pneg %p125
      $region26: #{trans_net_forward.10} parent=11 // pred_check_branch
        %261 = sbr.rel (%p259) target = $region28
      $region27: #{trans_net_forward.10} parent=11 // pred_region
        _
      $region28: #{trans_net_forward.10} parent=11 // pred_fallthru
        _
      // Predicated region
      $region29: #{trans_net_forward.10} parent=11 // pred_check
        %p262 = pneg %p146
      $region30: #{trans_net_forward.10} parent=11 // pred_check_branch
        %264 = sbr.rel (%p262) target = $region32
      $region31: #{trans_net_forward.10} parent=11 // pred_region
        _
      $region32: #{trans_net_forward.10} parent=11 // pred_fallthru
        _
      // Predicated region
      $region33: #{trans_net_forward.10} parent=11 // pred_check
        %p265 = pneg %p167
      $region34: #{trans_net_forward.10} parent=11 // pred_check_branch
        %267 = sbr.rel (%p265) target = $region36
      $region35: #{trans_net_forward.10} parent=11 // pred_region
        _
      $region36: #{trans_net_forward.10} parent=11 // pred_fallthru
        _
      // Predicated region
      $region37: #{trans_net_forward.10} parent=11 // pred_check
        %p268 = pneg %p188
      $region38: #{trans_net_forward.10} parent=11 // pred_check_branch
        %270 = sbr.rel (%p268) target = $region40
      $region39: #{trans_net_forward.10} parent=11 // pred_region
        _
      $region40: #{trans_net_forward.10} parent=11 // pred_fallthru
        _
      // Predicated region
      $region41: #{trans_net_forward.10} parent=11 // pred_check
        %p271 = pneg %p209
      $region42: #{trans_net_forward.10} parent=11 // pred_check_branch
        %273 = sbr.rel (%p271) target = $region44
      $region43: #{trans_net_forward.10} parent=11 // pred_region
        _
      $region44: #{trans_net_forward.10} parent=11 // pred_fallthru
        _
    $region12: #{trans_net_forward.10} parent=5 // pred_fallthru
      _
    %p274 = scmp.lt.s32.totalorder %s15, 2
    // Predicated region
    $region45: #{trans_net_forward.10} parent=5 // pred_check
      %p275 = pneg %p274
    $region46: #{trans_net_forward.10} parent=5 // pred_check_branch
      %277 = sbr.rel (%p275) target = $region48
    $region47: #{trans_net_forward.10} parent=5 // pred_region
      // Predicated region
      $region49: #{trans_net_forward.10} parent=47 // pred_check
        %p278 = pneg %p35
      $region50: #{trans_net_forward.10} parent=47 // pred_check_branch
        %280 = sbr.rel (%p278) target = $region52
      $region51: #{trans_net_forward.10} parent=47 // pred_region
        %p281 = scmp.lt.s32.totalorder %s15, 1
        %s282 = scalar_select %p281, %s15, 1
        %s283 = smul.addr %s282, 5
        %s284 = smul.addr %s283, 8
        %s285 = scalar_lea.vmem %s0, %s284
      $region52: #{trans_net_forward.10} parent=47 // pred_fallthru
        _
    $region48: #{trans_net_forward.10} parent=5 // pred_fallthru
      _
    %p286 = scmp.le.s32.totalorder 1, %s15
    %p287 = scmp.lt.s32.totalorder %s15, 3
    %p288 = pnand %p286, %p287
    %p289 = pneg %p288
    // Predicated region
    $region53: #{trans_net_forward.10} parent=5 // pred_check
      _
    $region54: #{trans_net_forward.10} parent=5 // pred_check_branch
      %291 = sbr.rel (%p288) target = $region56
    $region55: #{trans_net_forward.10} parent=5 // pred_region
      %s292 = ssub.s32 %s15, 1
      %p293 = scmp.lt.s32.totalorder %s20, 1
      %s294 = scalar_select %p293, %s20, 1
      %s295 = smul.addr %s294, 5
      %s296 = smul.addr %s295, 8
      %s297 = scalar_lea.vmem %s0, %s296
      %p298 = pneg %p41
      %p299 = pneg %p38
      %p300 = pneg %p62
      %p301 = pneg %p59
      %p302 = pneg %p83
      %p303 = pneg %p80
      %p304 = pneg %p104
      %p305 = pneg %p101
      %p306 = pneg %p125
      %p307 = pneg %p122
      %p308 = pneg %p146
      %p309 = pneg %p143
      %p310 = pneg %p167
      %p311 = pneg %p164
      %p312 = pneg %p188
      %p313 = pneg %p185
      %p314 = pneg %p209
      %p315 = pneg %p206
      %p316 = pneg %p235
      %p317 = pneg %p232
      %p318 = scmp.lt.s32.totalorder %s20, 1
      %s319 = scalar_select %p318, %s20, 1
      %s320 = smul.addr %s319, 5
      %s321 = smul.addr %s320, 8
      %s322 = scalar_lea.vmem %s9, %s321
      %p323 = scmp.lt.s32.totalorder %s20, 1
      %s324 = scalar_select %p323, %s20, 1
      %s325 = smul.addr %s324, 5
      %s326 = smul.addr %s325, 8
      %s327 = scalar_lea.vmem %s0, %s326
      %p328 = scmp.lt.s32.totalorder %s20, 1
      %s329 = scalar_select %p328, %s20, 1
      %s330 = smul.addr %s329, 5
      %s331 = smul.addr %s330, 8
      %s332 = scalar_lea.vmem %s9, %s331
      %v333 = vld [vmem:[%s327] sm:$0xff]
      %v334 = vld [vmem:[%s327 + $0x8] sm:$0xff]
      %v335 = vld [vmem:[%s327 + $0x10] sm:$0xff]
      %v336 = vld [vmem:[%s327 + $0x18] sm:$0xff]
      %v337 = vld [vmem:[%s327 + $0x20] sm:$0xff]
      %v338 = vld [vmem:[%s1] sm:$0xff]
      %v339 = vld [vmem:[%s1 + $0x8] sm:$0xff]
      %v340 = vld [vmem:[%s1 + $0x10] sm:$0xff]
      %v341 = vld [vmem:[%s1 + $0x18] sm:$0xff]
      %v342 = vld [vmem:[%s1 + $0x20] sm:$0xff]
      %v343 = vld [vmem:[%s1 + $0x28] sm:$0xff]
      %v344 = vld [vmem:[%s1 + $0x30] sm:$0xff]
      %v345 = vld [vmem:[%s1 + $0x38] sm:$0xff]
      %v346 = vld [vmem:[%s1 + $0x40] sm:$0xff]
      %v347 = vld [vmem:[%s1 + $0x48] sm:$0xff]
      %v348 = vld [vmem:[%s1 + $0x50] sm:$0xff]
      %v349 = vld [vmem:[%s1 + $0x58] sm:$0xff]
      %v350 = vld [vmem:[%s1 + $0x60] sm:$0xff]
      %v351 = vld [vmem:[%s1 + $0x68] sm:$0xff]
      %v352 = vld [vmem:[%s1 + $0x70] sm:$0xff]
      %v353 = vld [vmem:[%s1 + $0x78] sm:$0xff]
      %v354 = vld [vmem:[%s1 + $0x80] sm:$0xff]
      %v355 = vld [vmem:[%s1 + $0x88] sm:$0xff]
      %v356 = vld [vmem:[%s1 + $0x90] sm:$0xff]
      %v357 = vld [vmem:[%s1 + $0x98] sm:$0xff]
      %v358 = vld [vmem:[%s1 + $0xa0] sm:$0xff]
      %v359 = vld [vmem:[%s1 + $0xa8] sm:$0xff]
      %v360 = vld [vmem:[%s1 + $0xb0] sm:$0xff]
      %v361 = vld [vmem:[%s1 + $0xb8] sm:$0xff]
      %v362 = vld [vmem:[%s1 + $0xc0] sm:$0xff]
      %v363 = vld [vmem:[%s1 + $0xc8] sm:$0xff]
      %v364 = vld [vmem:[%s1 + $0xd0] sm:$0xff]
      %v365 = vld [vmem:[%s1 + $0xd8] sm:$0xff]
      %v366 = vld [vmem:[%s1 + $0xe0] sm:$0xff]
      %v367 = vld [vmem:[%s1 + $0xe8] sm:$0xff]
      %v368 = vld [vmem:[%s1 + $0xf0] sm:$0xff]
      %v369 = vld [vmem:[%s1 + $0xf8] sm:$0xff]
      %v370 = vld [vmem:[%s1 + $0x100] sm:$0xff]
      %v371 = vld [vmem:[%s1 + $0x108] sm:$0xff]
      %v372 = vld [vmem:[%s1 + $0x110] sm:$0xff]
      %v373 = vld [vmem:[%s1 + $0x118] sm:$0xff]
      %v374 = vld [vmem:[%s1 + $0x120] sm:$0xff]
      %v375 = vld [vmem:[%s1 + $0x128] sm:$0xff]
      %v376 = vld [vmem:[%s1 + $0x130] sm:$0xff]
      %v377 = vld [vmem:[%s1 + $0x138] sm:$0xff]
      %v378 = vld [vmem:[%s1 + $0x140] sm:$0xff]
      %v379 = vld [vmem:[%s1 + $0x148] sm:$0xff]
      %v380 = vld [vmem:[%s1 + $0x150] sm:$0xff]
      %v381 = vld [vmem:[%s1 + $0x158] sm:$0xff]
      %v382 = vld [vmem:[%s1 + $0x160] sm:$0xff]
      %v383 = vld [vmem:[%s1 + $0x168] sm:$0xff]
      %v384 = vld [vmem:[%s1 + $0x170] sm:$0xff]
      %v385 = vld [vmem:[%s1 + $0x178] sm:$0xff]
      %v386 = vld [vmem:[%s1 + $0x180] sm:$0xff]
      %v387 = vld [vmem:[%s1 + $0x188] sm:$0xff]
      %v388 = vld [vmem:[%s1 + $0x190] sm:$0xff]
      %v389 = vld [vmem:[%s1 + $0x198] sm:$0xff]
      %v390 = vld [vmem:[%s1 + $0x1a0] sm:$0xff]
      %v391 = vld [vmem:[%s1 + $0x1a8] sm:$0xff]
      %v392 = vld [vmem:[%s1 + $0x1b0] sm:$0xff]
      %v393 = vld [vmem:[%s1 + $0x1b8] sm:$0xff]
      %v394 = vld [vmem:[%s1 + $0x1c0] sm:$0xff]
      %v395 = vld [vmem:[%s1 + $0x1c8] sm:$0xff]
      %v396 = vld [vmem:[%s1 + $0x1d0] sm:$0xff]
      %v397 = vld [vmem:[%s1 + $0x1d8] sm:$0xff]
      %v398 = vld [vmem:[%s1 + $0x1e0] sm:$0xff]
      %v399 = vld [vmem:[%s1 + $0x1e8] sm:$0xff]
      %v400 = vld [vmem:[%s1 + $0x1f0] sm:$0xff]
      %v401 = vld [vmem:[%s1 + $0x1f8] sm:$0xff]
      %v402 = vld [vmem:[%s1 + $0x200] sm:$0xff]
      %v403 = vld [vmem:[%s1 + $0x208] sm:$0xff]
      %v404 = vld [vmem:[%s1 + $0x210] sm:$0xff]
      %v405 = vld [vmem:[%s1 + $0x218] sm:$0xff]
      %v406 = vld [vmem:[%s1 + $0x220] sm:$0xff]
      %v407 = vld [vmem:[%s1 + $0x228] sm:$0xff]
      %v408 = vld [vmem:[%s1 + $0x230] sm:$0xff]
      %v409 = vld [vmem:[%s1 + $0x238] sm:$0xff]
      %v410 = vld [vmem:[%s1 + $0x240] sm:$0xff]
      %v411 = vld [vmem:[%s1 + $0x248] sm:$0xff]
      %v412 = vld [vmem:[%s1 + $0x250] sm:$0xff]
      %v413 = vld [vmem:[%s1 + $0x258] sm:$0xff]
      %v414 = vld [vmem:[%s1 + $0x260] sm:$0xff]
      %v415 = vld [vmem:[%s1 + $0x268] sm:$0xff]
      %v416 = vld [vmem:[%s1 + $0x270] sm:$0x1]
      %vm417 = vcmask 924672
      %v419 = vsel %vm417, %v337, 0
      %vm421 = vcmask 1040384
      %v423 = vsel %vm421, %v416, 0
      %425 = vmatpush.msra.mxu0 %v353
      %426 = vmatpush.msra.mxu0 %v352
      %427 = vmatpush.msra.mxu0 %v351
      %428 = vmatpush.msra.mxu0 %v350
      %429 = vmatpush.msra.mxu0 %v349
      %430 = vmatpush.msra.mxu0 %v348
      %431 = vmatpush.msra.mxu0 %v347
      %432 = vmatpush.msra.mxu0 %v346
      %433 = vmatpush.msra.mxu0 %v345
      %434 = vmatpush.msra.mxu0 %v344
      %435 = vmatpush.msra.mxu0 %v343
      %436 = vmatpush.msra.mxu0 %v342
      %437 = vmatpush.msra.mxu0 %v341
      %438 = vmatpush.msra.mxu0 %v340
      %439 = vmatpush.msra.mxu0 %v339
      %440 = vmatpush.msra.mxu0 %v338
      %441 = vmatmul.f32.gmra.mxu0 %v333
      %v442 = vpop.f32.mrf.mxu0
      %v443 = vadd.f32 0.0, %v442
      %444 = vdwg.mxu0
      %445 = vmatpush.msra.mxu0 %v369
      %446 = vmatpush.msra.mxu0 %v368
      %447 = vmatpush.msra.mxu0 %v367
      %448 = vmatpush.msra.mxu0 %v366
      %449 = vmatpush.msra.mxu0 %v365
      %450 = vmatpush.msra.mxu0 %v364
      %451 = vmatpush.msra.mxu0 %v363
      %452 = vmatpush.msra.mxu0 %v362
      %453 = vmatpush.msra.mxu0 %v361
      %454 = vmatpush.msra.mxu0 %v360
      %455 = vmatpush.msra.mxu0 %v359
      %456 = vmatpush.msra.mxu0 %v358
      %457 = vmatpush.msra.mxu0 %v357
      %458 = vmatpush.msra.mxu0 %v356
      %459 = vmatpush.msra.mxu0 %v355
      %460 = vmatpush.msra.mxu0 %v354
      %461 = vmatmul.f32.gmra.mxu0 %v334
      %v462 = vpop.f32.mrf.mxu0
      %v463 = vadd.f32 %v443, %v462
      %464 = vdwg.mxu0
      %465 = vmatpush.msra.mxu0 %v385
      %466 = vmatpush.msra.mxu0 %v384
      %467 = vmatpush.msra.mxu0 %v383
      %468 = vmatpush.msra.mxu0 %v382
      %469 = vmatpush.msra.mxu0 %v381
      %470 = vmatpush.msra.mxu0 %v380
      %471 = vmatpush.msra.mxu0 %v379
      %472 = vmatpush.msra.mxu0 %v378
      %473 = vmatpush.msra.mxu0 %v377
      %474 = vmatpush.msra.mxu0 %v376
      %475 = vmatpush.msra.mxu0 %v375
      %476 = vmatpush.msra.mxu0 %v374
      %477 = vmatpush.msra.mxu0 %v373
      %478 = vmatpush.msra.mxu0 %v372
      %479 = vmatpush.msra.mxu0 %v371
      %480 = vmatpush.msra.mxu0 %v370
      %481 = vmatmul.f32.gmra.mxu0 %v335
      %v482 = vpop.f32.mrf.mxu0
      %v483 = vadd.f32 %v463, %v482
      %484 = vdwg.mxu0
      %485 = vmatpush.msra.mxu0 %v401
      %486 = vmatpush.msra.mxu0 %v400
      %487 = vmatpush.msra.mxu0 %v399
      %488 = vmatpush.msra.mxu0 %v398
      %489 = vmatpush.msra.mxu0 %v397
      %490 = vmatpush.msra.mxu0 %v396
      %491 = vmatpush.msra.mxu0 %v395
      %492 = vmatpush.msra.mxu0 %v394
      %493 = vmatpush.msra.mxu0 %v393
      %494 = vmatpush.msra.mxu0 %v392
      %495 = vmatpush.msra.mxu0 %v391
      %496 = vmatpush.msra.mxu0 %v390
      %497 = vmatpush.msra.mxu0 %v389
      %498 = vmatpush.msra.mxu0 %v388
      %499 = vmatpush.msra.mxu0 %v387
      %500 = vmatpush.msra.mxu0 %v386
      %501 = vmatmul.f32.gmra.mxu0 %v336
      %v502 = vpop.f32.mrf.mxu0
      %v503 = vadd.f32 %v483, %v502
      %504 = vdwg.mxu0
      %505 = vmatpush.msra.mxu0 0.0
      %506 = vmatpush.msra.mxu0 %v423
      %507 = vmatpush.msra.mxu0 %v415
      %508 = vmatpush.msra.mxu0 %v414
      %509 = vmatpush.msra.mxu0 %v413
      %510 = vmatpush.msra.mxu0 %v412
      %511 = vmatpush.msra.mxu0 %v411
      %512 = vmatpush.msra.mxu0 %v410
      %513 = vmatpush.msra.mxu0 %v409
      %514 = vmatpush.msra.mxu0 %v408
      %515 = vmatpush.msra.mxu0 %v407
      %516 = vmatpush.msra.mxu0 %v406
      %517 = vmatpush.msra.mxu0 %v405
      %518 = vmatpush.msra.mxu0 %v404
      %519 = vmatpush.msra.mxu0 %v403
      %520 = vmatpush.msra.mxu0 %v402
      %521 = vmatmul.f32.gmra.mxu0 %v419
      %v522 = vpop.f32.mrf.mxu0
      %v523 = vadd.f32 %v503, %v522
      %524 = vdwg.mxu0
      %v525 = vld [vmem:[%s2] sm:$0xff]
      %v526 = vld [vmem:[%s2 + $0x8] sm:$0xff]
      %v527 = vld [vmem:[%s2 + $0x10] sm:$0xff]
      %v528 = vld [vmem:[%s2 + $0x18] sm:$0xff]
      %v529 = vld [vmem:[%s2 + $0x20] sm:$0xff]
      %v530 = vld [vmem:[%s2 + $0x28] sm:$0xff]
      %v531 = vld [vmem:[%s2 + $0x30] sm:$0xff]
      %v532 = vld [vmem:[%s2 + $0x38] sm:$0xff]
      %v533 = vld [vmem:[%s2 + $0x40] sm:$0xff]
      %v534 = vld [vmem:[%s2 + $0x48] sm:$0xff]
      %v535 = vld [vmem:[%s2 + $0x50] sm:$0xff]
      %v536 = vld [vmem:[%s2 + $0x58] sm:$0xff]
      %v537 = vld [vmem:[%s2 + $0x60] sm:$0xff]
      %v538 = vld [vmem:[%s2 + $0x68] sm:$0xff]
      %v539 = vld [vmem:[%s2 + $0x70] sm:$0xff]
      %v540 = vld [vmem:[%s2 + $0x78] sm:$0xff]
      %v541 = vld [vmem:[%s2 + $0x80] sm:$0xff]
      %v542 = vld [vmem:[%s2 + $0x88] sm:$0xff]
      %v543 = vld [vmem:[%s2 + $0x90] sm:$0xff]
      %v544 = vld [vmem:[%s2 + $0x98] sm:$0xff]
      %v545 = vld [vmem:[%s2 + $0xa0] sm:$0xff]
      %v546 = vld [vmem:[%s2 + $0xa8] sm:$0xff]
      %v547 = vld [vmem:[%s2 + $0xb0] sm:$0xff]
      %v548 = vld [vmem:[%s2 + $0xb8] sm:$0xff]
      %v549 = vld [vmem:[%s2 + $0xc0] sm:$0xff]
      %v550 = vld [vmem:[%s2 + $0xc8] sm:$0xff]
      %v551 = vld [vmem:[%s2 + $0xd0] sm:$0xff]
      %v552 = vld [vmem:[%s2 + $0xd8] sm:$0xff]
      %v553 = vld [vmem:[%s2 + $0xe0] sm:$0xff]
      %v554 = vld [vmem:[%s2 + $0xe8] sm:$0xff]
      %v555 = vld [vmem:[%s2 + $0xf0] sm:$0xff]
      %v556 = vld [vmem:[%s2 + $0xf8] sm:$0xff]
      %v557 = vld [vmem:[%s2 + $0x100] sm:$0xff]
      %v558 = vld [vmem:[%s2 + $0x108] sm:$0xff]
      %v559 = vld [vmem:[%s2 + $0x110] sm:$0xff]
      %v560 = vld [vmem:[%s2 + $0x118] sm:$0xff]
      %v561 = vld [vmem:[%s2 + $0x120] sm:$0xff]
      %v562 = vld [vmem:[%s2 + $0x128] sm:$0xff]
      %v563 = vld [vmem:[%s2 + $0x130] sm:$0xff]
      %v564 = vld [vmem:[%s2 + $0x138] sm:$0xff]
      %v565 = vld [vmem:[%s2 + $0x140] sm:$0xff]
      %v566 = vld [vmem:[%s2 + $0x148] sm:$0xff]
      %v567 = vld [vmem:[%s2 + $0x150] sm:$0xff]
      %v568 = vld [vmem:[%s2 + $0x158] sm:$0xff]
      %v569 = vld [vmem:[%s2 + $0x160] sm:$0xff]
      %v570 = vld [vmem:[%s2 + $0x168] sm:$0xff]
      %v571 = vld [vmem:[%s2 + $0x170] sm:$0xff]
      %v572 = vld [vmem:[%s2 + $0x178] sm:$0xff]
      %v573 = vld [vmem:[%s2 + $0x180] sm:$0xff]
      %v574 = vld [vmem:[%s2 + $0x188] sm:$0xff]
      %v575 = vld [vmem:[%s2 + $0x190] sm:$0xff]
      %v576 = vld [vmem:[%s2 + $0x198] sm:$0xff]
      %v577 = vld [vmem:[%s2 + $0x1a0] sm:$0xff]
      %v578 = vld [vmem:[%s2 + $0x1a8] sm:$0xff]
      %v579 = vld [vmem:[%s2 + $0x1b0] sm:$0xff]
      %v580 = vld [vmem:[%s2 + $0x1b8] sm:$0xff]
      %v581 = vld [vmem:[%s2 + $0x1c0] sm:$0xff]
      %v582 = vld [vmem:[%s2 + $0x1c8] sm:$0xff]
      %v583 = vld [vmem:[%s2 + $0x1d0] sm:$0xff]
      %v584 = vld [vmem:[%s2 + $0x1d8] sm:$0xff]
      %v585 = vld [vmem:[%s2 + $0x1e0] sm:$0xff]
      %v586 = vld [vmem:[%s2 + $0x1e8] sm:$0xff]
      %v587 = vld [vmem:[%s2 + $0x1f0] sm:$0xff]
      %v588 = vld [vmem:[%s2 + $0x1f8] sm:$0xff]
      %v589 = vld [vmem:[%s2 + $0x200] sm:$0xff]
      %v590 = vld [vmem:[%s2 + $0x208] sm:$0xff]
      %v591 = vld [vmem:[%s2 + $0x210] sm:$0xff]
      %v592 = vld [vmem:[%s2 + $0x218] sm:$0xff]
      %v593 = vld [vmem:[%s2 + $0x220] sm:$0xff]
      %v594 = vld [vmem:[%s2 + $0x228] sm:$0xff]
      %v595 = vld [vmem:[%s2 + $0x230] sm:$0xff]
      %v596 = vld [vmem:[%s2 + $0x238] sm:$0xff]
      %v597 = vld [vmem:[%s2 + $0x240] sm:$0xff]
      %v598 = vld [vmem:[%s2 + $0x248] sm:$0xff]
      %v599 = vld [vmem:[%s2 + $0x250] sm:$0xff]
      %v600 = vld [vmem:[%s2 + $0x258] sm:$0xff]
      %v601 = vld [vmem:[%s2 + $0x260] sm:$0xff]
      %v602 = vld [vmem:[%s2 + $0x268] sm:$0xff]
      %v603 = vld [vmem:[%s2 + $0x270] sm:$0x1]
      %v605 = vsel %vm421, %v603, 0
      %607 = vmatpush.msra.mxu0 %v540
      %608 = vmatpush.msra.mxu0 %v539
      %609 = vmatpush.msra.mxu0 %v538
      %610 = vmatpush.msra.mxu0 %v537
      %611 = vmatpush.msra.mxu0 %v536
      %612 = vmatpush.msra.mxu0 %v535
      %613 = vmatpush.msra.mxu0 %v534
      %614 = vmatpush.msra.mxu0 %v533
      %615 = vmatpush.msra.mxu0 %v532
      %616 = vmatpush.msra.mxu0 %v531
      %617 = vmatpush.msra.mxu0 %v530
      %618 = vmatpush.msra.mxu0 %v529
      %619 = vmatpush.msra.mxu0 %v528
      %620 = vmatpush.msra.mxu0 %v527
      %621 = vmatpush.msra.mxu0 %v526
      %622 = vmatpush.msra.mxu0 %v525
      %623 = vmatmul.f32.gmra.mxu0 %v333
      %v624 = vpop.f32.mrf.mxu0
      %v625 = vadd.f32 0.0, %v624
      %626 = vdwg.mxu0
      %627 = vmatpush.msra.mxu0 %v556
      %628 = vmatpush.msra.mxu0 %v555
      %629 = vmatpush.msra.mxu0 %v554
      %630 = vmatpush.msra.mxu0 %v553
      %631 = vmatpush.msra.mxu0 %v552
      %632 = vmatpush.msra.mxu0 %v551
      %633 = vmatpush.msra.mxu0 %v550
      %634 = vmatpush.msra.mxu0 %v549
      %635 = vmatpush.msra.mxu0 %v548
      %636 = vmatpush.msra.mxu0 %v547
      %637 = vmatpush.msra.mxu0 %v546
      %638 = vmatpush.msra.mxu0 %v545
      %639 = vmatpush.msra.mxu0 %v544
      %640 = vmatpush.msra.mxu0 %v543
      %641 = vmatpush.msra.mxu0 %v542
      %642 = vmatpush.msra.mxu0 %v541
      %643 = vmatmul.f32.gmra.mxu0 %v334
      %v644 = vpop.f32.mrf.mxu0
      %v645 = vadd.f32 %v625, %v644
      %646 = vdwg.mxu0
      %647 = vmatpush.msra.mxu0 %v572
      %648 = vmatpush.msra.mxu0 %v571
      %649 = vmatpush.msra.mxu0 %v570
      %650 = vmatpush.msra.mxu0 %v569
      %651 = vmatpush.msra.mxu0 %v568
      %652 = vmatpush.msra.mxu0 %v567
      %653 = vmatpush.msra.mxu0 %v566
      %654 = vmatpush.msra.mxu0 %v565
      %655 = vmatpush.msra.mxu0 %v564
      %656 = vmatpush.msra.mxu0 %v563
      %657 = vmatpush.msra.mxu0 %v562
      %658 = vmatpush.msra.mxu0 %v561
      %659 = vmatpush.msra.mxu0 %v560
      %660 = vmatpush.msra.mxu0 %v559
      %661 = vmatpush.msra.mxu0 %v558
      %662 = vmatpush.msra.mxu0 %v557
      %663 = vmatmul.f32.gmra.mxu0 %v335
      %v664 = vpop.f32.mrf.mxu0
      %v665 = vadd.f32 %v645, %v664
      %666 = vdwg.mxu0
      %667 = vmatpush.msra.mxu0 %v588
      %668 = vmatpush.msra.mxu0 %v587
      %669 = vmatpush.msra.mxu0 %v586
      %670 = vmatpush.msra.mxu0 %v585
      %671 = vmatpush.msra.mxu0 %v584
      %672 = vmatpush.msra.mxu0 %v583
      %673 = vmatpush.msra.mxu0 %v582
      %674 = vmatpush.msra.mxu0 %v581
      %675 = vmatpush.msra.mxu0 %v580
      %676 = vmatpush.msra.mxu0 %v579
      %677 = vmatpush.msra.mxu0 %v578
      %678 = vmatpush.msra.mxu0 %v577
      %679 = vmatpush.msra.mxu0 %v576
      %680 = vmatpush.msra.mxu0 %v575
      %681 = vmatpush.msra.mxu0 %v574
      %682 = vmatpush.msra.mxu0 %v573
      %683 = vmatmul.f32.gmra.mxu0 %v336
      %v684 = vpop.f32.mrf.mxu0
      %v685 = vadd.f32 %v665, %v684
      %686 = vdwg.mxu0
      %687 = vmatpush.msra.mxu0 0.0
      %688 = vmatpush.msra.mxu0 %v605
      %689 = vmatpush.msra.mxu0 %v602
      %690 = vmatpush.msra.mxu0 %v601
      %691 = vmatpush.msra.mxu0 %v600
      %692 = vmatpush.msra.mxu0 %v599
      %693 = vmatpush.msra.mxu0 %v598
      %694 = vmatpush.msra.mxu0 %v597
      %695 = vmatpush.msra.mxu0 %v596
      %696 = vmatpush.msra.mxu0 %v595
      %697 = vmatpush.msra.mxu0 %v594
      %698 = vmatpush.msra.mxu0 %v593
      %699 = vmatpush.msra.mxu0 %v592
      %700 = vmatpush.msra.mxu0 %v591
      %701 = vmatpush.msra.mxu0 %v590
      %702 = vmatpush.msra.mxu0 %v589
      %703 = vmatmul.f32.gmra.mxu0 %v419
      %v704 = vpop.f32.mrf.mxu0
      %v705 = vadd.f32 %v685, %v704
      %706 = vdwg.mxu0
      %v707 = vld [vmem:[%s5] sm:$0xff]
      %v708 = vld [vmem:[%s5 + $0x8] sm:$0xff]
      %v709 = vld [vmem:[%s5 + $0x10] sm:$0xff]
      %v710 = vld [vmem:[%s5 + $0x18] sm:$0xff]
      %v711 = vld [vmem:[%s5 + $0x20] sm:$0xff]
      %v712 = vld [vmem:[%s5 + $0x28] sm:$0xff]
      %v713 = vld [vmem:[%s5 + $0x30] sm:$0xff]
      %v714 = vld [vmem:[%s5 + $0x38] sm:$0xff]
      %v715 = vld [vmem:[%s6] sm:$0xff]
      %v716 = vld [vmem:[%s6 + $0x8] sm:$0xff]
      %v717 = vld [vmem:[%s6 + $0x10] sm:$0xff]
      %v718 = vld [vmem:[%s6 + $0x18] sm:$0xff]
      %v719 = vld [vmem:[%s6 + $0x20] sm:$0xff]
      %v720 = vld [vmem:[%s6 + $0x28] sm:$0xff]
      %v721 = vld [vmem:[%s6 + $0x30] sm:$0xff]
      %v722 = vld [vmem:[%s6 + $0x38] sm:$0xff]
      %v724 = vrot.slane %v523, 1
      %v725 = vrot.slane %v523, 2
      %v726 = vrot.slane %v523, 3
      %v727 = vrot.slane %v523, 4
      %v728 = vrot.slane %v523, 5
      %v729 = vrot.slane %v523, 6
      %v730 = vrot.slane %v523, 7
      %v732 = vrot.slane %v705, 1
      %v733 = vrot.slane %v705, 2
      %v734 = vrot.slane %v705, 3
      %v735 = vrot.slane %v705, 4
      %v736 = vrot.slane %v705, 5
      %v737 = vrot.slane %v705, 6
      %v738 = vrot.slane %v705, 7
      %v739 = vperm.slane %v523, 0
      %v740 = vperm.slane %v724, 0
      %v741 = vperm.slane %v725, 0
      %v742 = vperm.slane %v726, 0
      %v743 = vperm.slane %v727, 0
      %v744 = vperm.slane %v728, 0
      %v745 = vperm.slane %v729, 0
      %v746 = vperm.slane %v730, 0
      %v755 = vmul.f32 %v739, %v707
      %v756 = vmul.f32 %v740, %v708
      %v757 = vmul.f32 %v741, %v709
      %v758 = vmul.f32 %v742, %v710
      %v759 = vmul.f32 %v743, %v711
      %v760 = vmul.f32 %v744, %v712
      %v761 = vmul.f32 %v745, %v713
      %v762 = vmul.f32 %v746, %v714
      %v763 = vperm.slane %v705, 0
      %v764 = vperm.slane %v732, 0
      %v765 = vperm.slane %v733, 0
      %v766 = vperm.slane %v734, 0
      %v767 = vperm.slane %v735, 0
      %v768 = vperm.slane %v736, 0
      %v769 = vperm.slane %v737, 0
      %v770 = vperm.slane %v738, 0
      %v779 = vmul.f32 %v763, %v715
      %v780 = vmul.f32 %v764, %v716
      %v781 = vmul.f32 %v765, %v717
      %v782 = vmul.f32 %v766, %v718
      %v783 = vmul.f32 %v767, %v719
      %v784 = vmul.f32 %v768, %v720
      %v785 = vmul.f32 %v769, %v721
      %v786 = vmul.f32 %v770, %v722
      %v787 = vsub.f32 %v755, %v779
      %v788 = vsub.f32 %v756, %v780
      %v789 = vsub.f32 %v757, %v781
      %v790 = vsub.f32 %v758, %v782
      %v791 = vsub.f32 %v759, %v783
      %v792 = vsub.f32 %v760, %v784
      %v793 = vsub.f32 %v761, %v785
      %v794 = vsub.f32 %v762, %v786
      %vm795 = vcmask 588800
      %v796 = vsel %vm795, %v787, 0.0
      %v797 = vsel %vm795, %v788, 0.0
      %v798 = vadd.f32 %v796, %v797
      %v799 = vsel %vm795, %v789, 0.0
      %v800 = vadd.f32 %v798, %v799
      %v801 = vsel %vm795, %v790, 0.0
      %v802 = vadd.f32 %v800, %v801
      %v803 = vsel %vm795, %v791, 0.0
      %v804 = vadd.f32 %v802, %v803
      %v805 = vsel %vm795, %v792, 0.0
      %v806 = vadd.f32 %v804, %v805
      %v807 = vsel %vm795, %v793, 0.0
      %v808 = vadd.f32 %v806, %v807
      %v809 = vsel %vm795, %v794, 0.0
      %v810 = vadd.f32 %v808, %v809
      %v811 = vmul.f32 %v739, %v715
      %v812 = vmul.f32 %v740, %v716
      %v813 = vmul.f32 %v741, %v717
      %v814 = vmul.f32 %v742, %v718
      %v815 = vmul.f32 %v743, %v719
      %v816 = vmul.f32 %v744, %v720
      %v817 = vmul.f32 %v745, %v721
      %v818 = vmul.f32 %v746, %v722
      %v819 = vmul.f32 %v763, %v707
      %v820 = vmul.f32 %v764, %v708
      %v821 = vmul.f32 %v765, %v709
      %v822 = vmul.f32 %v766, %v710
      %v823 = vmul.f32 %v767, %v711
      %v824 = vmul.f32 %v768, %v712
      %v825 = vmul.f32 %v769, %v713
      %v826 = vmul.f32 %v770, %v714
      %v827 = vadd.f32 %v811, %v819
      %v828 = vadd.f32 %v812, %v820
      %v829 = vadd.f32 %v813, %v821
      %v830 = vadd.f32 %v814, %v822
      %v831 = vadd.f32 %v815, %v823
      %v832 = vadd.f32 %v816, %v824
      %v833 = vadd.f32 %v817, %v825
      %v834 = vadd.f32 %v818, %v826
      %v835 = vsel %vm795, %v827, 0.0
      %v836 = vsel %vm795, %v828, 0.0
      %v837 = vadd.f32 %v835, %v836
      %v838 = vsel %vm795, %v829, 0.0
      %v839 = vadd.f32 %v837, %v838
      %v840 = vsel %vm795, %v830, 0.0
      %v841 = vadd.f32 %v839, %v840
      %v842 = vsel %vm795, %v831, 0.0
      %v843 = vadd.f32 %v841, %v842
      %v844 = vsel %vm795, %v832, 0.0
      %v845 = vadd.f32 %v843, %v844
      %v846 = vsel %vm795, %v833, 0.0
      %v847 = vadd.f32 %v845, %v846
      %v848 = vsel %vm795, %v834, 0.0
      %v849 = vadd.f32 %v847, %v848
      %v850 = vld [vmem:[%s3] sm:$0xff]
      %v851 = vld [vmem:[%s3 + $0x8] sm:$0xff]
      %v852 = vld [vmem:[%s3 + $0x10] sm:$0xff]
      %v853 = vld [vmem:[%s3 + $0x18] sm:$0xff]
      %v854 = vld [vmem:[%s3 + $0x20] sm:$0xff]
      %v855 = vld [vmem:[%s3 + $0x28] sm:$0xff]
      %v856 = vld [vmem:[%s3 + $0x30] sm:$0xff]
      %v857 = vld [vmem:[%s3 + $0x38] sm:$0xff]
      %v858 = vld [vmem:[%s3 + $0x40] sm:$0xff]
      %v859 = vld [vmem:[%s3 + $0x48] sm:$0xff]
      %v860 = vld [vmem:[%s3 + $0x50] sm:$0xff]
      %v861 = vld [vmem:[%s3 + $0x58] sm:$0xff]
      %v862 = vld [vmem:[%s3 + $0x60] sm:$0xff]
      %v863 = vld [vmem:[%s3 + $0x68] sm:$0xff]
      %v864 = vld [vmem:[%s3 + $0x70] sm:$0xff]
      %v865 = vld [vmem:[%s3 + $0x78] sm:$0xff]
      %v866 = vld [vmem:[%s3 + $0x80] sm:$0xff]
      %v867 = vld [vmem:[%s3 + $0x88] sm:$0xff]
      %v868 = vld [vmem:[%s3 + $0x90] sm:$0xff]
      %v869 = vld [vmem:[%s3 + $0x98] sm:$0xff]
      %v870 = vld [vmem:[%s3 + $0xa0] sm:$0xff]
      %v871 = vld [vmem:[%s3 + $0xa8] sm:$0xff]
      %v872 = vld [vmem:[%s3 + $0xb0] sm:$0xff]
      %v873 = vld [vmem:[%s3 + $0xb8] sm:$0xff]
      %v874 = vld [vmem:[%s3 + $0xc0] sm:$0xff]
      %v875 = vld [vmem:[%s3 + $0xc8] sm:$0xff]
      %v876 = vld [vmem:[%s3 + $0xd0] sm:$0xff]
      %v877 = vld [vmem:[%s3 + $0xd8] sm:$0xff]
      %v878 = vld [vmem:[%s3 + $0xe0] sm:$0xff]
      %v879 = vld [vmem:[%s3 + $0xe8] sm:$0xff]
      %v880 = vld [vmem:[%s3 + $0xf0] sm:$0xff]
      %v881 = vld [vmem:[%s3 + $0xf8] sm:$0xff]
      %v882 = vld [vmem:[%s3 + $0x100] sm:$0xff]
      %v883 = vld [vmem:[%s3 + $0x108] sm:$0xff]
      %v884 = vld [vmem:[%s3 + $0x110] sm:$0xff]
      %v885 = vld [vmem:[%s3 + $0x118] sm:$0xff]
      %v886 = vld [vmem:[%s3 + $0x120] sm:$0xff]
      %v887 = vld [vmem:[%s3 + $0x128] sm:$0xff]
      %v888 = vld [vmem:[%s3 + $0x130] sm:$0xff]
      %v889 = vld [vmem:[%s3 + $0x138] sm:$0xff]
      %v890 = vld [vmem:[%s3 + $0x140] sm:$0xff]
      %v891 = vld [vmem:[%s3 + $0x148] sm:$0xff]
      %v892 = vld [vmem:[%s3 + $0x150] sm:$0xff]
      %v893 = vld [vmem:[%s3 + $0x158] sm:$0xff]
      %v894 = vld [vmem:[%s3 + $0x160] sm:$0xff]
      %v896 = vsel %vm795, %v810, 0
      %898 = vmatpush.msra.mxu0 0.0
      %899 = vmatpush.msra.mxu0 0.0
      %900 = vmatpush.msra.mxu0 0.0
      %901 = vmatpush.msra.mxu0 0.0
      %902 = vmatpush.msra.mxu0 0.0
      %903 = vmatpush.msra.mxu0 0.0
      %904 = vmatpush.msra.mxu0 0.0
      %905 = vmatpush.msra.mxu0 %v890
      %906 = vmatpush.msra.mxu0 %v885
      %907 = vmatpush.msra.mxu0 %v880
      %908 = vmatpush.msra.mxu0 %v875
      %909 = vmatpush.msra.mxu0 %v870
      %910 = vmatpush.msra.mxu0 %v865
      %911 = vmatpush.msra.mxu0 %v860
      %912 = vmatpush.msra.mxu0 %v855
      %913 = vmatpush.msra.mxu0 %v850
      %914 = vmatmul.f32.gmra.mxu0 %v896
      %v915 = vpop.f32.mrf.mxu0
      %v916 = vadd.f32 0.0, %v915
      %917 = vdwg.mxu0
      %918 = vmatpush.msra.mxu0 0.0
      %919 = vmatpush.msra.mxu0 0.0
      %920 = vmatpush.msra.mxu0 0.0
      %921 = vmatpush.msra.mxu0 0.0
      %922 = vmatpush.msra.mxu0 0.0
      %923 = vmatpush.msra.mxu0 0.0
      %924 = vmatpush.msra.mxu0 0.0
      %925 = vmatpush.msra.mxu0 %v891
      %926 = vmatpush.msra.mxu0 %v886
      %927 = vmatpush.msra.mxu0 %v881
      %928 = vmatpush.msra.mxu0 %v876
      %929 = vmatpush.msra.mxu0 %v871
      %930 = vmatpush.msra.mxu0 %v866
      %931 = vmatpush.msra.mxu0 %v861
      %932 = vmatpush.msra.mxu0 %v856
      %933 = vmatpush.msra.mxu0 %v851
      %934 = vmatmul.f32.gmra.mxu0 %v896
      %v935 = vpop.f32.mrf.mxu0
      %v936 = vadd.f32 0.0, %v935
      %937 = vdwg.mxu0
      %938 = vmatpush.msra.mxu0 0.0
      %939 = vmatpush.msra.mxu0 0.0
      %940 = vmatpush.msra.mxu0 0.0
      %941 = vmatpush.msra.mxu0 0.0
      %942 = vmatpush.msra.mxu0 0.0
      %943 = vmatpush.msra.mxu0 0.0
      %944 = vmatpush.msra.mxu0 0.0
      %945 = vmatpush.msra.mxu0 %v892
      %946 = vmatpush.msra.mxu0 %v887
      %947 = vmatpush.msra.mxu0 %v882
      %948 = vmatpush.msra.mxu0 %v877
      %949 = vmatpush.msra.mxu0 %v872
      %950 = vmatpush.msra.mxu0 %v867
      %951 = vmatpush.msra.mxu0 %v862
      %952 = vmatpush.msra.mxu0 %v857
      %953 = vmatpush.msra.mxu0 %v852
      %954 = vmatmul.f32.gmra.mxu0 %v896
      %v955 = vpop.f32.mrf.mxu0
      %v956 = vadd.f32 0.0, %v955
      %957 = vdwg.mxu0
      %958 = vmatpush.msra.mxu0 0.0
      %959 = vmatpush.msra.mxu0 0.0
      %960 = vmatpush.msra.mxu0 0.0
      %961 = vmatpush.msra.mxu0 0.0
      %962 = vmatpush.msra.mxu0 0.0
      %963 = vmatpush.msra.mxu0 0.0
      %964 = vmatpush.msra.mxu0 0.0
      %965 = vmatpush.msra.mxu0 %v893
      %966 = vmatpush.msra.mxu0 %v888
      %967 = vmatpush.msra.mxu0 %v883
      %968 = vmatpush.msra.mxu0 %v878
      %969 = vmatpush.msra.mxu0 %v873
      %970 = vmatpush.msra.mxu0 %v868
      %971 = vmatpush.msra.mxu0 %v863
      %972 = vmatpush.msra.mxu0 %v858
      %973 = vmatpush.msra.mxu0 %v853
      %974 = vmatmul.f32.gmra.mxu0 %v896
      %v975 = vpop.f32.mrf.mxu0
      %v976 = vadd.f32 0.0, %v975
      %977 = vdwg.mxu0
      %978 = vmatpush.msra.mxu0 0.0
      %979 = vmatpush.msra.mxu0 0.0
      %980 = vmatpush.msra.mxu0 0.0
      %981 = vmatpush.msra.mxu0 0.0
      %982 = vmatpush.msra.mxu0 0.0
      %983 = vmatpush.msra.mxu0 0.0
      %984 = vmatpush.msra.mxu0 0.0
      %985 = vmatpush.msra.mxu0 %v894
      %986 = vmatpush.msra.mxu0 %v889
      %987 = vmatpush.msra.mxu0 %v884
      %988 = vmatpush.msra.mxu0 %v879
      %989 = vmatpush.msra.mxu0 %v874
      %990 = vmatpush.msra.mxu0 %v869
      %991 = vmatpush.msra.mxu0 %v864
      %992 = vmatpush.msra.mxu0 %v859
      %993 = vmatpush.msra.mxu0 %v854
      %994 = vmatmul.f32.gmra.mxu0 %v896
      %v995 = vpop.f32.mrf.mxu0
      %v996 = vadd.f32 0.0, %v995
      %997 = vdwg.mxu0
      %v998 = vld [vmem:[%s4] sm:$0xff]
      %v999 = vld [vmem:[%s4 + $0x8] sm:$0xff]
      %v1000 = vld [vmem:[%s4 + $0x10] sm:$0xff]
      %v1001 = vld [vmem:[%s4 + $0x18] sm:$0xff]
      %v1002 = vld [vmem:[%s4 + $0x20] sm:$0xff]
      %v1003 = vld [vmem:[%s4 + $0x28] sm:$0xff]
      %v1004 = vld [vmem:[%s4 + $0x30] sm:$0xff]
      %v1005 = vld [vmem:[%s4 + $0x38] sm:$0xff]
      %v1006 = vld [vmem:[%s4 + $0x40] sm:$0xff]
      %v1007 = vld [vmem:[%s4 + $0x48] sm:$0xff]
      %v1008 = vld [vmem:[%s4 + $0x50] sm:$0xff]
      %v1009 = vld [vmem:[%s4 + $0x58] sm:$0xff]
      %v1010 = vld [vmem:[%s4 + $0x60] sm:$0xff]
      %v1011 = vld [vmem:[%s4 + $0x68] sm:$0xff]
      %v1012 = vld [vmem:[%s4 + $0x70] sm:$0xff]
      %v1013 = vld [vmem:[%s4 + $0x78] sm:$0xff]
      %v1014 = vld [vmem:[%s4 + $0x80] sm:$0xff]
      %v1015 = vld [vmem:[%s4 + $0x88] sm:$0xff]
      %v1016 = vld [vmem:[%s4 + $0x90] sm:$0xff]
      %v1017 = vld [vmem:[%s4 + $0x98] sm:$0xff]
      %v1018 = vld [vmem:[%s4 + $0xa0] sm:$0xff]
      %v1019 = vld [vmem:[%s4 + $0xa8] sm:$0xff]
      %v1020 = vld [vmem:[%s4 + $0xb0] sm:$0xff]
      %v1021 = vld [vmem:[%s4 + $0xb8] sm:$0xff]
      %v1022 = vld [vmem:[%s4 + $0xc0] sm:$0xff]
      %v1023 = vld [vmem:[%s4 + $0xc8] sm:$0xff]
      %v1024 = vld [vmem:[%s4 + $0xd0] sm:$0xff]
      %v1025 = vld [vmem:[%s4 + $0xd8] sm:$0xff]
      %v1026 = vld [vmem:[%s4 + $0xe0] sm:$0xff]
      %v1027 = vld [vmem:[%s4 + $0xe8] sm:$0xff]
      %v1028 = vld [vmem:[%s4 + $0xf0] sm:$0xff]
      %v1029 = vld [vmem:[%s4 + $0xf8] sm:$0xff]
      %v1030 = vld [vmem:[%s4 + $0x100] sm:$0xff]
      %v1031 = vld [vmem:[%s4 + $0x108] sm:$0xff]
      %v1032 = vld [vmem:[%s4 + $0x110] sm:$0xff]
      %v1033 = vld [vmem:[%s4 + $0x118] sm:$0xff]
      %v1034 = vld [vmem:[%s4 + $0x120] sm:$0xff]
      %v1035 = vld [vmem:[%s4 + $0x128] sm:$0xff]
      %v1036 = vld [vmem:[%s4 + $0x130] sm:$0xff]
      %v1037 = vld [vmem:[%s4 + $0x138] sm:$0xff]
      %v1038 = vld [vmem:[%s4 + $0x140] sm:$0xff]
      %v1039 = vld [vmem:[%s4 + $0x148] sm:$0xff]
      %v1040 = vld [vmem:[%s4 + $0x150] sm:$0xff]
      %v1041 = vld [vmem:[%s4 + $0x158] sm:$0xff]
      %v1042 = vld [vmem:[%s4 + $0x160] sm:$0xff]
      %v1044 = vsel %vm795, %v849, 0
      %1046 = vmatpush.msra.mxu0 0.0
      %1047 = vmatpush.msra.mxu0 0.0
      %1048 = vmatpush.msra.mxu0 0.0
      %1049 = vmatpush.msra.mxu0 0.0
      %1050 = vmatpush.msra.mxu0 0.0
      %1051 = vmatpush.msra.mxu0 0.0
      %1052 = vmatpush.msra.mxu0 0.0
      %1053 = vmatpush.msra.mxu0 %v1038
      %1054 = vmatpush.msra.mxu0 %v1033
      %1055 = vmatpush.msra.mxu0 %v1028
      %1056 = vmatpush.msra.mxu0 %v1023
      %1057 = vmatpush.msra.mxu0 %v1018
      %1058 = vmatpush.msra.mxu0 %v1013
      %1059 = vmatpush.msra.mxu0 %v1008
      %1060 = vmatpush.msra.mxu0 %v1003
      %1061 = vmatpush.msra.mxu0 %v998
      %1062 = vmatmul.f32.gmra.mxu0 %v1044
      %v1063 = vpop.f32.mrf.mxu0
      %v1064 = vadd.f32 0.0, %v1063
      %1065 = vdwg.mxu0
      %1066 = vmatpush.msra.mxu0 0.0
      %1067 = vmatpush.msra.mxu0 0.0
      %1068 = vmatpush.msra.mxu0 0.0
      %1069 = vmatpush.msra.mxu0 0.0
      %1070 = vmatpush.msra.mxu0 0.0
      %1071 = vmatpush.msra.mxu0 0.0
      %1072 = vmatpush.msra.mxu0 0.0
      %1073 = vmatpush.msra.mxu0 %v1039
      %1074 = vmatpush.msra.mxu0 %v1034
      %1075 = vmatpush.msra.mxu0 %v1029
      %1076 = vmatpush.msra.mxu0 %v1024
      %1077 = vmatpush.msra.mxu0 %v1019
      %1078 = vmatpush.msra.mxu0 %v1014
      %1079 = vmatpush.msra.mxu0 %v1009
      %1080 = vmatpush.msra.mxu0 %v1004
      %1081 = vmatpush.msra.mxu0 %v999
      %1082 = vmatmul.f32.gmra.mxu0 %v1044
      %v1083 = vpop.f32.mrf.mxu0
      %v1084 = vadd.f32 0.0, %v1083
      %1085 = vdwg.mxu0
      %1086 = vmatpush.msra.mxu0 0.0
      %1087 = vmatpush.msra.mxu0 0.0
      %1088 = vmatpush.msra.mxu0 0.0
      %1089 = vmatpush.msra.mxu0 0.0
      %1090 = vmatpush.msra.mxu0 0.0
      %1091 = vmatpush.msra.mxu0 0.0
      %1092 = vmatpush.msra.mxu0 0.0
      %1093 = vmatpush.msra.mxu0 %v1040
      %1094 = vmatpush.msra.mxu0 %v1035
      %1095 = vmatpush.msra.mxu0 %v1030
      %1096 = vmatpush.msra.mxu0 %v1025
      %1097 = vmatpush.msra.mxu0 %v1020
      %1098 = vmatpush.msra.mxu0 %v1015
      %1099 = vmatpush.msra.mxu0 %v1010
      %1100 = vmatpush.msra.mxu0 %v1005
      %1101 = vmatpush.msra.mxu0 %v1000
      %1102 = vmatmul.f32.gmra.mxu0 %v1044
      %v1103 = vpop.f32.mrf.mxu0
      %v1104 = vadd.f32 0.0, %v1103
      %1105 = vdwg.mxu0
      %1106 = vmatpush.msra.mxu0 0.0
      %1107 = vmatpush.msra.mxu0 0.0
      %1108 = vmatpush.msra.mxu0 0.0
      %1109 = vmatpush.msra.mxu0 0.0
      %1110 = vmatpush.msra.mxu0 0.0
      %1111 = vmatpush.msra.mxu0 0.0
      %1112 = vmatpush.msra.mxu0 0.0
      %1113 = vmatpush.msra.mxu0 %v1041
      %1114 = vmatpush.msra.mxu0 %v1036
      %1115 = vmatpush.msra.mxu0 %v1031
      %1116 = vmatpush.msra.mxu0 %v1026
      %1117 = vmatpush.msra.mxu0 %v1021
      %1118 = vmatpush.msra.mxu0 %v1016
      %1119 = vmatpush.msra.mxu0 %v1011
      %1120 = vmatpush.msra.mxu0 %v1006
      %1121 = vmatpush.msra.mxu0 %v1001
      %1122 = vmatmul.f32.gmra.mxu0 %v1044
      %v1123 = vpop.f32.mrf.mxu0
      %v1124 = vadd.f32 0.0, %v1123
      %1125 = vdwg.mxu0
      %1126 = vmatpush.msra.mxu0 0.0
      %1127 = vmatpush.msra.mxu0 0.0
      %1128 = vmatpush.msra.mxu0 0.0
      %1129 = vmatpush.msra.mxu0 0.0
      %1130 = vmatpush.msra.mxu0 0.0
      %1131 = vmatpush.msra.mxu0 0.0
      %1132 = vmatpush.msra.mxu0 0.0
      %1133 = vmatpush.msra.mxu0 %v1042
      %1134 = vmatpush.msra.mxu0 %v1037
      %1135 = vmatpush.msra.mxu0 %v1032
      %1136 = vmatpush.msra.mxu0 %v1027
      %1137 = vmatpush.msra.mxu0 %v1022
      %1138 = vmatpush.msra.mxu0 %v1017
      %1139 = vmatpush.msra.mxu0 %v1012
      %1140 = vmatpush.msra.mxu0 %v1007
      %1141 = vmatpush.msra.mxu0 %v1002
      %1142 = vmatmul.f32.gmra.mxu0 %v1044
      %v1143 = vpop.f32.mrf.mxu0
      %v1144 = vadd.f32 0.0, %v1143
      %1145 = vdwg.mxu0
      %v1146 = vsub.f32 %v916, %v1064
      %v1147 = vsub.f32 %v936, %v1084
      %v1148 = vsub.f32 %v956, %v1104
      %v1149 = vsub.f32 %v976, %v1124
      %v1150 = vsub.f32 %v996, %v1144
      %v1151 = vld [vmem:[%s7] sm:$0xff]
      %vm1152 = vcmask 64512
      %v1154 = vsel %vm1152, %v1151, 0
      %1156 = vmatpush.msra.mxu0 0.0
      %1157 = vmatpush.msra.mxu0 0.0
      %1158 = vmatpush.msra.mxu0 0.0
      %1159 = vmatpush.msra.mxu0 0.0
      %1160 = vmatpush.msra.mxu0 0.0
      %1161 = vmatpush.msra.mxu0 0.0
      %1162 = vmatpush.msra.mxu0 0.0
      %1163 = vmatpush.msra.mxu0 0.0
      %1164 = vmatpush.msra.mxu0 0.0
      %1165 = vmatpush.msra.mxu0 0.0
      %1166 = vmatpush.msra.mxu0 0.0
      %1167 = vmatpush.msra.mxu0 0.0
      %1168 = vmatpush.msra.mxu0 0.0
      %1169 = vmatpush.msra.mxu0 0.0
      %1170 = vmatpush.msra.mxu0 0.0
      %1171 = vmatpush.msra.mxu0 %v333
      %1172 = vmatmul.f32.gmra.mxu0 %v1154
      %v1173 = vpop.f32.mrf.mxu0
      %v1174 = vadd.f32 0.0, %v1173
      %1175 = vdwg.mxu0
      %1176 = vmatpush.msra.mxu0 0.0
      %1177 = vmatpush.msra.mxu0 0.0
      %1178 = vmatpush.msra.mxu0 0.0
      %1179 = vmatpush.msra.mxu0 0.0
      %1180 = vmatpush.msra.mxu0 0.0
      %1181 = vmatpush.msra.mxu0 0.0
      %1182 = vmatpush.msra.mxu0 0.0
      %1183 = vmatpush.msra.mxu0 0.0
      %1184 = vmatpush.msra.mxu0 0.0
      %1185 = vmatpush.msra.mxu0 0.0
      %1186 = vmatpush.msra.mxu0 0.0
      %1187 = vmatpush.msra.mxu0 0.0
      %1188 = vmatpush.msra.mxu0 0.0
      %1189 = vmatpush.msra.mxu0 0.0
      %1190 = vmatpush.msra.mxu0 0.0
      %1191 = vmatpush.msra.mxu0 %v334
      %1192 = vmatmul.f32.gmra.mxu0 %v1154
      %v1193 = vpop.f32.mrf.mxu0
      %v1194 = vadd.f32 0.0, %v1193
      %1195 = vdwg.mxu0
      %1196 = vmatpush.msra.mxu0 0.0
      %1197 = vmatpush.msra.mxu0 0.0
      %1198 = vmatpush.msra.mxu0 0.0
      %1199 = vmatpush.msra.mxu0 0.0
      %1200 = vmatpush.msra.mxu0 0.0
      %1201 = vmatpush.msra.mxu0 0.0
      %1202 = vmatpush.msra.mxu0 0.0
      %1203 = vmatpush.msra.mxu0 0.0
      %1204 = vmatpush.msra.mxu0 0.0
      %1205 = vmatpush.msra.mxu0 0.0
      %1206 = vmatpush.msra.mxu0 0.0
      %1207 = vmatpush.msra.mxu0 0.0
      %1208 = vmatpush.msra.mxu0 0.0
      %1209 = vmatpush.msra.mxu0 0.0
      %1210 = vmatpush.msra.mxu0 0.0
      %1211 = vmatpush.msra.mxu0 %v335
      %1212 = vmatmul.f32.gmra.mxu0 %v1154
      %v1213 = vpop.f32.mrf.mxu0
      %v1214 = vadd.f32 0.0, %v1213
      %1215 = vdwg.mxu0
      %1216 = vmatpush.msra.mxu0 0.0
      %1217 = vmatpush.msra.mxu0 0.0
      %1218 = vmatpush.msra.mxu0 0.0
      %1219 = vmatpush.msra.mxu0 0.0
      %1220 = vmatpush.msra.mxu0 0.0
      %1221 = vmatpush.msra.mxu0 0.0
      %1222 = vmatpush.msra.mxu0 0.0
      %1223 = vmatpush.msra.mxu0 0.0
      %1224 = vmatpush.msra.mxu0 0.0
      %1225 = vmatpush.msra.mxu0 0.0
      %1226 = vmatpush.msra.mxu0 0.0
      %1227 = vmatpush.msra.mxu0 0.0
      %1228 = vmatpush.msra.mxu0 0.0
      %1229 = vmatpush.msra.mxu0 0.0
      %1230 = vmatpush.msra.mxu0 0.0
      %1231 = vmatpush.msra.mxu0 %v336
      %1232 = vmatmul.f32.gmra.mxu0 %v1154
      %v1233 = vpop.f32.mrf.mxu0
      %v1234 = vadd.f32 0.0, %v1233
      %1235 = vdwg.mxu0
      %1236 = vmatpush.msra.mxu0 0.0
      %1237 = vmatpush.msra.mxu0 0.0
      %1238 = vmatpush.msra.mxu0 0.0
      %1239 = vmatpush.msra.mxu0 0.0
      %1240 = vmatpush.msra.mxu0 0.0
      %1241 = vmatpush.msra.mxu0 0.0
      %1242 = vmatpush.msra.mxu0 0.0
      %1243 = vmatpush.msra.mxu0 0.0
      %1244 = vmatpush.msra.mxu0 0.0
      %1245 = vmatpush.msra.mxu0 0.0
      %1246 = vmatpush.msra.mxu0 0.0
      %1247 = vmatpush.msra.mxu0 0.0
      %1248 = vmatpush.msra.mxu0 0.0
      %1249 = vmatpush.msra.mxu0 0.0
      %1250 = vmatpush.msra.mxu0 0.0
      %1251 = vmatpush.msra.mxu0 %v337
      %1252 = vmatmul.f32.gmra.mxu0 %v1154
      %v1253 = vpop.f32.mrf.mxu0
      %v1254 = vadd.f32 0.0, %v1253
      %1255 = vdwg.mxu0
      %v1256 = vadd.f32 %v1146, %v1174
      %v1257 = vadd.f32 %v1147, %v1194
      %v1258 = vadd.f32 %v1148, %v1214
      %v1259 = vadd.f32 %v1149, %v1234
      %v1260 = vadd.f32 %v1150, %v1254
      %v1261 = vld [vmem:[%s8] sm:$0xff]
      %1263 = vset.pattern.permute.xlu0 0
      %1264 = vperm.xlu0 %1263, %v1261
      %v1265 = vpop.permute.xlu0 %1264
      %v1267 = vadd.f32 %v1256, %v1265
      %v1268 = vadd.f32 %v1257, %v1265
      %v1269 = vadd.f32 %v1258, %v1265
      %v1270 = vadd.f32 %v1259, %v1265
      %v1271 = vadd.f32 %v1260, %v1265
      %1272 = vst [vmem:[%s332] sm:$0xff] %v1267
      %1273 = vst [vmem:[%s332 + $0x8] sm:$0xff] %v1268
      %1274 = vst [vmem:[%s332 + $0x10] sm:$0xff] %v1269
      %1275 = vst [vmem:[%s332 + $0x18] sm:$0xff] %v1270
      %1276 = vst.msk [vmem:[%s332 + $0x20] sm:$0xff] %vm417, %v1271
      %p1277 = scmp.lt.s32.totalorder %s20, 1
      %s1278 = scalar_select %p1277, %s20, 1
      %s1279 = smul.addr %s1278, 5
      %s1280 = smul.addr %s1279, 8
      %s1281 = scalar_lea.vmem %s9, %s1280
      // Predicated region
      $region57: #{trans_net_forward.10} parent=55 // pred_check
        %p1282 = pneg %p232
      $region58: #{trans_net_forward.10} parent=55 // pred_check_branch
        %1284 = sbr.rel (%p1282) target = $region60
      $region59: #{trans_net_forward.10} parent=55 // pred_region
        _
      $region60: #{trans_net_forward.10} parent=55 // pred_fallthru
        _
    $region56: #{trans_net_forward.10} parent=5 // pred_fallthru
      _
    %p1285 = scmp.le.s32.totalorder 2, %s15
    // Predicated region
    $region61: #{trans_net_forward.10} parent=5 // pred_check
      %p1286 = pneg %p1285
    $region62: #{trans_net_forward.10} parent=5 // pred_check_branch
      %1288 = sbr.rel (%p1286) target = $region64
    $region63: #{trans_net_forward.10} parent=5 // pred_region
      %s1289 = ssub.s32 %s15, 2
      // Predicated region
      $region65: #{trans_net_forward.10} parent=63 // pred_check
        %p1290 = pneg %p238
      $region66: #{trans_net_forward.10} parent=63 // pred_check_branch
        %1292 = sbr.rel (%p1290) target = $region68
      $region67: #{trans_net_forward.10} parent=63 // pred_region
        %p1293 = scmp.lt.s32.totalorder %s21, 1
        %s1294 = scalar_select %p1293, %s21, 1
        %s1295 = smul.addr %s1294, 5
        %s1296 = smul.addr %s1295, 8
        %s1297 = scalar_lea.vmem %s9, %s1296
      $region68: #{trans_net_forward.10} parent=63 // pred_fallthru
        _
    $region64: #{trans_net_forward.10} parent=5 // pred_fallthru
      _
  $region6: #{trans_net_forward.10} parent=0 // loop_footer
    %s19 = sadd.s32 1, %s15
  $region7: #{trans_net_forward.10} parent=0 // loop_footer_branch
    %14 = sbr.rel target = $region3
  $region8: #{trans_net_forward.10} parent=0 // loop_exit
    _

// kernel: trans_net_forward.11
$region0: #{trans_net_forward.11}
  #allocation0 [shape = 'u32[]', space=smem, size = 0x4, offset = 0x4, fixed_abs, tag = 'smem constant byte address 0x4 - core index']
  #allocation1 [shape = 'u32[72,128]{1,0:T(1,128)}', space=vmem, size = 0x9000, scoped, tag = 'internal scratch']
  %s0 = inlined_call_operand.vmem [shape: f32[2,8,256], index: 0, kind: input, shape index: {}]
  %s1 = inlined_call_operand.vmem [shape: f32[128,8], index: 1, kind: input, shape index: {}]
  %s2 = inlined_call_operand.vmem [shape: f32[128,1], index: 2, kind: input, shape index: {}]
  %s3 = inlined_call_operand.vmem [shape: f32[3,128], index: 3, kind: input, shape index: {}]
  %s4 = inlined_call_operand.vmem [shape: f32[3,1], index: 4, kind: input, shape index: {}]
  %s5 = inlined_call_operand.vmem [shape: f32[2,3,256], index: 5, kind: output, shape index: {}]
  %s6 = sld [smem:[#allocation0]]
  $region53: #{trans_net_forward.11} parent=0
    _
  %s8 = ssub.s32 1, %s6
  %s9 = scalar_select 0, %s8, %s6
  loop: start=0, step=1, limit=4
  $region2: #{trans_net_forward.11} parent=0 // loop_pre_header
    _
  $region3: #{trans_net_forward.11} parent=0 // loop_header
    %s11 = sphi 0, %s15
    %p12 = scmp.ge.s32.totalorder %s11, 4
    %s21 = sphi 0, %s23
    %s24 = sphi 0, %s21
    %s25 = sphi 0, %s24
    %s41 = sphi 0, %s25
    %s45 = sphi 0, %s45
    %s47 = sphi 0, %s45
    %s48 = sphi 0, %s47
    %s62 = sphi 0, %s48
    %s66 = sphi 0, %s66
    %s68 = sphi 0, %s66
    %s69 = sphi 0, %s68
    %s83 = sphi 0, %s69
    %s87 = sphi 0, %s87
    %s89 = sphi 0, %s87
    %s90 = sphi 0, %s89
    %s104 = sphi 0, %s90
    %s108 = sphi 0, %s108
    %s110 = sphi 0, %s108
    %s111 = sphi 0, %s110
    %s125 = sphi 0, %s111
    %s131 = sphi 0, %s133
    %s134 = sphi 0, %s131
    %s135 = sphi 0, %s134
    %s151 = sphi 0, %s135
  $region4: #{trans_net_forward.11} parent=0 // loop_header_branch
    %14 = sbr.rel (%p12) target = $region8
  $region5: #{trans_net_forward.11} parent=0 // loop_body
    %s16 = ssub.s32 %s11, 1
    %s17 = ssub.s32 %s11, 2
    %s18 = sadd.s32 %s11, 1
    %s19 = ssub.s32 %s11, %s18
    %p20 = scmp.eq.s32.totalorder %s19, 0
    %s22 = sadd.s32 %s21, 1
    %s23 = scalar_select %p20, %s21, %s22
    %p26 = pneg %p20
    %p27 = scmp.eq.s32.totalorder %s11, 1
    %p28 = por %p26, %p27
    %p29 = scmp.ne.s32.totalorder %s21, %s24
    %p30 = scmp.eq.s32.totalorder %s11, 0
    %p31 = por %p29, %p30
    %p32 = scmp.ne.s32.totalorder %s21, %s24
    %p33 = scmp.eq.s32.totalorder %s16, 1
    %p34 = por %p32, %p33
    %p35 = scmp.ne.s32.totalorder %s24, %s25
    %p36 = scmp.eq.s32.totalorder %s16, 0
    %p37 = por %p35, %p36
    %p38 = scmp.ne.s32.totalorder %s24, %s25
    %p39 = scmp.eq.s32.totalorder %s17, 1
    %p40 = por %p38, %p39
    %p42 = scmp.ne.s32.totalorder %s25, %s41
    %p43 = scmp.eq.s32.totalorder %s17, 0
    %p44 = por %p42, %p43
    %s46 = sadd.s32 %s45, 1
    %p49 = scmp.eq.s32.totalorder %s11, 1
    %p50 = scmp.ne.s32.totalorder %s45, %s47
    %p51 = scmp.eq.s32.totalorder %s11, 0
    %p52 = por %p50, %p51
    %p53 = scmp.ne.s32.totalorder %s45, %s47
    %p54 = scmp.eq.s32.totalorder %s16, 1
    %p55 = por %p53, %p54
    %p56 = scmp.ne.s32.totalorder %s47, %s48
    %p57 = scmp.eq.s32.totalorder %s16, 0
    %p58 = por %p56, %p57
    %p59 = scmp.ne.s32.totalorder %s47, %s48
    %p60 = scmp.eq.s32.totalorder %s17, 1
    %p61 = por %p59, %p60
    %p63 = scmp.ne.s32.totalorder %s48, %s62
    %p64 = scmp.eq.s32.totalorder %s17, 0
    %p65 = por %p63, %p64
    %s67 = sadd.s32 %s66, 1
    %p70 = scmp.eq.s32.totalorder %s11, 1
    %p71 = scmp.ne.s32.totalorder %s66, %s68
    %p72 = scmp.eq.s32.totalorder %s11, 0
    %p73 = por %p71, %p72
    %p74 = scmp.ne.s32.totalorder %s66, %s68
    %p75 = scmp.eq.s32.totalorder %s16, 1
    %p76 = por %p74, %p75
    %p77 = scmp.ne.s32.totalorder %s68, %s69
    %p78 = scmp.eq.s32.totalorder %s16, 0
    %p79 = por %p77, %p78
    %p80 = scmp.ne.s32.totalorder %s68, %s69
    %p81 = scmp.eq.s32.totalorder %s17, 1
    %p82 = por %p80, %p81
    %p84 = scmp.ne.s32.totalorder %s69, %s83
    %p85 = scmp.eq.s32.totalorder %s17, 0
    %p86 = por %p84, %p85
    %s88 = sadd.s32 %s87, 1
    %p91 = scmp.eq.s32.totalorder %s11, 1
    %p92 = scmp.ne.s32.totalorder %s87, %s89
    %p93 = scmp.eq.s32.totalorder %s11, 0
    %p94 = por %p92, %p93
    %p95 = scmp.ne.s32.totalorder %s87, %s89
    %p96 = scmp.eq.s32.totalorder %s16, 1
    %p97 = por %p95, %p96
    %p98 = scmp.ne.s32.totalorder %s89, %s90
    %p99 = scmp.eq.s32.totalorder %s16, 0
    %p100 = por %p98, %p99
    %p101 = scmp.ne.s32.totalorder %s89, %s90
    %p102 = scmp.eq.s32.totalorder %s17, 1
    %p103 = por %p101, %p102
    %p105 = scmp.ne.s32.totalorder %s90, %s104
    %p106 = scmp.eq.s32.totalorder %s17, 0
    %p107 = por %p105, %p106
    %s109 = sadd.s32 %s108, 1
    %p112 = scmp.eq.s32.totalorder %s11, 1
    %p113 = scmp.ne.s32.totalorder %s108, %s110
    %p114 = scmp.eq.s32.totalorder %s11, 0
    %p115 = por %p113, %p114
    %p116 = scmp.ne.s32.totalorder %s108, %s110
    %p117 = scmp.eq.s32.totalorder %s16, 1
    %p118 = por %p116, %p117
    %p119 = scmp.ne.s32.totalorder %s110, %s111
    %p120 = scmp.eq.s32.totalorder %s16, 0
    %p121 = por %p119, %p120
    %p122 = scmp.ne.s32.totalorder %s110, %s111
    %p123 = scmp.eq.s32.totalorder %s17, 1
    %p124 = por %p122, %p123
    %p126 = scmp.ne.s32.totalorder %s111, %s125
    %p127 = scmp.eq.s32.totalorder %s17, 0
    %p128 = por %p126, %p127
    %s129 = ssub.s32 %s11, %s18
    %p130 = scmp.eq.s32.totalorder %s129, 0
    %s132 = sadd.s32 %s131, 1
    %s133 = scalar_select %p130, %s131, %s132
    %p136 = pneg %p130
    %p137 = scmp.eq.s32.totalorder %s11, 1
    %p138 = por %p136, %p137
    %p139 = scmp.ne.s32.totalorder %s131, %s134
    %p140 = scmp.eq.s32.totalorder %s11, 0
    %p141 = por %p139, %p140
    %p142 = scmp.ne.s32.totalorder %s131, %s134
    %p143 = scmp.eq.s32.totalorder %s16, 1
    %p144 = por %p142, %p143
    %p145 = scmp.ne.s32.totalorder %s134, %s135
    %p146 = scmp.eq.s32.totalorder %s16, 0
    %p147 = por %p145, %p146
    %p148 = scmp.ne.s32.totalorder %s134, %s135
    %p149 = scmp.eq.s32.totalorder %s17, 1
    %p150 = por %p148, %p149
    %p152 = scmp.ne.s32.totalorder %s135, %s151
    %p153 = scmp.eq.s32.totalorder %s17, 0
    %p154 = por %p152, %p153
    %p155 = scmp.le.s32.totalorder 1, %s11
    %p156 = scmp.lt.s32.totalorder %s11, 3
    %p157 = pnand %p155, %p156
    %p158 = pneg %p157
    // Predicated region
    $region9: #{trans_net_forward.11} parent=5 // pred_check
      _
    $region10: #{trans_net_forward.11} parent=5 // pred_check_branch
      %160 = sbr.rel (%p157) target = $region12
    $region11: #{trans_net_forward.11} parent=5 // pred_region
      %s161 = ssub.s32 %s11, 1
      // Predicated region
      $region13: #{trans_net_forward.11} parent=11 // pred_check
        %p162 = pneg %p58
      $region14: #{trans_net_forward.11} parent=11 // pred_check_branch
        %164 = sbr.rel (%p162) target = $region16
      $region15: #{trans_net_forward.11} parent=11 // pred_region
        _
      $region16: #{trans_net_forward.11} parent=11 // pred_fallthru
        _
      // Predicated region
      $region17: #{trans_net_forward.11} parent=11 // pred_check
        %p165 = pneg %p79
      $region18: #{trans_net_forward.11} parent=11 // pred_check_branch
        %167 = sbr.rel (%p165) target = $region20
      $region19: #{trans_net_forward.11} parent=11 // pred_region
        _
      $region20: #{trans_net_forward.11} parent=11 // pred_fallthru
        _
      // Predicated region
      $region21: #{trans_net_forward.11} parent=11 // pred_check
        %p168 = pneg %p100
      $region22: #{trans_net_forward.11} parent=11 // pred_check_branch
        %170 = sbr.rel (%p168) target = $region24
      $region23: #{trans_net_forward.11} parent=11 // pred_region
        _
      $region24: #{trans_net_forward.11} parent=11 // pred_fallthru
        _
      // Predicated region
      $region25: #{trans_net_forward.11} parent=11 // pred_check
        %p171 = pneg %p121
      $region26: #{trans_net_forward.11} parent=11 // pred_check_branch
        %173 = sbr.rel (%p171) target = $region28
      $region27: #{trans_net_forward.11} parent=11 // pred_region
        _
      $region28: #{trans_net_forward.11} parent=11 // pred_fallthru
        _
    $region12: #{trans_net_forward.11} parent=5 // pred_fallthru
      _
    %p174 = scmp.lt.s32.totalorder %s11, 2
    // Predicated region
    $region29: #{trans_net_forward.11} parent=5 // pred_check
      %p175 = pneg %p174
    $region30: #{trans_net_forward.11} parent=5 // pred_check_branch
      %177 = sbr.rel (%p175) target = $region32
    $region31: #{trans_net_forward.11} parent=5 // pred_region
      // Predicated region
      $region33: #{trans_net_forward.11} parent=31 // pred_check
        %p178 = pneg %p31
      $region34: #{trans_net_forward.11} parent=31 // pred_check_branch
        %180 = sbr.rel (%p178) target = $region36
      $region35: #{trans_net_forward.11} parent=31 // pred_region
        %p181 = scmp.lt.s32.totalorder %s11, 1
        %s182 = scalar_select %p181, %s11, 1
        %s183 = smul.addr %s182, 2
        %s184 = smul.addr %s183, 8
        %s185 = scalar_lea.vmem %s0, %s184
      $region36: #{trans_net_forward.11} parent=31 // pred_fallthru
        _
    $region32: #{trans_net_forward.11} parent=5 // pred_fallthru
      _
    %p186 = scmp.le.s32.totalorder 1, %s11
    %p187 = scmp.lt.s32.totalorder %s11, 3
    %p188 = pnand %p186, %p187
    %p189 = pneg %p188
    // Predicated region
    $region37: #{trans_net_forward.11} parent=5 // pred_check
      _
    $region38: #{trans_net_forward.11} parent=5 // pred_check_branch
      %191 = sbr.rel (%p188) target = $region40
    $region39: #{trans_net_forward.11} parent=5 // pred_region
      %s192 = ssub.s32 %s11, 1
      %p193 = scmp.lt.s32.totalorder %s16, 1
      %s194 = scalar_select %p193, %s16, 1
      %s195 = smul.addr %s194, 2
      %s196 = smul.addr %s195, 8
      %s197 = scalar_lea.vmem %s0, %s196
      %p198 = pneg %p37
      %p199 = pneg %p34
      %p200 = pneg %p58
      %p201 = pneg %p55
      %p202 = pneg %p79
      %p203 = pneg %p76
      %p204 = pneg %p100
      %p205 = pneg %p97
      %p206 = pneg %p121
      %p207 = pneg %p118
      %p208 = pneg %p147
      %p209 = pneg %p144
      %p210 = scmp.lt.s32.totalorder %s16, 1
      %s211 = scalar_select %p210, %s16, 1
      %s212 = smul.addr %s211, 2
      %s213 = smul.addr %s212, 4
      %s214 = scalar_lea.vmem %s5, %s213
      %p215 = scmp.lt.s32.totalorder %s16, 1
      %s216 = scalar_select %p215, %s16, 1
      %s217 = smul.addr %s216, 2
      %s218 = smul.addr %s217, 8
      %s219 = scalar_lea.vmem %s0, %s218
      %p220 = scmp.lt.s32.totalorder %s16, 1
      %s221 = scalar_select %p220, %s16, 1
      %s222 = smul.addr %s221, 2
      %s223 = smul.addr %s222, 4
      %s224 = scalar_lea.vmem %s5, %s223
      %v225 = vld [vmem:[%s1] sm:$0xff]
      %v226 = vld [vmem:[%s1 + $0x8] sm:$0xff]
      %v227 = vld [vmem:[%s1 + $0x10] sm:$0xff]
      %v228 = vld [vmem:[%s1 + $0x18] sm:$0xff]
      %v229 = vld [vmem:[%s1 + $0x20] sm:$0xff]
      %v230 = vld [vmem:[%s1 + $0x28] sm:$0xff]
      %v231 = vld [vmem:[%s1 + $0x30] sm:$0xff]
      %v232 = vld [vmem:[%s1 + $0x38] sm:$0xff]
      %v233 = vld [vmem:[%s1 + $0x40] sm:$0xff]
      %v234 = vld [vmem:[%s1 + $0x48] sm:$0xff]
      %v235 = vld [vmem:[%s1 + $0x50] sm:$0xff]
      %v236 = vld [vmem:[%s1 + $0x58] sm:$0xff]
      %v237 = vld [vmem:[%s1 + $0x60] sm:$0xff]
      %v238 = vld [vmem:[%s1 + $0x68] sm:$0xff]
      %v239 = vld [vmem:[%s1 + $0x70] sm:$0xff]
      %v240 = vld [vmem:[%s1 + $0x78] sm:$0xff]
      %v241 = vld [vmem:[%s219] sm:$0xff]
      %v242 = vld [vmem:[%s219 + $0x8] sm:$0xff]
      %v243 = vld [vmem:[%s2] sm:$0xff]
      %v244 = vld [vmem:[%s2 + $0x8] sm:$0xff]
      %v245 = vld [vmem:[%s2 + $0x10] sm:$0xff]
      %v246 = vld [vmem:[%s2 + $0x18] sm:$0xff]
      %v247 = vld [vmem:[%s2 + $0x20] sm:$0xff]
      %v248 = vld [vmem:[%s2 + $0x28] sm:$0xff]
      %v249 = vld [vmem:[%s2 + $0x30] sm:$0xff]
      %v250 = vld [vmem:[%s2 + $0x38] sm:$0xff]
      %v251 = vld [vmem:[%s2 + $0x40] sm:$0xff]
      %v252 = vld [vmem:[%s2 + $0x48] sm:$0xff]
      %v253 = vld [vmem:[%s2 + $0x50] sm:$0xff]
      %v254 = vld [vmem:[%s2 + $0x58] sm:$0xff]
      %v255 = vld [vmem:[%s2 + $0x60] sm:$0xff]
      %v256 = vld [vmem:[%s2 + $0x68] sm:$0xff]
      %v257 = vld [vmem:[%s2 + $0x70] sm:$0xff]
      %v258 = vld [vmem:[%s2 + $0x78] sm:$0xff]
      %260 = vset.pattern.permute.xlu0 0
      %261 = vperm.xlu0 %260, %v243
      %v262 = vpop.permute.xlu0 %261
      %265 = vset.pattern.permute.xlu0 0
      %266 = vperm.xlu0 %265, %v244
      %v267 = vpop.permute.xlu0 %266
      %270 = vset.pattern.permute.xlu0 0
      %271 = vperm.xlu0 %270, %v245
      %v272 = vpop.permute.xlu0 %271
      %275 = vset.pattern.permute.xlu0 0
      %276 = vperm.xlu0 %275, %v246
      %v277 = vpop.permute.xlu0 %276
      %280 = vset.pattern.permute.xlu0 0
      %281 = vperm.xlu0 %280, %v247
      %v282 = vpop.permute.xlu0 %281
      %285 = vset.pattern.permute.xlu0 0
      %286 = vperm.xlu0 %285, %v248
      %v287 = vpop.permute.xlu0 %286
      %290 = vset.pattern.permute.xlu0 0
      %291 = vperm.xlu0 %290, %v249
      %v292 = vpop.permute.xlu0 %291
      %295 = vset.pattern.permute.xlu0 0
      %296 = vperm.xlu0 %295, %v250
      %v297 = vpop.permute.xlu0 %296
      %300 = vset.pattern.permute.xlu0 0
      %301 = vperm.xlu0 %300, %v251
      %v302 = vpop.permute.xlu0 %301
      %305 = vset.pattern.permute.xlu0 0
      %306 = vperm.xlu0 %305, %v252
      %v307 = vpop.permute.xlu0 %306
      %310 = vset.pattern.permute.xlu0 0
      %311 = vperm.xlu0 %310, %v253
      %v312 = vpop.permute.xlu0 %311
      %315 = vset.pattern.permute.xlu0 0
      %316 = vperm.xlu0 %315, %v254
      %v317 = vpop.permute.xlu0 %316
      %320 = vset.pattern.permute.xlu0 0
      %321 = vperm.xlu0 %320, %v255
      %v322 = vpop.permute.xlu0 %321
      %325 = vset.pattern.permute.xlu0 0
      %326 = vperm.xlu0 %325, %v256
      %v327 = vpop.permute.xlu0 %326
      %330 = vset.pattern.permute.xlu0 0
      %331 = vperm.xlu0 %330, %v257
      %v332 = vpop.permute.xlu0 %331
      %335 = vset.pattern.permute.xlu0 0
      %336 = vperm.xlu0 %335, %v258
      %v337 = vpop.permute.xlu0 %336
      %vm339 = vcmask 64512
      %v341 = vsel %vm339, %v225, 0
      %v344 = vsel %vm339, %v226, 0
      %v347 = vsel %vm339, %v227, 0
      %v350 = vsel %vm339, %v228, 0
      %v353 = vsel %vm339, %v229, 0
      %v356 = vsel %vm339, %v230, 0
      %v359 = vsel %vm339, %v231, 0
      %v362 = vsel %vm339, %v232, 0
      %v365 = vsel %vm339, %v233, 0
      %v368 = vsel %vm339, %v234, 0
      %v371 = vsel %vm339, %v235, 0
      %v374 = vsel %vm339, %v236, 0
      %v377 = vsel %vm339, %v237, 0
      %v380 = vsel %vm339, %v238, 0
      %v383 = vsel %vm339, %v239, 0
      %v386 = vsel %vm339, %v240, 0
      %388 = vmatpush.msra.mxu0 0.0
      %389 = vmatpush.msra.mxu0 0.0
      %390 = vmatpush.msra.mxu0 0.0
      %391 = vmatpush.msra.mxu0 0.0
      %392 = vmatpush.msra.mxu0 0.0
      %393 = vmatpush.msra.mxu0 0.0
      %394 = vmatpush.msra.mxu0 0.0
      %395 = vmatpush.msra.mxu0 0.0
      %396 = vmatpush.msra.mxu0 0.0
      %397 = vmatpush.msra.mxu0 0.0
      %398 = vmatpush.msra.mxu0 0.0
      %399 = vmatpush.msra.mxu0 0.0
      %400 = vmatpush.msra.mxu0 0.0
      %401 = vmatpush.msra.mxu0 0.0
      %402 = vmatpush.msra.mxu0 0.0
      %403 = vmatpush.msra.mxu0 %v241
      %404 = vmatmul.f32.gmra.mxu0 %v341
      %v405 = vpop.f32.mrf.mxu0
      %v406 = vadd.f32 %v262, %v405
      %407 = vmatmul.f32.gmra.mxu0 %v344
      %v408 = vpop.f32.mrf.mxu0
      %v409 = vadd.f32 %v267, %v408
      %410 = vmatmul.f32.gmra.mxu0 %v347
      %v411 = vpop.f32.mrf.mxu0
      %v412 = vadd.f32 %v272, %v411
      %413 = vmatmul.f32.gmra.mxu0 %v350
      %v414 = vpop.f32.mrf.mxu0
      %v415 = vadd.f32 %v277, %v414
      %416 = vmatmul.f32.gmra.mxu0 %v353
      %v417 = vpop.f32.mrf.mxu0
      %v418 = vadd.f32 %v282, %v417
      %419 = vmatmul.f32.gmra.mxu0 %v356
      %v420 = vpop.f32.mrf.mxu0
      %v421 = vadd.f32 %v287, %v420
      %422 = vmatmul.f32.gmra.mxu0 %v359
      %v423 = vpop.f32.mrf.mxu0
      %v424 = vadd.f32 %v292, %v423
      %425 = vmatmul.f32.gmra.mxu0 %v362
      %v426 = vpop.f32.mrf.mxu0
      %v427 = vadd.f32 %v297, %v426
      %428 = vmatmul.f32.gmra.mxu0 %v365
      %v429 = vpop.f32.mrf.mxu0
      %v430 = vadd.f32 %v302, %v429
      %431 = vmatmul.f32.gmra.mxu0 %v368
      %v432 = vpop.f32.mrf.mxu0
      %v433 = vadd.f32 %v307, %v432
      %434 = vmatmul.f32.gmra.mxu0 %v371
      %v435 = vpop.f32.mrf.mxu0
      %v436 = vadd.f32 %v312, %v435
      %437 = vmatmul.f32.gmra.mxu0 %v374
      %v438 = vpop.f32.mrf.mxu0
      %v439 = vadd.f32 %v317, %v438
      %440 = vmatmul.f32.gmra.mxu0 %v377
      %v441 = vpop.f32.mrf.mxu0
      %v442 = vadd.f32 %v322, %v441
      %443 = vmatmul.f32.gmra.mxu0 %v380
      %v444 = vpop.f32.mrf.mxu0
      %v445 = vadd.f32 %v327, %v444
      %446 = vmatmul.f32.gmra.mxu0 %v383
      %v447 = vpop.f32.mrf.mxu0
      %v448 = vadd.f32 %v332, %v447
      %449 = vmatmul.f32.gmra.mxu0 %v386
      %v450 = vpop.f32.mrf.mxu0
      %v451 = vadd.f32 %v337, %v450
      %452 = vdwg.mxu0
      %453 = vmatpush.msra.mxu0 0.0
      %454 = vmatpush.msra.mxu0 0.0
      %455 = vmatpush.msra.mxu0 0.0
      %456 = vmatpush.msra.mxu0 0.0
      %457 = vmatpush.msra.mxu0 0.0
      %458 = vmatpush.msra.mxu0 0.0
      %459 = vmatpush.msra.mxu0 0.0
      %460 = vmatpush.msra.mxu0 0.0
      %461 = vmatpush.msra.mxu0 0.0
      %462 = vmatpush.msra.mxu0 0.0
      %463 = vmatpush.msra.mxu0 0.0
      %464 = vmatpush.msra.mxu0 0.0
      %465 = vmatpush.msra.mxu0 0.0
      %466 = vmatpush.msra.mxu0 0.0
      %467 = vmatpush.msra.mxu0 0.0
      %468 = vmatpush.msra.mxu0 %v242
      %469 = vmatmul.f32.gmra.mxu0 %v341
      %v470 = vpop.f32.mrf.mxu0
      %v471 = vadd.f32 %v262, %v470
      %472 = vmatmul.f32.gmra.mxu0 %v344
      %v473 = vpop.f32.mrf.mxu0
      %v474 = vadd.f32 %v267, %v473
      %475 = vmatmul.f32.gmra.mxu0 %v347
      %v476 = vpop.f32.mrf.mxu0
      %v477 = vadd.f32 %v272, %v476
      %478 = vmatmul.f32.gmra.mxu0 %v350
      %v479 = vpop.f32.mrf.mxu0
      %v480 = vadd.f32 %v277, %v479
      %481 = vmatmul.f32.gmra.mxu0 %v353
      %v482 = vpop.f32.mrf.mxu0
      %v483 = vadd.f32 %v282, %v482
      %484 = vmatmul.f32.gmra.mxu0 %v356
      %v485 = vpop.f32.mrf.mxu0
      %v486 = vadd.f32 %v287, %v485
      %487 = vmatmul.f32.gmra.mxu0 %v359
      %v488 = vpop.f32.mrf.mxu0
      %v489 = vadd.f32 %v292, %v488
      %490 = vmatmul.f32.gmra.mxu0 %v362
      %v491 = vpop.f32.mrf.mxu0
      %v492 = vadd.f32 %v297, %v491
      %493 = vmatmul.f32.gmra.mxu0 %v365
      %v494 = vpop.f32.mrf.mxu0
      %v495 = vadd.f32 %v302, %v494
      %496 = vmatmul.f32.gmra.mxu0 %v368
      %v497 = vpop.f32.mrf.mxu0
      %v498 = vadd.f32 %v307, %v497
      %499 = vmatmul.f32.gmra.mxu0 %v371
      %v500 = vpop.f32.mrf.mxu0
      %v501 = vadd.f32 %v312, %v500
      %502 = vmatmul.f32.gmra.mxu0 %v374
      %v503 = vpop.f32.mrf.mxu0
      %v504 = vadd.f32 %v317, %v503
      %505 = vmatmul.f32.gmra.mxu0 %v377
      %v506 = vpop.f32.mrf.mxu0
      %v507 = vadd.f32 %v322, %v506
      %508 = vmatmul.f32.gmra.mxu0 %v380
      %v509 = vpop.f32.mrf.mxu0
      %v510 = vadd.f32 %v327, %v509
      %511 = vmatmul.f32.gmra.mxu0 %v383
      %v512 = vpop.f32.mrf.mxu0
      %v513 = vadd.f32 %v332, %v512
      %514 = vmatmul.f32.gmra.mxu0 %v386
      %v515 = vpop.f32.mrf.mxu0
      %v516 = vadd.f32 %v337, %v515
      %517 = vdwg.mxu0
      %v518 = vmul.f32 %v406, 0.5
      %v519 = vmul.f32 %v471, 0.5
      %v520 = vmul.f32 %v409, 0.5
      %v521 = vmul.f32 %v474, 0.5
      %v522 = vmul.f32 %v412, 0.5
      %v523 = vmul.f32 %v477, 0.5
      %v524 = vmul.f32 %v415, 0.5
      %v525 = vmul.f32 %v480, 0.5
      %v526 = vmul.f32 %v418, 0.5
      %v527 = vmul.f32 %v483, 0.5
      %v528 = vmul.f32 %v421, 0.5
      %v529 = vmul.f32 %v486, 0.5
      %v530 = vmul.f32 %v424, 0.5
      %v531 = vmul.f32 %v489, 0.5
      %v532 = vmul.f32 %v427, 0.5
      %v533 = vmul.f32 %v492, 0.5
      %v534 = vmul.f32 %v430, 0.5
      %v535 = vmul.f32 %v495, 0.5
      %v536 = vmul.f32 %v433, 0.5
      %v537 = vmul.f32 %v498, 0.5
      %v538 = vmul.f32 %v436, 0.5
      %v539 = vmul.f32 %v501, 0.5
      %v540 = vmul.f32 %v439, 0.5
      %v541 = vmul.f32 %v504, 0.5
      %v542 = vmul.f32 %v442, 0.5
      %v543 = vmul.f32 %v507, 0.5
      %v544 = vmul.f32 %v445, 0.5
      %v545 = vmul.f32 %v510, 0.5
      %v546 = vmul.f32 %v448, 0.5
      %v547 = vmul.f32 %v513, 0.5
      %v548 = vmul.f32 %v451, 0.5
      %v549 = vmul.f32 %v516, 0.5
      %v550 = vmul.f32 %v406, 0.70710677
      %v551 = vmul.f32 %v471, 0.70710677
      %v552 = vmul.f32 %v409, 0.70710677
      %v553 = vmul.f32 %v474, 0.70710677
      %v554 = vmul.f32 %v412, 0.70710677
      %v555 = vmul.f32 %v477, 0.70710677
      %v556 = vmul.f32 %v415, 0.70710677
      %v557 = vmul.f32 %v480, 0.70710677
      %v558 = vmul.f32 %v418, 0.70710677
      %v559 = vmul.f32 %v483, 0.70710677
      %v560 = vmul.f32 %v421, 0.70710677
      %v561 = vmul.f32 %v486, 0.70710677
      %v562 = vmul.f32 %v424, 0.70710677
      %v563 = vmul.f32 %v489, 0.70710677
      %v564 = vmul.f32 %v427, 0.70710677
      %v565 = vmul.f32 %v492, 0.70710677
      %v566 = vmul.f32 %v430, 0.70710677
      %v567 = vmul.f32 %v495, 0.70710677
      %v568 = vmul.f32 %v433, 0.70710677
      %v569 = vmul.f32 %v498, 0.70710677
      %v570 = vmul.f32 %v436, 0.70710677
      %v571 = vmul.f32 %v501, 0.70710677
      %v572 = vmul.f32 %v439, 0.70710677
      %v573 = vmul.f32 %v504, 0.70710677
      %v574 = vmul.f32 %v442, 0.70710677
      %v575 = vmul.f32 %v507, 0.70710677
      %v576 = vmul.f32 %v445, 0.70710677
      %v577 = vmul.f32 %v510, 0.70710677
      %v578 = vmul.f32 %v448, 0.70710677
      %v579 = vmul.f32 %v513, 0.70710677
      %v580 = vmul.f32 %v451, 0.70710677
      %v581 = vmul.f32 %v516, 0.70710677
      %v582 = vmul.f32 %v550, %v550
      %v583 = vmin.f32 16.0, %v582
      %v584 = vmul.f32 %v583, 2.1237322e-06
      %v585 = vadd.f32 %v584, 0.00028619796
      %v586 = vmul.f32 %v583, %v585
      %v587 = vadd.f32 %v586, 0.0036580483
      %v588 = vmul.f32 %v583, %v587
      %v589 = vadd.f32 %v588, 0.05243302
      %v590 = vmul.f32 %v583, %v589
      %v591 = vadd.f32 %v590, 0.18741608
      %v592 = vmul.f32 %v583, %v591
      %v593 = vadd.f32 %v592, 1.1283791
      %v594 = vmul.f32 %v550, %v593
      %v595 = vmul.f32 %v583, 3.8918573e-05
      %v596 = vadd.f32 %v595, 0.001143296
      %v597 = vmul.f32 %v583, %v596
      %v598 = vadd.f32 %v597, 0.014752088
      %v599 = vmul.f32 %v583, %v598
      %v600 = vadd.f32 %v599, 0.112945676
      %v601 = vmul.f32 %v583, %v600
      %v602 = vadd.f32 %v601, 0.4994258
      %v603 = vmul.f32 %v583, %v602
      %v604 = vadd.f32 %v603, 1.0
      %v605 = vrcp.pop %v604
      %v606 = vmul.f32 %v604, %v605
      %v607 = vsub.f32 1.0, %v606
      %v608 = vmul.f32 %v605, %v607
      %v609 = vadd.f32 %v605, %v608
      %vm610 = vweird.f32 %v604
      %vm611 = vweird.f32 %v605
      %vm612 = vmor %vm610, %vm611
      %v613 = vsel %vm612, %v605, %v609
      %v614 = vand.u32 2147483647, %v604
      %vm615 = vcmp.eq.f32.partialorder %v614, 8.507059e+37
      %v616 = vand.u32 %v604, 2147483648
      %v617 = vor.u32 1.1754944e-38, %v616
      %v618 = vsel %vm615, %v617, %v613
      %v619 = vmul.f32 %v594, %v618
      %v620 = vmin.f32 %v619, 1.0
      %v621 = vmax.f32 %v620, -1.0
      %v622 = vmul.f32 %v551, %v551
      %v623 = vmin.f32 16.0, %v622
      %v624 = vmul.f32 %v623, 2.1237322e-06
      %v625 = vadd.f32 %v624, 0.00028619796
      %v626 = vmul.f32 %v623, %v625
      %v627 = vadd.f32 %v626, 0.0036580483
      %v628 = vmul.f32 %v623, %v627
      %v629 = vadd.f32 %v628, 0.05243302
      %v630 = vmul.f32 %v623, %v629
      %v631 = vadd.f32 %v630, 0.18741608
      %v632 = vmul.f32 %v623, %v631
      %v633 = vadd.f32 %v632, 1.1283791
      %v634 = vmul.f32 %v551, %v633
      %v635 = vmul.f32 %v623, 3.8918573e-05
      %v636 = vadd.f32 %v635, 0.001143296
      %v637 = vmul.f32 %v623, %v636
      %v638 = vadd.f32 %v637, 0.014752088
      %v639 = vmul.f32 %v623, %v638
      %v640 = vadd.f32 %v639, 0.112945676
      %v641 = vmul.f32 %v623, %v640
      %v642 = vadd.f32 %v641, 0.4994258
      %v643 = vmul.f32 %v623, %v642
      %v644 = vadd.f32 %v643, 1.0
      %v645 = vrcp.pop %v644
      %v646 = vmul.f32 %v644, %v645
      %v647 = vsub.f32 1.0, %v646
      %v648 = vmul.f32 %v645, %v647
      %v649 = vadd.f32 %v645, %v648
      %vm650 = vweird.f32 %v644
      %vm651 = vweird.f32 %v645
      %vm652 = vmor %vm650, %vm651
      %v653 = vsel %vm652, %v645, %v649
      %v654 = vand.u32 2147483647, %v644
      %vm655 = vcmp.eq.f32.partialorder %v654, 8.507059e+37
      %v656 = vand.u32 %v644, 2147483648
      %v657 = vor.u32 1.1754944e-38, %v656
      %v658 = vsel %vm655, %v657, %v653
      %v659 = vmul.f32 %v634, %v658
      %v660 = vmin.f32 %v659, 1.0
      %v661 = vmax.f32 %v660, -1.0
      %v662 = vmul.f32 %v552, %v552
      %v663 = vmin.f32 16.0, %v662
      %v664 = vmul.f32 %v663, 2.1237322e-06
      %v665 = vadd.f32 %v664, 0.00028619796
      %v666 = vmul.f32 %v663, %v665
      %v667 = vadd.f32 %v666, 0.0036580483
      %v668 = vmul.f32 %v663, %v667
      %v669 = vadd.f32 %v668, 0.05243302
      %v670 = vmul.f32 %v663, %v669
      %v671 = vadd.f32 %v670, 0.18741608
      %v672 = vmul.f32 %v663, %v671
      %v673 = vadd.f32 %v672, 1.1283791
      %v674 = vmul.f32 %v552, %v673
      %v675 = vmul.f32 %v663, 3.8918573e-05
      %v676 = vadd.f32 %v675, 0.001143296
      %v677 = vmul.f32 %v663, %v676
      %v678 = vadd.f32 %v677, 0.014752088
      %v679 = vmul.f32 %v663, %v678
      %v680 = vadd.f32 %v679, 0.112945676
      %v681 = vmul.f32 %v663, %v680
      %v682 = vadd.f32 %v681, 0.4994258
      %v683 = vmul.f32 %v663, %v682
      %v684 = vadd.f32 %v683, 1.0
      %v685 = vrcp.pop %v684
      %v686 = vmul.f32 %v684, %v685
      %v687 = vsub.f32 1.0, %v686
      %v688 = vmul.f32 %v685, %v687
      %v689 = vadd.f32 %v685, %v688
      %vm690 = vweird.f32 %v684
      %vm691 = vweird.f32 %v685
      %vm692 = vmor %vm690, %vm691
      %v693 = vsel %vm692, %v685, %v689
      %v694 = vand.u32 2147483647, %v684
      %vm695 = vcmp.eq.f32.partialorder %v694, 8.507059e+37
      %v696 = vand.u32 %v684, 2147483648
      %v697 = vor.u32 1.1754944e-38, %v696
      %v698 = vsel %vm695, %v697, %v693
      %v699 = vmul.f32 %v674, %v698
      %v700 = vmin.f32 %v699, 1.0
      %v701 = vmax.f32 %v700, -1.0
      %v702 = vmul.f32 %v553, %v553
      %v703 = vmin.f32 16.0, %v702
      %v704 = vmul.f32 %v703, 2.1237322e-06
      %v705 = vadd.f32 %v704, 0.00028619796
      %v706 = vmul.f32 %v703, %v705
      %v707 = vadd.f32 %v706, 0.0036580483
      %v708 = vmul.f32 %v703, %v707
      %v709 = vadd.f32 %v708, 0.05243302
      %v710 = vmul.f32 %v703, %v709
      %v711 = vadd.f32 %v710, 0.18741608
      %v712 = vmul.f32 %v703, %v711
      %v713 = vadd.f32 %v712, 1.1283791
      %v714 = vmul.f32 %v553, %v713
      %v715 = vmul.f32 %v703, 3.8918573e-05
      %v716 = vadd.f32 %v715, 0.001143296
      %v717 = vmul.f32 %v703, %v716
      %v718 = vadd.f32 %v717, 0.014752088
      %v719 = vmul.f32 %v703, %v718
      %v720 = vadd.f32 %v719, 0.112945676
      %v721 = vmul.f32 %v703, %v720
      %v722 = vadd.f32 %v721, 0.4994258
      %v723 = vmul.f32 %v703, %v722
      %v724 = vadd.f32 %v723, 1.0
      %v725 = vrcp.pop %v724
      %v726 = vmul.f32 %v724, %v725
      %v727 = vsub.f32 1.0, %v726
      %v728 = vmul.f32 %v725, %v727
      %v729 = vadd.f32 %v725, %v728
      %vm730 = vweird.f32 %v724
      %vm731 = vweird.f32 %v725
      %vm732 = vmor %vm730, %vm731
      %v733 = vsel %vm732, %v725, %v729
      %v734 = vand.u32 2147483647, %v724
      %vm735 = vcmp.eq.f32.partialorder %v734, 8.507059e+37
      %v736 = vand.u32 %v724, 2147483648
      %v737 = vor.u32 1.1754944e-38, %v736
      %v738 = vsel %vm735, %v737, %v733
      %v739 = vmul.f32 %v714, %v738
      %v740 = vmin.f32 %v739, 1.0
      %v741 = vmax.f32 %v740, -1.0
      %v742 = vmul.f32 %v554, %v554
      %v743 = vmin.f32 16.0, %v742
      %v744 = vmul.f32 %v743, 2.1237322e-06
      %v745 = vadd.f32 %v744, 0.00028619796
      %v746 = vmul.f32 %v743, %v745
      %v747 = vadd.f32 %v746, 0.0036580483
      %v748 = vmul.f32 %v743, %v747
      %v749 = vadd.f32 %v748, 0.05243302
      %v750 = vmul.f32 %v743, %v749
      %v751 = vadd.f32 %v750, 0.18741608
      %v752 = vmul.f32 %v743, %v751
      %v753 = vadd.f32 %v752, 1.1283791
      %v754 = vmul.f32 %v554, %v753
      %v755 = vmul.f32 %v743, 3.8918573e-05
      %v756 = vadd.f32 %v755, 0.001143296
      %v757 = vmul.f32 %v743, %v756
      %v758 = vadd.f32 %v757, 0.014752088
      %v759 = vmul.f32 %v743, %v758
      %v760 = vadd.f32 %v759, 0.112945676
      %v761 = vmul.f32 %v743, %v760
      %v762 = vadd.f32 %v761, 0.4994258
      %v763 = vmul.f32 %v743, %v762
      %v764 = vadd.f32 %v763, 1.0
      %v765 = vrcp.pop %v764
      %v766 = vmul.f32 %v764, %v765
      %v767 = vsub.f32 1.0, %v766
      %v768 = vmul.f32 %v765, %v767
      %v769 = vadd.f32 %v765, %v768
      %vm770 = vweird.f32 %v764
      %vm771 = vweird.f32 %v765
      %vm772 = vmor %vm770, %vm771
      %v773 = vsel %vm772, %v765, %v769
      %v774 = vand.u32 2147483647, %v764
      %vm775 = vcmp.eq.f32.partialorder %v774, 8.507059e+37
      %v776 = vand.u32 %v764, 2147483648
      %v777 = vor.u32 1.1754944e-38, %v776
      %v778 = vsel %vm775, %v777, %v773
      %v779 = vmul.f32 %v754, %v778
      %v780 = vmin.f32 %v779, 1.0
      %v781 = vmax.f32 %v780, -1.0
      %v782 = vmul.f32 %v555, %v555
      %v783 = vmin.f32 16.0, %v782
      %v784 = vmul.f32 %v783, 2.1237322e-06
      %v785 = vadd.f32 %v784, 0.00028619796
      %v786 = vmul.f32 %v783, %v785
      %v787 = vadd.f32 %v786, 0.0036580483
      %v788 = vmul.f32 %v783, %v787
      %v789 = vadd.f32 %v788, 0.05243302
      %v790 = vmul.f32 %v783, %v789
      %v791 = vadd.f32 %v790, 0.18741608
      %v792 = vmul.f32 %v783, %v791
      %v793 = vadd.f32 %v792, 1.1283791
      %v794 = vmul.f32 %v555, %v793
      %v795 = vmul.f32 %v783, 3.8918573e-05
      %v796 = vadd.f32 %v795, 0.001143296
      %v797 = vmul.f32 %v783, %v796
      %v798 = vadd.f32 %v797, 0.014752088
      %v799 = vmul.f32 %v783, %v798
      %v800 = vadd.f32 %v799, 0.112945676
      %v801 = vmul.f32 %v783, %v800
      %v802 = vadd.f32 %v801, 0.4994258
      %v803 = vmul.f32 %v783, %v802
      %v804 = vadd.f32 %v803, 1.0
      %v805 = vrcp.pop %v804
      %v806 = vmul.f32 %v804, %v805
      %v807 = vsub.f32 1.0, %v806
      %v808 = vmul.f32 %v805, %v807
      %v809 = vadd.f32 %v805, %v808
      %vm810 = vweird.f32 %v804
      %vm811 = vweird.f32 %v805
      %vm812 = vmor %vm810, %vm811
      %v813 = vsel %vm812, %v805, %v809
      %v814 = vand.u32 2147483647, %v804
      %vm815 = vcmp.eq.f32.partialorder %v814, 8.507059e+37
      %v816 = vand.u32 %v804, 2147483648
      %v817 = vor.u32 1.1754944e-38, %v816
      %v818 = vsel %vm815, %v817, %v813
      %v819 = vmul.f32 %v794, %v818
      %v820 = vmin.f32 %v819, 1.0
      %v821 = vmax.f32 %v820, -1.0
      %v822 = vmul.f32 %v556, %v556
      %v823 = vmin.f32 16.0, %v822
      %v824 = vmul.f32 %v823, 2.1237322e-06
      %v825 = vadd.f32 %v824, 0.00028619796
      %v826 = vmul.f32 %v823, %v825
      %v827 = vadd.f32 %v826, 0.0036580483
      %v828 = vmul.f32 %v823, %v827
      %v829 = vadd.f32 %v828, 0.05243302
      %v830 = vmul.f32 %v823, %v829
      %v831 = vadd.f32 %v830, 0.18741608
      %v832 = vmul.f32 %v823, %v831
      %v833 = vadd.f32 %v832, 1.1283791
      %v834 = vmul.f32 %v556, %v833
      %v835 = vmul.f32 %v823, 3.8918573e-05
      %v836 = vadd.f32 %v835, 0.001143296
      %v837 = vmul.f32 %v823, %v836
      %v838 = vadd.f32 %v837, 0.014752088
      %v839 = vmul.f32 %v823, %v838
      %v840 = vadd.f32 %v839, 0.112945676
      %v841 = vmul.f32 %v823, %v840
      %v842 = vadd.f32 %v841, 0.4994258
      %v843 = vmul.f32 %v823, %v842
      %v844 = vadd.f32 %v843, 1.0
      %v845 = vrcp.pop %v844
      %v846 = vmul.f32 %v844, %v845
      %v847 = vsub.f32 1.0, %v846
      %v848 = vmul.f32 %v845, %v847
      %v849 = vadd.f32 %v845, %v848
      %vm850 = vweird.f32 %v844
      %vm851 = vweird.f32 %v845
      %vm852 = vmor %vm850, %vm851
      %v853 = vsel %vm852, %v845, %v849
      %v854 = vand.u32 2147483647, %v844
      %vm855 = vcmp.eq.f32.partialorder %v854, 8.507059e+37
      %v856 = vand.u32 %v844, 2147483648
      %v857 = vor.u32 1.1754944e-38, %v856
      %v858 = vsel %vm855, %v857, %v853
      %v859 = vmul.f32 %v834, %v858
      %v860 = vmin.f32 %v859, 1.0
      %v861 = vmax.f32 %v860, -1.0
      %v862 = vmul.f32 %v557, %v557
      %v863 = vmin.f32 16.0, %v862
      %v864 = vmul.f32 %v863, 2.1237322e-06
      %v865 = vadd.f32 %v864, 0.00028619796
      %v866 = vmul.f32 %v863, %v865
      %v867 = vadd.f32 %v866, 0.0036580483
      %v868 = vmul.f32 %v863, %v867
      %v869 = vadd.f32 %v868, 0.05243302
      %v870 = vmul.f32 %v863, %v869
      %v871 = vadd.f32 %v870, 0.18741608
      %v872 = vmul.f32 %v863, %v871
      %v873 = vadd.f32 %v872, 1.1283791
      %v874 = vmul.f32 %v557, %v873
      %v875 = vmul.f32 %v863, 3.8918573e-05
      %v876 = vadd.f32 %v875, 0.001143296
      %v877 = vmul.f32 %v863, %v876
      %v878 = vadd.f32 %v877, 0.014752088
      %v879 = vmul.f32 %v863, %v878
      %v880 = vadd.f32 %v879, 0.112945676
      %v881 = vmul.f32 %v863, %v880
      %v882 = vadd.f32 %v881, 0.4994258
      %v883 = vmul.f32 %v863, %v882
      %v884 = vadd.f32 %v883, 1.0
      %v885 = vrcp.pop %v884
      %v886 = vmul.f32 %v884, %v885
      %v887 = vsub.f32 1.0, %v886
      %v888 = vmul.f32 %v885, %v887
      %v889 = vadd.f32 %v885, %v888
      %vm890 = vweird.f32 %v884
      %vm891 = vweird.f32 %v885
      %vm892 = vmor %vm890, %vm891
      %v893 = vsel %vm892, %v885, %v889
      %v894 = vand.u32 2147483647, %v884
      %vm895 = vcmp.eq.f32.partialorder %v894, 8.507059e+37
      %v896 = vand.u32 %v884, 2147483648
      %v897 = vor.u32 1.1754944e-38, %v896
      %v898 = vsel %vm895, %v897, %v893
      %v899 = vmul.f32 %v874, %v898
      %v900 = vmin.f32 %v899, 1.0
      %v901 = vmax.f32 %v900, -1.0
      %v902 = vmul.f32 %v558, %v558
      %v903 = vmin.f32 16.0, %v902
      %v904 = vmul.f32 %v903, 2.1237322e-06
      %v905 = vadd.f32 %v904, 0.00028619796
      %v906 = vmul.f32 %v903, %v905
      %v907 = vadd.f32 %v906, 0.0036580483
      %v908 = vmul.f32 %v903, %v907
      %v909 = vadd.f32 %v908, 0.05243302
      %v910 = vmul.f32 %v903, %v909
      %v911 = vadd.f32 %v910, 0.18741608
      %v912 = vmul.f32 %v903, %v911
      %v913 = vadd.f32 %v912, 1.1283791
      %v914 = vmul.f32 %v558, %v913
      %v915 = vmul.f32 %v903, 3.8918573e-05
      %v916 = vadd.f32 %v915, 0.001143296
      %v917 = vmul.f32 %v903, %v916
      %v918 = vadd.f32 %v917, 0.014752088
      %v919 = vmul.f32 %v903, %v918
      %v920 = vadd.f32 %v919, 0.112945676
      %v921 = vmul.f32 %v903, %v920
      %v922 = vadd.f32 %v921, 0.4994258
      %v923 = vmul.f32 %v903, %v922
      %v924 = vadd.f32 %v923, 1.0
      %v925 = vrcp.pop %v924
      %v926 = vmul.f32 %v924, %v925
      %v927 = vsub.f32 1.0, %v926
      %v928 = vmul.f32 %v925, %v927
      %v929 = vadd.f32 %v925, %v928
      %vm930 = vweird.f32 %v924
      %vm931 = vweird.f32 %v925
      %vm932 = vmor %vm930, %vm931
      %v933 = vsel %vm932, %v925, %v929
      %v934 = vand.u32 2147483647, %v924
      %vm935 = vcmp.eq.f32.partialorder %v934, 8.507059e+37
      %v936 = vand.u32 %v924, 2147483648
      %v937 = vor.u32 1.1754944e-38, %v936
      %v938 = vsel %vm935, %v937, %v933
      %v939 = vmul.f32 %v914, %v938
      %v940 = vmin.f32 %v939, 1.0
      %v941 = vmax.f32 %v940, -1.0
      %v942 = vmul.f32 %v559, %v559
      %v943 = vmin.f32 16.0, %v942
      %v944 = vmul.f32 %v943, 2.1237322e-06
      %v945 = vadd.f32 %v944, 0.00028619796
      %v946 = vmul.f32 %v943, %v945
      %v947 = vadd.f32 %v946, 0.0036580483
      %v948 = vmul.f32 %v943, %v947
      %v949 = vadd.f32 %v948, 0.05243302
      %v950 = vmul.f32 %v943, %v949
      %v951 = vadd.f32 %v950, 0.18741608
      %v952 = vmul.f32 %v943, %v951
      %v953 = vadd.f32 %v952, 1.1283791
      %v954 = vmul.f32 %v559, %v953
      %v955 = vmul.f32 %v943, 3.8918573e-05
      %v956 = vadd.f32 %v955, 0.001143296
      %v957 = vmul.f32 %v943, %v956
      %v958 = vadd.f32 %v957, 0.014752088
      %v959 = vmul.f32 %v943, %v958
      %v960 = vadd.f32 %v959, 0.112945676
      %v961 = vmul.f32 %v943, %v960
      %v962 = vadd.f32 %v961, 0.4994258
      %v963 = vmul.f32 %v943, %v962
      %v964 = vadd.f32 %v963, 1.0
      %v965 = vrcp.pop %v964
      %v966 = vmul.f32 %v964, %v965
      %v967 = vsub.f32 1.0, %v966
      %v968 = vmul.f32 %v965, %v967
      %v969 = vadd.f32 %v965, %v968
      %vm970 = vweird.f32 %v964
      %vm971 = vweird.f32 %v965
      %vm972 = vmor %vm970, %vm971
      %v973 = vsel %vm972, %v965, %v969
      %v974 = vand.u32 2147483647, %v964
      %vm975 = vcmp.eq.f32.partialorder %v974, 8.507059e+37
      %v976 = vand.u32 %v964, 2147483648
      %v977 = vor.u32 1.1754944e-38, %v976
      %v978 = vsel %vm975, %v977, %v973
      %v979 = vmul.f32 %v954, %v978
      %v980 = vmin.f32 %v979, 1.0
      %v981 = vmax.f32 %v980, -1.0
      %v982 = vmul.f32 %v560, %v560
      %v983 = vmin.f32 16.0, %v982
      %v984 = vmul.f32 %v983, 2.1237322e-06
      %v985 = vadd.f32 %v984, 0.00028619796
      %v986 = vmul.f32 %v983, %v985
      %v987 = vadd.f32 %v986, 0.0036580483
      %v988 = vmul.f32 %v983, %v987
      %v989 = vadd.f32 %v988, 0.05243302
      %v990 = vmul.f32 %v983, %v989
      %v991 = vadd.f32 %v990, 0.18741608
      %v992 = vmul.f32 %v983, %v991
      %v993 = vadd.f32 %v992, 1.1283791
      %v994 = vmul.f32 %v560, %v993
      %v995 = vmul.f32 %v983, 3.8918573e-05
      %v996 = vadd.f32 %v995, 0.001143296
      %v997 = vmul.f32 %v983, %v996
      %v998 = vadd.f32 %v997, 0.014752088
      %v999 = vmul.f32 %v983, %v998
      %v1000 = vadd.f32 %v999, 0.112945676
      %v1001 = vmul.f32 %v983, %v1000
      %v1002 = vadd.f32 %v1001, 0.4994258
      %v1003 = vmul.f32 %v983, %v1002
      %v1004 = vadd.f32 %v1003, 1.0
      %v1005 = vrcp.pop %v1004
      %v1006 = vmul.f32 %v1004, %v1005
      %v1007 = vsub.f32 1.0, %v1006
      %v1008 = vmul.f32 %v1005, %v1007
      %v1009 = vadd.f32 %v1005, %v1008
      %vm1010 = vweird.f32 %v1004
      %vm1011 = vweird.f32 %v1005
      %vm1012 = vmor %vm1010, %vm1011
      %v1013 = vsel %vm1012, %v1005, %v1009
      %v1014 = vand.u32 2147483647, %v1004
      %vm1015 = vcmp.eq.f32.partialorder %v1014, 8.507059e+37
      %v1016 = vand.u32 %v1004, 2147483648
      %v1017 = vor.u32 1.1754944e-38, %v1016
      %v1018 = vsel %vm1015, %v1017, %v1013
      %v1019 = vmul.f32 %v994, %v1018
      %v1020 = vmin.f32 %v1019, 1.0
      %v1021 = vmax.f32 %v1020, -1.0
      %v1022 = vmul.f32 %v561, %v561
      %v1023 = vmin.f32 16.0, %v1022
      %v1024 = vmul.f32 %v1023, 2.1237322e-06
      %v1025 = vadd.f32 %v1024, 0.00028619796
      %v1026 = vmul.f32 %v1023, %v1025
      %v1027 = vadd.f32 %v1026, 0.0036580483
      %v1028 = vmul.f32 %v1023, %v1027
      %v1029 = vadd.f32 %v1028, 0.05243302
      %v1030 = vmul.f32 %v1023, %v1029
      %v1031 = vadd.f32 %v1030, 0.18741608
      %v1032 = vmul.f32 %v1023, %v1031
      %v1033 = vadd.f32 %v1032, 1.1283791
      %v1034 = vmul.f32 %v561, %v1033
      %v1035 = vmul.f32 %v1023, 3.8918573e-05
      %v1036 = vadd.f32 %v1035, 0.001143296
      %v1037 = vmul.f32 %v1023, %v1036
      %v1038 = vadd.f32 %v1037, 0.014752088
      %v1039 = vmul.f32 %v1023, %v1038
      %v1040 = vadd.f32 %v1039, 0.112945676
      %v1041 = vmul.f32 %v1023, %v1040
      %v1042 = vadd.f32 %v1041, 0.4994258
      %v1043 = vmul.f32 %v1023, %v1042
      %v1044 = vadd.f32 %v1043, 1.0
      %v1045 = vrcp.pop %v1044
      %v1046 = vmul.f32 %v1044, %v1045
      %v1047 = vsub.f32 1.0, %v1046
      %v1048 = vmul.f32 %v1045, %v1047
      %v1049 = vadd.f32 %v1045, %v1048
      %vm1050 = vweird.f32 %v1044
      %vm1051 = vweird.f32 %v1045
      %vm1052 = vmor %vm1050, %vm1051
      %v1053 = vsel %vm1052, %v1045, %v1049
      %v1054 = vand.u32 2147483647, %v1044
      %vm1055 = vcmp.eq.f32.partialorder %v1054, 8.507059e+37
      %v1056 = vand.u32 %v1044, 2147483648
      %v1057 = vor.u32 1.1754944e-38, %v1056
      %v1058 = vsel %vm1055, %v1057, %v1053
      %v1059 = vmul.f32 %v1034, %v1058
      %v1060 = vmin.f32 %v1059, 1.0
      %v1061 = vmax.f32 %v1060, -1.0
      %v1062 = vmul.f32 %v562, %v562
      %v1063 = vmin.f32 16.0, %v1062
      %v1064 = vmul.f32 %v1063, 2.1237322e-06
      %v1065 = vadd.f32 %v1064, 0.00028619796
      %v1066 = vmul.f32 %v1063, %v1065
      %v1067 = vadd.f32 %v1066, 0.0036580483
      %v1068 = vmul.f32 %v1063, %v1067
      %v1069 = vadd.f32 %v1068, 0.05243302
      %v1070 = vmul.f32 %v1063, %v1069
      %v1071 = vadd.f32 %v1070, 0.18741608
      %v1072 = vmul.f32 %v1063, %v1071
      %v1073 = vadd.f32 %v1072, 1.1283791
      %v1074 = vmul.f32 %v562, %v1073
      %v1075 = vmul.f32 %v1063, 3.8918573e-05
      %v1076 = vadd.f32 %v1075, 0.001143296
      %v1077 = vmul.f32 %v1063, %v1076
      %v1078 = vadd.f32 %v1077, 0.014752088
      %v1079 = vmul.f32 %v1063, %v1078
      %v1080 = vadd.f32 %v1079, 0.112945676
      %v1081 = vmul.f32 %v1063, %v1080
      %v1082 = vadd.f32 %v1081, 0.4994258
      %v1083 = vmul.f32 %v1063, %v1082
      %v1084 = vadd.f32 %v1083, 1.0
      %v1085 = vrcp.pop %v1084
      %v1086 = vmul.f32 %v1084, %v1085
      %v1087 = vsub.f32 1.0, %v1086
      %v1088 = vmul.f32 %v1085, %v1087
      %v1089 = vadd.f32 %v1085, %v1088
      %vm1090 = vweird.f32 %v1084
      %vm1091 = vweird.f32 %v1085
      %vm1092 = vmor %vm1090, %vm1091
      %v1093 = vsel %vm1092, %v1085, %v1089
      %v1094 = vand.u32 2147483647, %v1084
      %vm1095 = vcmp.eq.f32.partialorder %v1094, 8.507059e+37
      %v1096 = vand.u32 %v1084, 2147483648
      %v1097 = vor.u32 1.1754944e-38, %v1096
      %v1098 = vsel %vm1095, %v1097, %v1093
      %v1099 = vmul.f32 %v1074, %v1098
      %v1100 = vmin.f32 %v1099, 1.0
      %v1101 = vmax.f32 %v1100, -1.0
      %v1102 = vmul.f32 %v563, %v563
      %v1103 = vmin.f32 16.0, %v1102
      %v1104 = vmul.f32 %v1103, 2.1237322e-06
      %v1105 = vadd.f32 %v1104, 0.00028619796
      %v1106 = vmul.f32 %v1103, %v1105
      %v1107 = vadd.f32 %v1106, 0.0036580483
      %v1108 = vmul.f32 %v1103, %v1107
      %v1109 = vadd.f32 %v1108, 0.05243302
      %v1110 = vmul.f32 %v1103, %v1109
      %v1111 = vadd.f32 %v1110, 0.18741608
      %v1112 = vmul.f32 %v1103, %v1111
      %v1113 = vadd.f32 %v1112, 1.1283791
      %v1114 = vmul.f32 %v563, %v1113
      %v1115 = vmul.f32 %v1103, 3.8918573e-05
      %v1116 = vadd.f32 %v1115, 0.001143296
      %v1117 = vmul.f32 %v1103, %v1116
      %v1118 = vadd.f32 %v1117, 0.014752088
      %v1119 = vmul.f32 %v1103, %v1118
      %v1120 = vadd.f32 %v1119, 0.112945676
      %v1121 = vmul.f32 %v1103, %v1120
      %v1122 = vadd.f32 %v1121, 0.4994258
      %v1123 = vmul.f32 %v1103, %v1122
      %v1124 = vadd.f32 %v1123, 1.0
      %v1125 = vrcp.pop %v1124
      %v1126 = vmul.f32 %v1124, %v1125
      %v1127 = vsub.f32 1.0, %v1126
      %v1128 = vmul.f32 %v1125, %v1127
      %v1129 = vadd.f32 %v1125, %v1128
      %vm1130 = vweird.f32 %v1124
      %vm1131 = vweird.f32 %v1125
      %vm1132 = vmor %vm1130, %vm1131
      %v1133 = vsel %vm1132, %v1125, %v1129
      %v1134 = vand.u32 2147483647, %v1124
      %vm1135 = vcmp.eq.f32.partialorder %v1134, 8.507059e+37
      %v1136 = vand.u32 %v1124, 2147483648
      %v1137 = vor.u32 1.1754944e-38, %v1136
      %v1138 = vsel %vm1135, %v1137, %v1133
      %v1139 = vmul.f32 %v1114, %v1138
      %v1140 = vmin.f32 %v1139, 1.0
      %v1141 = vmax.f32 %v1140, -1.0
      %v1142 = vmul.f32 %v564, %v564
      %v1143 = vmin.f32 16.0, %v1142
      %v1144 = vmul.f32 %v1143, 2.1237322e-06
      %v1145 = vadd.f32 %v1144, 0.00028619796
      %v1146 = vmul.f32 %v1143, %v1145
      %v1147 = vadd.f32 %v1146, 0.0036580483
      %v1148 = vmul.f32 %v1143, %v1147
      %v1149 = vadd.f32 %v1148, 0.05243302
      %v1150 = vmul.f32 %v1143, %v1149
      %v1151 = vadd.f32 %v1150, 0.18741608
      %v1152 = vmul.f32 %v1143, %v1151
      %v1153 = vadd.f32 %v1152, 1.1283791
      %v1154 = vmul.f32 %v564, %v1153
      %v1155 = vmul.f32 %v1143, 3.8918573e-05
      %v1156 = vadd.f32 %v1155, 0.001143296
      %v1157 = vmul.f32 %v1143, %v1156
      %v1158 = vadd.f32 %v1157, 0.014752088
      %v1159 = vmul.f32 %v1143, %v1158
      %v1160 = vadd.f32 %v1159, 0.112945676
      %v1161 = vmul.f32 %v1143, %v1160
      %v1162 = vadd.f32 %v1161, 0.4994258
      %v1163 = vmul.f32 %v1143, %v1162
      %v1164 = vadd.f32 %v1163, 1.0
      %v1165 = vrcp.pop %v1164
      %v1166 = vmul.f32 %v1164, %v1165
      %v1167 = vsub.f32 1.0, %v1166
      %v1168 = vmul.f32 %v1165, %v1167
      %v1169 = vadd.f32 %v1165, %v1168
      %vm1170 = vweird.f32 %v1164
      %vm1171 = vweird.f32 %v1165
      %vm1172 = vmor %vm1170, %vm1171
      %v1173 = vsel %vm1172, %v1165, %v1169
      %v1174 = vand.u32 2147483647, %v1164
      %vm1175 = vcmp.eq.f32.partialorder %v1174, 8.507059e+37
      %v1176 = vand.u32 %v1164, 2147483648
      %v1177 = vor.u32 1.1754944e-38, %v1176
      %v1178 = vsel %vm1175, %v1177, %v1173
      %v1179 = vmul.f32 %v1154, %v1178
      %v1180 = vmin.f32 %v1179, 1.0
      %v1181 = vmax.f32 %v1180, -1.0
      %v1182 = vmul.f32 %v565, %v565
      %v1183 = vmin.f32 16.0, %v1182
      %v1184 = vmul.f32 %v1183, 2.1237322e-06
      %v1185 = vadd.f32 %v1184, 0.00028619796
      %v1186 = vmul.f32 %v1183, %v1185
      %v1187 = vadd.f32 %v1186, 0.0036580483
      %v1188 = vmul.f32 %v1183, %v1187
      %v1189 = vadd.f32 %v1188, 0.05243302
      %v1190 = vmul.f32 %v1183, %v1189
      %v1191 = vadd.f32 %v1190, 0.18741608
      %v1192 = vmul.f32 %v1183, %v1191
      %v1193 = vadd.f32 %v1192, 1.1283791
      %v1194 = vmul.f32 %v565, %v1193
      %v1195 = vmul.f32 %v1183, 3.8918573e-05
      %v1196 = vadd.f32 %v1195, 0.001143296
      %v1197 = vmul.f32 %v1183, %v1196
      %v1198 = vadd.f32 %v1197, 0.014752088
      %v1199 = vmul.f32 %v1183, %v1198
      %v1200 = vadd.f32 %v1199, 0.112945676
      %v1201 = vmul.f32 %v1183, %v1200
      %v1202 = vadd.f32 %v1201, 0.4994258
      %v1203 = vmul.f32 %v1183, %v1202
      %v1204 = vadd.f32 %v1203, 1.0
      %v1205 = vrcp.pop %v1204
      %v1206 = vmul.f32 %v1204, %v1205
      %v1207 = vsub.f32 1.0, %v1206
      %v1208 = vmul.f32 %v1205, %v1207
      %v1209 = vadd.f32 %v1205, %v1208
      %vm1210 = vweird.f32 %v1204
      %vm1211 = vweird.f32 %v1205
      %vm1212 = vmor %vm1210, %vm1211
      %v1213 = vsel %vm1212, %v1205, %v1209
      %v1214 = vand.u32 2147483647, %v1204
      %vm1215 = vcmp.eq.f32.partialorder %v1214, 8.507059e+37
      %v1216 = vand.u32 %v1204, 2147483648
      %v1217 = vor.u32 1.1754944e-38, %v1216
      %v1218 = vsel %vm1215, %v1217, %v1213
      %v1219 = vmul.f32 %v1194, %v1218
      %v1220 = vmin.f32 %v1219, 1.0
      %v1221 = vmax.f32 %v1220, -1.0
      %v1222 = vmul.f32 %v566, %v566
      %v1223 = vmin.f32 16.0, %v1222
      %v1224 = vmul.f32 %v1223, 2.1237322e-06
      %v1225 = vadd.f32 %v1224, 0.00028619796
      %v1226 = vmul.f32 %v1223, %v1225
      %v1227 = vadd.f32 %v1226, 0.0036580483
      %v1228 = vmul.f32 %v1223, %v1227
      %v1229 = vadd.f32 %v1228, 0.05243302
      %v1230 = vmul.f32 %v1223, %v1229
      %v1231 = vadd.f32 %v1230, 0.18741608
      %v1232 = vmul.f32 %v1223, %v1231
      %v1233 = vadd.f32 %v1232, 1.1283791
      %v1234 = vmul.f32 %v566, %v1233
      %v1235 = vmul.f32 %v1223, 3.8918573e-05
      %v1236 = vadd.f32 %v1235, 0.001143296
      %v1237 = vmul.f32 %v1223, %v1236
      %v1238 = vadd.f32 %v1237, 0.014752088
      %v1239 = vmul.f32 %v1223, %v1238
      %v1240 = vadd.f32 %v1239, 0.112945676
      %v1241 = vmul.f32 %v1223, %v1240
      %v1242 = vadd.f32 %v1241, 0.4994258
      %v1243 = vmul.f32 %v1223, %v1242
      %v1244 = vadd.f32 %v1243, 1.0
      %v1245 = vrcp.pop %v1244
      %v1246 = vmul.f32 %v1244, %v1245
      %v1247 = vsub.f32 1.0, %v1246
      %v1248 = vmul.f32 %v1245, %v1247
      %v1249 = vadd.f32 %v1245, %v1248
      %vm1250 = vweird.f32 %v1244
      %vm1251 = vweird.f32 %v1245
      %vm1252 = vmor %vm1250, %vm1251
      %v1253 = vsel %vm1252, %v1245, %v1249
      %v1254 = vand.u32 2147483647, %v1244
      %vm1255 = vcmp.eq.f32.partialorder %v1254, 8.507059e+37
      %v1256 = vand.u32 %v1244, 2147483648
      %v1257 = vor.u32 1.1754944e-38, %v1256
      %v1258 = vsel %vm1255, %v1257, %v1253
      %v1259 = vmul.f32 %v1234, %v1258
      %v1260 = vmin.f32 %v1259, 1.0
      %v1261 = vmax.f32 %v1260, -1.0
      %v1262 = vmul.f32 %v567, %v567
      %v1263 = vmin.f32 16.0, %v1262
      %v1264 = vmul.f32 %v1263, 2.1237322e-06
      %v1265 = vadd.f32 %v1264, 0.00028619796
      %v1266 = vmul.f32 %v1263, %v1265
      %v1267 = vadd.f32 %v1266, 0.0036580483
      %v1268 = vmul.f32 %v1263, %v1267
      %v1269 = vadd.f32 %v1268, 0.05243302
      %v1270 = vmul.f32 %v1263, %v1269
      %v1271 = vadd.f32 %v1270, 0.18741608
      %v1272 = vmul.f32 %v1263, %v1271
      %v1273 = vadd.f32 %v1272, 1.1283791
      %v1274 = vmul.f32 %v567, %v1273
      %v1275 = vmul.f32 %v1263, 3.8918573e-05
      %v1276 = vadd.f32 %v1275, 0.001143296
      %v1277 = vmul.f32 %v1263, %v1276
      %v1278 = vadd.f32 %v1277, 0.014752088
      %v1279 = vmul.f32 %v1263, %v1278
      %v1280 = vadd.f32 %v1279, 0.112945676
      %v1281 = vmul.f32 %v1263, %v1280
      %v1282 = vadd.f32 %v1281, 0.4994258
      %v1283 = vmul.f32 %v1263, %v1282
      %v1284 = vadd.f32 %v1283, 1.0
      %v1285 = vrcp.pop %v1284
      %v1286 = vmul.f32 %v1284, %v1285
      %v1287 = vsub.f32 1.0, %v1286
      %v1288 = vmul.f32 %v1285, %v1287
      %v1289 = vadd.f32 %v1285, %v1288
      %vm1290 = vweird.f32 %v1284
      %vm1291 = vweird.f32 %v1285
      %vm1292 = vmor %vm1290, %vm1291
      %v1293 = vsel %vm1292, %v1285, %v1289
      %v1294 = vand.u32 2147483647, %v1284
      %vm1295 = vcmp.eq.f32.partialorder %v1294, 8.507059e+37
      %v1296 = vand.u32 %v1284, 2147483648
      %v1297 = vor.u32 1.1754944e-38, %v1296
      %v1298 = vsel %vm1295, %v1297, %v1293
      %v1299 = vmul.f32 %v1274, %v1298
      %v1300 = vmin.f32 %v1299, 1.0
      %v1301 = vmax.f32 %v1300, -1.0
      %v1302 = vmul.f32 %v568, %v568
      %v1303 = vmin.f32 16.0, %v1302
      %v1304 = vmul.f32 %v1303, 2.1237322e-06
      %v1305 = vadd.f32 %v1304, 0.00028619796
      %v1306 = vmul.f32 %v1303, %v1305
      %v1307 = vadd.f32 %v1306, 0.0036580483
      %v1308 = vmul.f32 %v1303, %v1307
      %v1309 = vadd.f32 %v1308, 0.05243302
      %v1310 = vmul.f32 %v1303, %v1309
      %v1311 = vadd.f32 %v1310, 0.18741608
      %v1312 = vmul.f32 %v1303, %v1311
      %v1313 = vadd.f32 %v1312, 1.1283791
      %v1314 = vmul.f32 %v568, %v1313
      %v1315 = vmul.f32 %v1303, 3.8918573e-05
      %v1316 = vadd.f32 %v1315, 0.001143296
      %v1317 = vmul.f32 %v1303, %v1316
      %v1318 = vadd.f32 %v1317, 0.014752088
      %v1319 = vmul.f32 %v1303, %v1318
      %v1320 = vadd.f32 %v1319, 0.112945676
      %v1321 = vmul.f32 %v1303, %v1320
      %v1322 = vadd.f32 %v1321, 0.4994258
      %v1323 = vmul.f32 %v1303, %v1322
      %v1324 = vadd.f32 %v1323, 1.0
      %v1325 = vrcp.pop %v1324
      %v1326 = vmul.f32 %v1324, %v1325
      %v1327 = vsub.f32 1.0, %v1326
      %v1328 = vmul.f32 %v1325, %v1327
      %v1329 = vadd.f32 %v1325, %v1328
      %vm1330 = vweird.f32 %v1324
      %vm1331 = vweird.f32 %v1325
      %vm1332 = vmor %vm1330, %vm1331
      %v1333 = vsel %vm1332, %v1325, %v1329
      %v1334 = vand.u32 2147483647, %v1324
      %vm1335 = vcmp.eq.f32.partialorder %v1334, 8.507059e+37
      %v1336 = vand.u32 %v1324, 2147483648
      %v1337 = vor.u32 1.1754944e-38, %v1336
      %v1338 = vsel %vm1335, %v1337, %v1333
      %v1339 = vmul.f32 %v1314, %v1338
      %v1340 = vmin.f32 %v1339, 1.0
      %v1341 = vmax.f32 %v1340, -1.0
      %v1342 = vmul.f32 %v569, %v569
      %v1343 = vmin.f32 16.0, %v1342
      %v1344 = vmul.f32 %v1343, 2.1237322e-06
      %v1345 = vadd.f32 %v1344, 0.00028619796
      %v1346 = vmul.f32 %v1343, %v1345
      %v1347 = vadd.f32 %v1346, 0.0036580483
      %v1348 = vmul.f32 %v1343, %v1347
      %v1349 = vadd.f32 %v1348, 0.05243302
      %v1350 = vmul.f32 %v1343, %v1349
      %v1351 = vadd.f32 %v1350, 0.18741608
      %v1352 = vmul.f32 %v1343, %v1351
      %v1353 = vadd.f32 %v1352, 1.1283791
      %v1354 = vmul.f32 %v569, %v1353
      %v1355 = vmul.f32 %v1343, 3.8918573e-05
      %v1356 = vadd.f32 %v1355, 0.001143296
      %v1357 = vmul.f32 %v1343, %v1356
      %v1358 = vadd.f32 %v1357, 0.014752088
      %v1359 = vmul.f32 %v1343, %v1358
      %v1360 = vadd.f32 %v1359, 0.112945676
      %v1361 = vmul.f32 %v1343, %v1360
      %v1362 = vadd.f32 %v1361, 0.4994258
      %v1363 = vmul.f32 %v1343, %v1362
      %v1364 = vadd.f32 %v1363, 1.0
      %v1365 = vrcp.pop %v1364
      %v1366 = vmul.f32 %v1364, %v1365
      %v1367 = vsub.f32 1.0, %v1366
      %v1368 = vmul.f32 %v1365, %v1367
      %v1369 = vadd.f32 %v1365, %v1368
      %vm1370 = vweird.f32 %v1364
      %vm1371 = vweird.f32 %v1365
      %vm1372 = vmor %vm1370, %vm1371
      %v1373 = vsel %vm1372, %v1365, %v1369
      %v1374 = vand.u32 2147483647, %v1364
      %vm1375 = vcmp.eq.f32.partialorder %v1374, 8.507059e+37
      %v1376 = vand.u32 %v1364, 2147483648
      %v1377 = vor.u32 1.1754944e-38, %v1376
      %v1378 = vsel %vm1375, %v1377, %v1373
      %v1379 = vmul.f32 %v1354, %v1378
      %v1380 = vmin.f32 %v1379, 1.0
      %v1381 = vmax.f32 %v1380, -1.0
      %v1382 = vmul.f32 %v570, %v570
      %v1383 = vmin.f32 16.0, %v1382
      %v1384 = vmul.f32 %v1383, 2.1237322e-06
      %v1385 = vadd.f32 %v1384, 0.00028619796
      %v1386 = vmul.f32 %v1383, %v1385
      %v1387 = vadd.f32 %v1386, 0.0036580483
      %v1388 = vmul.f32 %v1383, %v1387
      %v1389 = vadd.f32 %v1388, 0.05243302
      %v1390 = vmul.f32 %v1383, %v1389
      %v1391 = vadd.f32 %v1390, 0.18741608
      %v1392 = vmul.f32 %v1383, %v1391
      %v1393 = vadd.f32 %v1392, 1.1283791
      %v1394 = vmul.f32 %v570, %v1393
      %v1395 = vmul.f32 %v1383, 3.8918573e-05
      %v1396 = vadd.f32 %v1395, 0.001143296
      %v1397 = vmul.f32 %v1383, %v1396
      %v1398 = vadd.f32 %v1397, 0.014752088
      %v1399 = vmul.f32 %v1383, %v1398
      %v1400 = vadd.f32 %v1399, 0.112945676
      %v1401 = vmul.f32 %v1383, %v1400
      %v1402 = vadd.f32 %v1401, 0.4994258
      %v1403 = vmul.f32 %v1383, %v1402
      %v1404 = vadd.f32 %v1403, 1.0
      %v1405 = vrcp.pop %v1404
      %v1406 = vmul.f32 %v1404, %v1405
      %v1407 = vsub.f32 1.0, %v1406
      %v1408 = vmul.f32 %v1405, %v1407
      %v1409 = vadd.f32 %v1405, %v1408
      %vm1410 = vweird.f32 %v1404
      %vm1411 = vweird.f32 %v1405
      %vm1412 = vmor %vm1410, %vm1411
      %v1413 = vsel %vm1412, %v1405, %v1409
      %v1414 = vand.u32 2147483647, %v1404
      %vm1415 = vcmp.eq.f32.partialorder %v1414, 8.507059e+37
      %v1416 = vand.u32 %v1404, 2147483648
      %v1417 = vor.u32 1.1754944e-38, %v1416
      %v1418 = vsel %vm1415, %v1417, %v1413
      %v1419 = vmul.f32 %v1394, %v1418
      %v1420 = vmin.f32 %v1419, 1.0
      %v1421 = vmax.f32 %v1420, -1.0
      %v1422 = vmul.f32 %v571, %v571
      %v1423 = vmin.f32 16.0, %v1422
      %v1424 = vmul.f32 %v1423, 2.1237322e-06
      %v1425 = vadd.f32 %v1424, 0.00028619796
      %v1426 = vmul.f32 %v1423, %v1425
      %v1427 = vadd.f32 %v1426, 0.0036580483
      %v1428 = vmul.f32 %v1423, %v1427
      %v1429 = vadd.f32 %v1428, 0.05243302
      %v1430 = vmul.f32 %v1423, %v1429
      %v1431 = vadd.f32 %v1430, 0.18741608
      %v1432 = vmul.f32 %v1423, %v1431
      %v1433 = vadd.f32 %v1432, 1.1283791
      %v1434 = vmul.f32 %v571, %v1433
      %v1435 = vmul.f32 %v1423, 3.8918573e-05
      %v1436 = vadd.f32 %v1435, 0.001143296
      %v1437 = vmul.f32 %v1423, %v1436
      %v1438 = vadd.f32 %v1437, 0.014752088
      %v1439 = vmul.f32 %v1423, %v1438
      %v1440 = vadd.f32 %v1439, 0.112945676
      %v1441 = vmul.f32 %v1423, %v1440
      %v1442 = vadd.f32 %v1441, 0.4994258
      %v1443 = vmul.f32 %v1423, %v1442
      %v1444 = vadd.f32 %v1443, 1.0
      %v1445 = vrcp.pop %v1444
      %v1446 = vmul.f32 %v1444, %v1445
      %v1447 = vsub.f32 1.0, %v1446
      %v1448 = vmul.f32 %v1445, %v1447
      %v1449 = vadd.f32 %v1445, %v1448
      %vm1450 = vweird.f32 %v1444
      %vm1451 = vweird.f32 %v1445
      %vm1452 = vmor %vm1450, %vm1451
      %v1453 = vsel %vm1452, %v1445, %v1449
      %v1454 = vand.u32 2147483647, %v1444
      %vm1455 = vcmp.eq.f32.partialorder %v1454, 8.507059e+37
      %v1456 = vand.u32 %v1444, 2147483648
      %v1457 = vor.u32 1.1754944e-38, %v1456
      %v1458 = vsel %vm1455, %v1457, %v1453
      %v1459 = vmul.f32 %v1434, %v1458
      %v1460 = vmin.f32 %v1459, 1.0
      %v1461 = vmax.f32 %v1460, -1.0
      %v1462 = vmul.f32 %v572, %v572
      %v1463 = vmin.f32 16.0, %v1462
      %v1464 = vmul.f32 %v1463, 2.1237322e-06
      %v1465 = vadd.f32 %v1464, 0.00028619796
      %v1466 = vmul.f32 %v1463, %v1465
      %v1467 = vadd.f32 %v1466, 0.0036580483
      %v1468 = vmul.f32 %v1463, %v1467
      %v1469 = vadd.f32 %v1468, 0.05243302
      %v1470 = vmul.f32 %v1463, %v1469
      %v1471 = vadd.f32 %v1470, 0.18741608
      %v1472 = vmul.f32 %v1463, %v1471
      %v1473 = vadd.f32 %v1472, 1.1283791
      %v1474 = vmul.f32 %v572, %v1473
      %v1475 = vmul.f32 %v1463, 3.8918573e-05
      %v1476 = vadd.f32 %v1475, 0.001143296
      %v1477 = vmul.f32 %v1463, %v1476
      %v1478 = vadd.f32 %v1477, 0.014752088
      %v1479 = vmul.f32 %v1463, %v1478
      %v1480 = vadd.f32 %v1479, 0.112945676
      %v1481 = vmul.f32 %v1463, %v1480
      %v1482 = vadd.f32 %v1481, 0.4994258
      %v1483 = vmul.f32 %v1463, %v1482
      %v1484 = vadd.f32 %v1483, 1.0
      %v1485 = vrcp.pop %v1484
      %v1486 = vmul.f32 %v1484, %v1485
      %v1487 = vsub.f32 1.0, %v1486
      %v1488 = vmul.f32 %v1485, %v1487
      %v1489 = vadd.f32 %v1485, %v1488
      %vm1490 = vweird.f32 %v1484
      %vm1491 = vweird.f32 %v1485
      %vm1492 = vmor %vm1490, %vm1491
      %v1493 = vsel %vm1492, %v1485, %v1489
      %v1494 = vand.u32 2147483647, %v1484
      %vm1495 = vcmp.eq.f32.partialorder %v1494, 8.507059e+37
      %v1496 = vand.u32 %v1484, 2147483648
      %v1497 = vor.u32 1.1754944e-38, %v1496
      %v1498 = vsel %vm1495, %v1497, %v1493
      %v1499 = vmul.f32 %v1474, %v1498
      %v1500 = vmin.f32 %v1499, 1.0
      %v1501 = vmax.f32 %v1500, -1.0
      %v1502 = vmul.f32 %v573, %v573
      %v1503 = vmin.f32 16.0, %v1502
      %v1504 = vmul.f32 %v1503, 2.1237322e-06
      %v1505 = vadd.f32 %v1504, 0.00028619796
      %v1506 = vmul.f32 %v1503, %v1505
      %v1507 = vadd.f32 %v1506, 0.0036580483
      %v1508 = vmul.f32 %v1503, %v1507
      %v1509 = vadd.f32 %v1508, 0.05243302
      %v1510 = vmul.f32 %v1503, %v1509
      %v1511 = vadd.f32 %v1510, 0.18741608
      %v1512 = vmul.f32 %v1503, %v1511
      %v1513 = vadd.f32 %v1512, 1.1283791
      %v1514 = vmul.f32 %v573, %v1513
      %v1515 = vmul.f32 %v1503, 3.8918573e-05
      %v1516 = vadd.f32 %v1515, 0.001143296
      %v1517 = vmul.f32 %v1503, %v1516
      %v1518 = vadd.f32 %v1517, 0.014752088
      %v1519 = vmul.f32 %v1503, %v1518
      %v1520 = vadd.f32 %v1519, 0.112945676
      %v1521 = vmul.f32 %v1503, %v1520
      %v1522 = vadd.f32 %v1521, 0.4994258
      %v1523 = vmul.f32 %v1503, %v1522
      %v1524 = vadd.f32 %v1523, 1.0
      %v1525 = vrcp.pop %v1524
      %v1526 = vmul.f32 %v1524, %v1525
      %v1527 = vsub.f32 1.0, %v1526
      %v1528 = vmul.f32 %v1525, %v1527
      %v1529 = vadd.f32 %v1525, %v1528
      %vm1530 = vweird.f32 %v1524
      %vm1531 = vweird.f32 %v1525
      %vm1532 = vmor %vm1530, %vm1531
      %v1533 = vsel %vm1532, %v1525, %v1529
      %v1534 = vand.u32 2147483647, %v1524
      %vm1535 = vcmp.eq.f32.partialorder %v1534, 8.507059e+37
      %v1536 = vand.u32 %v1524, 2147483648
      %v1537 = vor.u32 1.1754944e-38, %v1536
      %v1538 = vsel %vm1535, %v1537, %v1533
      %v1539 = vmul.f32 %v1514, %v1538
      %v1540 = vmin.f32 %v1539, 1.0
      %v1541 = vmax.f32 %v1540, -1.0
      %v1542 = vmul.f32 %v574, %v574
      %v1543 = vmin.f32 16.0, %v1542
      %v1544 = vmul.f32 %v1543, 2.1237322e-06
      %v1545 = vadd.f32 %v1544, 0.00028619796
      %v1546 = vmul.f32 %v1543, %v1545
      %v1547 = vadd.f32 %v1546, 0.0036580483
      %v1548 = vmul.f32 %v1543, %v1547
      %v1549 = vadd.f32 %v1548, 0.05243302
      %v1550 = vmul.f32 %v1543, %v1549
      %v1551 = vadd.f32 %v1550, 0.18741608
      %v1552 = vmul.f32 %v1543, %v1551
      %v1553 = vadd.f32 %v1552, 1.1283791
      %v1554 = vmul.f32 %v574, %v1553
      %v1555 = vmul.f32 %v1543, 3.8918573e-05
      %v1556 = vadd.f32 %v1555, 0.001143296
      %v1557 = vmul.f32 %v1543, %v1556
      %v1558 = vadd.f32 %v1557, 0.014752088
      %v1559 = vmul.f32 %v1543, %v1558
      %v1560 = vadd.f32 %v1559, 0.112945676
      %v1561 = vmul.f32 %v1543, %v1560
      %v1562 = vadd.f32 %v1561, 0.4994258
      %v1563 = vmul.f32 %v1543, %v1562
      %v1564 = vadd.f32 %v1563, 1.0
      %v1565 = vrcp.pop %v1564
      %v1566 = vmul.f32 %v1564, %v1565
      %v1567 = vsub.f32 1.0, %v1566
      %v1568 = vmul.f32 %v1565, %v1567
      %v1569 = vadd.f32 %v1565, %v1568
      %vm1570 = vweird.f32 %v1564
      %vm1571 = vweird.f32 %v1565
      %vm1572 = vmor %vm1570, %vm1571
      %v1573 = vsel %vm1572, %v1565, %v1569
      %v1574 = vand.u32 2147483647, %v1564
      %vm1575 = vcmp.eq.f32.partialorder %v1574, 8.507059e+37
      %v1576 = vand.u32 %v1564, 2147483648
      %v1577 = vor.u32 1.1754944e-38, %v1576
      %v1578 = vsel %vm1575, %v1577, %v1573
      %v1579 = vmul.f32 %v1554, %v1578
      %v1580 = vmin.f32 %v1579, 1.0
      %v1581 = vmax.f32 %v1580, -1.0
      %v1582 = vmul.f32 %v575, %v575
      %v1583 = vmin.f32 16.0, %v1582
      %v1584 = vmul.f32 %v1583, 2.1237322e-06
      %v1585 = vadd.f32 %v1584, 0.00028619796
      %v1586 = vmul.f32 %v1583, %v1585
      %v1587 = vadd.f32 %v1586, 0.0036580483
      %v1588 = vmul.f32 %v1583, %v1587
      %v1589 = vadd.f32 %v1588, 0.05243302
      %v1590 = vmul.f32 %v1583, %v1589
      %v1591 = vadd.f32 %v1590, 0.18741608
      %v1592 = vmul.f32 %v1583, %v1591
      %v1593 = vadd.f32 %v1592, 1.1283791
      %v1594 = vmul.f32 %v575, %v1593
      %v1595 = vmul.f32 %v1583, 3.8918573e-05
      %v1596 = vadd.f32 %v1595, 0.001143296
      %v1597 = vmul.f32 %v1583, %v1596
      %v1598 = vadd.f32 %v1597, 0.014752088
      %v1599 = vmul.f32 %v1583, %v1598
      %v1600 = vadd.f32 %v1599, 0.112945676
      %v1601 = vmul.f32 %v1583, %v1600
      %v1602 = vadd.f32 %v1601, 0.4994258
      %v1603 = vmul.f32 %v1583, %v1602
      %v1604 = vadd.f32 %v1603, 1.0
      %v1605 = vrcp.pop %v1604
      %v1606 = vmul.f32 %v1604, %v1605
      %v1607 = vsub.f32 1.0, %v1606
      %v1608 = vmul.f32 %v1605, %v1607
      %v1609 = vadd.f32 %v1605, %v1608
      %vm1610 = vweird.f32 %v1604
      %vm1611 = vweird.f32 %v1605
      %vm1612 = vmor %vm1610, %vm1611
      %v1613 = vsel %vm1612, %v1605, %v1609
      %v1614 = vand.u32 2147483647, %v1604
      %vm1615 = vcmp.eq.f32.partialorder %v1614, 8.507059e+37
      %v1616 = vand.u32 %v1604, 2147483648
      %v1617 = vor.u32 1.1754944e-38, %v1616
      %v1618 = vsel %vm1615, %v1617, %v1613
      %v1619 = vmul.f32 %v1594, %v1618
      %v1620 = vmin.f32 %v1619, 1.0
      %v1621 = vmax.f32 %v1620, -1.0
      %v1622 = vmul.f32 %v576, %v576
      %v1623 = vmin.f32 16.0, %v1622
      %v1624 = vmul.f32 %v1623, 2.1237322e-06
      %v1625 = vadd.f32 %v1624, 0.00028619796
      %v1626 = vmul.f32 %v1623, %v1625
      %v1627 = vadd.f32 %v1626, 0.0036580483
      %v1628 = vmul.f32 %v1623, %v1627
      %v1629 = vadd.f32 %v1628, 0.05243302
      %v1630 = vmul.f32 %v1623, %v1629
      %v1631 = vadd.f32 %v1630, 0.18741608
      %v1632 = vmul.f32 %v1623, %v1631
      %v1633 = vadd.f32 %v1632, 1.1283791
      %v1634 = vmul.f32 %v576, %v1633
      %v1635 = vmul.f32 %v1623, 3.8918573e-05
      %v1636 = vadd.f32 %v1635, 0.001143296
      %v1637 = vmul.f32 %v1623, %v1636
      %v1638 = vadd.f32 %v1637, 0.014752088
      %v1639 = vmul.f32 %v1623, %v1638
      %v1640 = vadd.f32 %v1639, 0.112945676
      %v1641 = vmul.f32 %v1623, %v1640
      %v1642 = vadd.f32 %v1641, 0.4994258
      %v1643 = vmul.f32 %v1623, %v1642
      %v1644 = vadd.f32 %v1643, 1.0
      %v1645 = vrcp.pop %v1644
      %v1646 = vmul.f32 %v1644, %v1645
      %v1647 = vsub.f32 1.0, %v1646
      %v1648 = vmul.f32 %v1645, %v1647
      %v1649 = vadd.f32 %v1645, %v1648
      %vm1650 = vweird.f32 %v1644
      %vm1651 = vweird.f32 %v1645
      %vm1652 = vmor %vm1650, %vm1651
      %v1653 = vsel %vm1652, %v1645, %v1649
      %v1654 = vand.u32 2147483647, %v1644
      %vm1655 = vcmp.eq.f32.partialorder %v1654, 8.507059e+37
      %v1656 = vand.u32 %v1644, 2147483648
      %v1657 = vor.u32 1.1754944e-38, %v1656
      %v1658 = vsel %vm1655, %v1657, %v1653
      %v1659 = vmul.f32 %v1634, %v1658
      %v1660 = vmin.f32 %v1659, 1.0
      %v1661 = vmax.f32 %v1660, -1.0
      %v1662 = vmul.f32 %v577, %v577
      %v1663 = vmin.f32 16.0, %v1662
      %v1664 = vmul.f32 %v1663, 2.1237322e-06
      %v1665 = vadd.f32 %v1664, 0.00028619796
      %v1666 = vmul.f32 %v1663, %v1665
      %v1667 = vadd.f32 %v1666, 0.0036580483
      %v1668 = vmul.f32 %v1663, %v1667
      %v1669 = vadd.f32 %v1668, 0.05243302
      %v1670 = vmul.f32 %v1663, %v1669
      %v1671 = vadd.f32 %v1670, 0.18741608
      %v1672 = vmul.f32 %v1663, %v1671
      %v1673 = vadd.f32 %v1672, 1.1283791
      %v1674 = vmul.f32 %v577, %v1673
      %v1675 = vmul.f32 %v1663, 3.8918573e-05
      %v1676 = vadd.f32 %v1675, 0.001143296
      %v1677 = vmul.f32 %v1663, %v1676
      %v1678 = vadd.f32 %v1677, 0.014752088
      %v1679 = vmul.f32 %v1663, %v1678
      %v1680 = vadd.f32 %v1679, 0.112945676
      %v1681 = vmul.f32 %v1663, %v1680
      %v1682 = vadd.f32 %v1681, 0.4994258
      %v1683 = vmul.f32 %v1663, %v1682
      %v1684 = vadd.f32 %v1683, 1.0
      %v1685 = vrcp.pop %v1684
      %v1686 = vmul.f32 %v1684, %v1685
      %v1687 = vsub.f32 1.0, %v1686
      %v1688 = vmul.f32 %v1685, %v1687
      %v1689 = vadd.f32 %v1685, %v1688
      %vm1690 = vweird.f32 %v1684
      %vm1691 = vweird.f32 %v1685
      %vm1692 = vmor %vm1690, %vm1691
      %v1693 = vsel %vm1692, %v1685, %v1689
      %v1694 = vand.u32 2147483647, %v1684
      %vm1695 = vcmp.eq.f32.partialorder %v1694, 8.507059e+37
      %v1696 = vand.u32 %v1684, 2147483648
      %v1697 = vor.u32 1.1754944e-38, %v1696
      %v1698 = vsel %vm1695, %v1697, %v1693
      %v1699 = vmul.f32 %v1674, %v1698
      %v1700 = vmin.f32 %v1699, 1.0
      %v1701 = vmax.f32 %v1700, -1.0
      %v1702 = vmul.f32 %v578, %v578
      %v1703 = vmin.f32 16.0, %v1702
      %v1704 = vmul.f32 %v1703, 2.1237322e-06
      %v1705 = vadd.f32 %v1704, 0.00028619796
      %v1706 = vmul.f32 %v1703, %v1705
      %v1707 = vadd.f32 %v1706, 0.0036580483
      %v1708 = vmul.f32 %v1703, %v1707
      %v1709 = vadd.f32 %v1708, 0.05243302
      %v1710 = vmul.f32 %v1703, %v1709
      %v1711 = vadd.f32 %v1710, 0.18741608
      %v1712 = vmul.f32 %v1703, %v1711
      %v1713 = vadd.f32 %v1712, 1.1283791
      %v1714 = vmul.f32 %v578, %v1713
      %v1715 = vmul.f32 %v1703, 3.8918573e-05
      %v1716 = vadd.f32 %v1715, 0.001143296
      %v1717 = vmul.f32 %v1703, %v1716
      %v1718 = vadd.f32 %v1717, 0.014752088
      %v1719 = vmul.f32 %v1703, %v1718
      %v1720 = vadd.f32 %v1719, 0.112945676
      %v1721 = vmul.f32 %v1703, %v1720
      %v1722 = vadd.f32 %v1721, 0.4994258
      %v1723 = vmul.f32 %v1703, %v1722
      %v1724 = vadd.f32 %v1723, 1.0
      %v1725 = vrcp.pop %v1724
      %v1726 = vmul.f32 %v1724, %v1725
      %v1727 = vsub.f32 1.0, %v1726
      %v1728 = vmul.f32 %v1725, %v1727
      %v1729 = vadd.f32 %v1725, %v1728
      %vm1730 = vweird.f32 %v1724
      %vm1731 = vweird.f32 %v1725
      %vm1732 = vmor %vm1730, %vm1731
      %v1733 = vsel %vm1732, %v1725, %v1729
      %v1734 = vand.u32 2147483647, %v1724
      %vm1735 = vcmp.eq.f32.partialorder %v1734, 8.507059e+37
      %v1736 = vand.u32 %v1724, 2147483648
      %v1737 = vor.u32 1.1754944e-38, %v1736
      %v1738 = vsel %vm1735, %v1737, %v1733
      %v1739 = vmul.f32 %v1714, %v1738
      %v1740 = vmin.f32 %v1739, 1.0
      %v1741 = vmax.f32 %v1740, -1.0
      %v1742 = vmul.f32 %v579, %v579
      %v1743 = vmin.f32 16.0, %v1742
      %v1744 = vmul.f32 %v1743, 2.1237322e-06
      %v1745 = vadd.f32 %v1744, 0.00028619796
      %v1746 = vmul.f32 %v1743, %v1745
      %v1747 = vadd.f32 %v1746, 0.0036580483
      %v1748 = vmul.f32 %v1743, %v1747
      %v1749 = vadd.f32 %v1748, 0.05243302
      %v1750 = vmul.f32 %v1743, %v1749
      %v1751 = vadd.f32 %v1750, 0.18741608
      %v1752 = vmul.f32 %v1743, %v1751
      %v1753 = vadd.f32 %v1752, 1.1283791
      %v1754 = vmul.f32 %v579, %v1753
      %v1755 = vmul.f32 %v1743, 3.8918573e-05
      %v1756 = vadd.f32 %v1755, 0.001143296
      %v1757 = vmul.f32 %v1743, %v1756
      %v1758 = vadd.f32 %v1757, 0.014752088
      %v1759 = vmul.f32 %v1743, %v1758
      %v1760 = vadd.f32 %v1759, 0.112945676
      %v1761 = vmul.f32 %v1743, %v1760
      %v1762 = vadd.f32 %v1761, 0.4994258
      %v1763 = vmul.f32 %v1743, %v1762
      %v1764 = vadd.f32 %v1763, 1.0
      %v1765 = vrcp.pop %v1764
      %v1766 = vmul.f32 %v1764, %v1765
      %v1767 = vsub.f32 1.0, %v1766
      %v1768 = vmul.f32 %v1765, %v1767
      %v1769 = vadd.f32 %v1765, %v1768
      %vm1770 = vweird.f32 %v1764
      %vm1771 = vweird.f32 %v1765
      %vm1772 = vmor %vm1770, %vm1771
      %v1773 = vsel %vm1772, %v1765, %v1769
      %v1774 = vand.u32 2147483647, %v1764
      %vm1775 = vcmp.eq.f32.partialorder %v1774, 8.507059e+37
      %v1776 = vand.u32 %v1764, 2147483648
      %v1777 = vor.u32 1.1754944e-38, %v1776
      %v1778 = vsel %vm1775, %v1777, %v1773
      %v1779 = vmul.f32 %v1754, %v1778
      %v1780 = vmin.f32 %v1779, 1.0
      %v1781 = vmax.f32 %v1780, -1.0
      %v1782 = vmul.f32 %v580, %v580
      %v1783 = vmin.f32 16.0, %v1782
      %v1784 = vmul.f32 %v1783, 2.1237322e-06
      %v1785 = vadd.f32 %v1784, 0.00028619796
      %v1786 = vmul.f32 %v1783, %v1785
      %v1787 = vadd.f32 %v1786, 0.0036580483
      %v1788 = vmul.f32 %v1783, %v1787
      %v1789 = vadd.f32 %v1788, 0.05243302
      %v1790 = vmul.f32 %v1783, %v1789
      %v1791 = vadd.f32 %v1790, 0.18741608
      %v1792 = vmul.f32 %v1783, %v1791
      %v1793 = vadd.f32 %v1792, 1.1283791
      %v1794 = vmul.f32 %v580, %v1793
      %v1795 = vmul.f32 %v1783, 3.8918573e-05
      %v1796 = vadd.f32 %v1795, 0.001143296
      %v1797 = vmul.f32 %v1783, %v1796
      %v1798 = vadd.f32 %v1797, 0.014752088
      %v1799 = vmul.f32 %v1783, %v1798
      %v1800 = vadd.f32 %v1799, 0.112945676
      %v1801 = vmul.f32 %v1783, %v1800
      %v1802 = vadd.f32 %v1801, 0.4994258
      %v1803 = vmul.f32 %v1783, %v1802
      %v1804 = vadd.f32 %v1803, 1.0
      %v1805 = vrcp.pop %v1804
      %v1806 = vmul.f32 %v1804, %v1805
      %v1807 = vsub.f32 1.0, %v1806
      %v1808 = vmul.f32 %v1805, %v1807
      %v1809 = vadd.f32 %v1805, %v1808
      %vm1810 = vweird.f32 %v1804
      %vm1811 = vweird.f32 %v1805
      %vm1812 = vmor %vm1810, %vm1811
      %v1813 = vsel %vm1812, %v1805, %v1809
      %v1814 = vand.u32 2147483647, %v1804
      %vm1815 = vcmp.eq.f32.partialorder %v1814, 8.507059e+37
      %v1816 = vand.u32 %v1804, 2147483648
      %v1817 = vor.u32 1.1754944e-38, %v1816
      %v1818 = vsel %vm1815, %v1817, %v1813
      %v1819 = vmul.f32 %v1794, %v1818
      %v1820 = vmin.f32 %v1819, 1.0
      %v1821 = vmax.f32 %v1820, -1.0
      %v1822 = vmul.f32 %v581, %v581
      %v1823 = vmin.f32 16.0, %v1822
      %v1824 = vmul.f32 %v1823, 2.1237322e-06
      %v1825 = vadd.f32 %v1824, 0.00028619796
      %v1826 = vmul.f32 %v1823, %v1825
      %v1827 = vadd.f32 %v1826, 0.0036580483
      %v1828 = vmul.f32 %v1823, %v1827
      %v1829 = vadd.f32 %v1828, 0.05243302
      %v1830 = vmul.f32 %v1823, %v1829
      %v1831 = vadd.f32 %v1830, 0.18741608
      %v1832 = vmul.f32 %v1823, %v1831
      %v1833 = vadd.f32 %v1832, 1.1283791
      %v1834 = vmul.f32 %v581, %v1833
      %v1835 = vmul.f32 %v1823, 3.8918573e-05
      %v1836 = vadd.f32 %v1835, 0.001143296
      %v1837 = vmul.f32 %v1823, %v1836
      %v1838 = vadd.f32 %v1837, 0.014752088
      %v1839 = vmul.f32 %v1823, %v1838
      %v1840 = vadd.f32 %v1839, 0.112945676
      %v1841 = vmul.f32 %v1823, %v1840
      %v1842 = vadd.f32 %v1841, 0.4994258
      %v1843 = vmul.f32 %v1823, %v1842
      %v1844 = vadd.f32 %v1843, 1.0
      %v1845 = vrcp.pop %v1844
      %v1846 = vmul.f32 %v1844, %v1845
      %v1847 = vsub.f32 1.0, %v1846
      %v1848 = vmul.f32 %v1845, %v1847
      %v1849 = vadd.f32 %v1845, %v1848
      %vm1850 = vweird.f32 %v1844
      %vm1851 = vweird.f32 %v1845
      %vm1852 = vmor %vm1850, %vm1851
      %v1853 = vsel %vm1852, %v1845, %v1849
      %v1854 = vand.u32 2147483647, %v1844
      %vm1855 = vcmp.eq.f32.partialorder %v1854, 8.507059e+37
      %v1856 = vand.u32 %v1844, 2147483648
      %v1857 = vor.u32 1.1754944e-38, %v1856
      %v1858 = vsel %vm1855, %v1857, %v1853
      %v1859 = vmul.f32 %v1834, %v1858
      %v1860 = vmin.f32 %v1859, 1.0
      %v1861 = vmax.f32 %v1860, -1.0
      %v1862 = vadd.f32 %v621, 1.0
      %v1863 = vadd.f32 %v661, 1.0
      %v1864 = vadd.f32 %v701, 1.0
      %v1865 = vadd.f32 %v741, 1.0
      %v1866 = vadd.f32 %v781, 1.0
      %v1867 = vadd.f32 %v821, 1.0
      %v1868 = vadd.f32 %v861, 1.0
      %v1869 = vadd.f32 %v901, 1.0
      %v1870 = vadd.f32 %v941, 1.0
      %v1871 = vadd.f32 %v981, 1.0
      %v1872 = vadd.f32 %v1021, 1.0
      %v1873 = vadd.f32 %v1061, 1.0
      %v1874 = vadd.f32 %v1101, 1.0
      %v1875 = vadd.f32 %v1141, 1.0
      %v1876 = vadd.f32 %v1181, 1.0
      %v1877 = vadd.f32 %v1221, 1.0
      %v1878 = vadd.f32 %v1261, 1.0
      %v1879 = vadd.f32 %v1301, 1.0
      %v1880 = vadd.f32 %v1341, 1.0
      %v1881 = vadd.f32 %v1381, 1.0
      %v1882 = vadd.f32 %v1421, 1.0
      %v1883 = vadd.f32 %v1461, 1.0
      %v1884 = vadd.f32 %v1501, 1.0
      %v1885 = vadd.f32 %v1541, 1.0
      %v1886 = vadd.f32 %v1581, 1.0
      %v1887 = vadd.f32 %v1621, 1.0
      %v1888 = vadd.f32 %v1661, 1.0
      %v1889 = vadd.f32 %v1701, 1.0
      %v1890 = vadd.f32 %v1741, 1.0
      %v1891 = vadd.f32 %v1781, 1.0
      %v1892 = vadd.f32 %v1821, 1.0
      %v1893 = vadd.f32 %v1861, 1.0
      %v1894 = vmul.f32 %v518, %v1862
      %v1895 = vmul.f32 %v519, %v1863
      %v1896 = vmul.f32 %v520, %v1864
      %v1897 = vmul.f32 %v521, %v1865
      %v1898 = vmul.f32 %v522, %v1866
      %v1899 = vmul.f32 %v523, %v1867
      %v1900 = vmul.f32 %v524, %v1868
      %v1901 = vmul.f32 %v525, %v1869
      %v1902 = vmul.f32 %v526, %v1870
      %v1903 = vmul.f32 %v527, %v1871
      %v1904 = vmul.f32 %v528, %v1872
      %v1905 = vmul.f32 %v529, %v1873
      %v1906 = vmul.f32 %v530, %v1874
      %v1907 = vmul.f32 %v531, %v1875
      %v1908 = vmul.f32 %v532, %v1876
      %v1909 = vmul.f32 %v533, %v1877
      %v1910 = vmul.f32 %v534, %v1878
      %v1911 = vmul.f32 %v535, %v1879
      %v1912 = vmul.f32 %v536, %v1880
      %v1913 = vmul.f32 %v537, %v1881
      %v1914 = vmul.f32 %v538, %v1882
      %v1915 = vmul.f32 %v539, %v1883
      %v1916 = vmul.f32 %v540, %v1884
      %v1917 = vmul.f32 %v541, %v1885
      %v1918 = vmul.f32 %v542, %v1886
      %v1919 = vmul.f32 %v543, %v1887
      %v1920 = vmul.f32 %v544, %v1888
      %v1921 = vmul.f32 %v545, %v1889
      %v1922 = vmul.f32 %v546, %v1890
      %v1923 = vmul.f32 %v547, %v1891
      %v1924 = vmul.f32 %v548, %v1892
      %v1925 = vmul.f32 %v549, %v1893
      %v1926 = vld [vmem:[%s3] sm:$0x7]
      %v1927 = vld [vmem:[%s4] sm:$0x7]
      %1929 = vset.pattern.permute.xlu0 0
      %1930 = vperm.xlu0 %1929, %v1927
      %v1931 = vpop.permute.xlu0 %1930
      %1933 = vmatpush.msra.mxu0 %v1924
      %1934 = vmatpush.msra.mxu0 %v1922
      %1935 = vmatpush.msra.mxu0 %v1920
      %1936 = vmatpush.msra.mxu0 %v1918
      %1937 = vmatpush.msra.mxu0 %v1916
      %1938 = vmatpush.msra.mxu0 %v1914
      %1939 = vmatpush.msra.mxu0 %v1912
      %1940 = vmatpush.msra.mxu0 %v1910
      %1941 = vmatpush.msra.mxu0 %v1908
      %1942 = vmatpush.msra.mxu0 %v1906
      %1943 = vmatpush.msra.mxu0 %v1904
      %1944 = vmatpush.msra.mxu0 %v1902
      %1945 = vmatpush.msra.mxu0 %v1900
      %1946 = vmatpush.msra.mxu0 %v1898
      %1947 = vmatpush.msra.mxu0 %v1896
      %1948 = vmatpush.msra.mxu0 %v1894
      %1949 = vmatmul.f32.gmra.mxu0 %v1926
      %v1950 = vpop.f32.mrf.mxu0
      %v1951 = vadd.f32 %v1931, %v1950
      %1952 = vdwg.mxu0
      %1953 = vmatpush.msra.mxu0 %v1925
      %1954 = vmatpush.msra.mxu0 %v1923
      %1955 = vmatpush.msra.mxu0 %v1921
      %1956 = vmatpush.msra.mxu0 %v1919
      %1957 = vmatpush.msra.mxu0 %v1917
      %1958 = vmatpush.msra.mxu0 %v1915
      %1959 = vmatpush.msra.mxu0 %v1913
      %1960 = vmatpush.msra.mxu0 %v1911
      %1961 = vmatpush.msra.mxu0 %v1909
      %1962 = vmatpush.msra.mxu0 %v1907
      %1963 = vmatpush.msra.mxu0 %v1905
      %1964 = vmatpush.msra.mxu0 %v1903
      %1965 = vmatpush.msra.mxu0 %v1901
      %1966 = vmatpush.msra.mxu0 %v1899
      %1967 = vmatpush.msra.mxu0 %v1897
      %1968 = vmatpush.msra.mxu0 %v1895
      %1969 = vmatmul.f32.gmra.mxu0 %v1926
      %v1970 = vpop.f32.mrf.mxu0
      %v1971 = vadd.f32 %v1931, %v1970
      %1972 = vdwg.mxu0
      %v1975 = vrot.slane %v1971, 4
      %vm1976 = vcmask 1043456
      %v1977 = vsel %vm1976, %v1951, %v1975
      %1979 = vst [vmem:[%s224] sm:$0x77] %v1977
      %p1980 = scmp.lt.s32.totalorder %s16, 1
      %s1981 = scalar_select %p1980, %s16, 1
      %s1982 = smul.addr %s1981, 2
      %s1983 = smul.addr %s1982, 4
      %s1984 = scalar_lea.vmem %s5, %s1983
      // Predicated region
      $region41: #{trans_net_forward.11} parent=39 // pred_check
        %p1985 = pneg %p144
      $region42: #{trans_net_forward.11} parent=39 // pred_check_branch
        %1987 = sbr.rel (%p1985) target = $region44
      $region43: #{trans_net_forward.11} parent=39 // pred_region
        _
      $region44: #{trans_net_forward.11} parent=39 // pred_fallthru
        _
    $region40: #{trans_net_forward.11} parent=5 // pred_fallthru
      _
    %p1988 = scmp.le.s32.totalorder 2, %s11
    // Predicated region
    $region45: #{trans_net_forward.11} parent=5 // pred_check
      %p1989 = pneg %p1988
    $region46: #{trans_net_forward.11} parent=5 // pred_check_branch
      %1991 = sbr.rel (%p1989) target = $region48
    $region47: #{trans_net_forward.11} parent=5 // pred_region
      %s1992 = ssub.s32 %s11, 2
      // Predicated region
      $region49: #{trans_net_forward.11} parent=47 // pred_check
        %p1993 = pneg %p150
      $region50: #{trans_net_forward.11} parent=47 // pred_check_branch
        %1995 = sbr.rel (%p1993) target = $region52
      $region51: #{trans_net_forward.11} parent=47 // pred_region
        %p1996 = scmp.lt.s32.totalorder %s17, 1
        %s1997 = scalar_select %p1996, %s17, 1
        %s1998 = smul.addr %s1997, 2
        %s1999 = smul.addr %s1998, 4
        %s2000 = scalar_lea.vmem %s5, %s1999
      $region52: #{trans_net_forward.11} parent=47 // pred_fallthru
        _
    $region48: #{trans_net_forward.11} parent=5 // pred_fallthru
      _
  $region6: #{trans_net_forward.11} parent=0 // loop_footer
    %s15 = sadd.s32 1, %s11
  $region7: #{trans_net_forward.11} parent=0 // loop_footer_branch
    %10 = sbr.rel target = $region3
  $region8: #{trans_net_forward.11} parent=0 // loop_exit
    _

</llo_original>
